<compile_context>
chip_gen: v7x
topology: tpu7x:2x2x1
jax: 0.10.0
libtpu: 0.0.40
codegen_flags: <defaults>
</compile_context>

<pallas_src>
import functools

import jax
import jax.numpy as jnp
from jax import lax
from jax.experimental import pallas as pl
from jax.experimental.pallas import tpu as pltpu

_LANE = 128
_UNROLL_THRESHOLD = 4  # statically unroll shared/specific stacks up to this depth


def _round_up(v, m):
    return ((v + m - 1) // m) * m


def _choose_tile_b(batch):
    pb = _round_up(batch, _LANE)
    if pb <= 2 * _LANE:  # small batch: minimize padding, still a full 128-row tile
        return _LANE
    # Guarantee >=2 grid steps (v7x megacore), cap at 512 (MXU fill / per-step
    # pipeline overhead amortization on v6e/v7x).
    return max(_LANE, min(512, _round_up(pb // 2, _LANE)))


def _device_kind():
    try:
        return jax.devices()[0].device_kind.lower()
    except Exception:
        return ""


def _vmem_capacity_bytes():
    try:
        return int(pltpu.get_tpu_info().vmem_capacity_bytes)
    except Exception:
        return 64 * 1024 * 1024  # conservative (v7x per-TC)


def _sisonet_kernel(n_shared, n_specific, n_sub, bf16_epilogue,
                    x_ref,
                    w_in_ref, b_in_ref,
                    w_c12_ref, b_c12_ref,
                    w_c23_ref, b_c23_ref,
                    w_sh_ref, b_sh_ref,
                    w_cf_ref, b_cf_ref,
                    w_sp_ref, b_sp_ref,
                    w_out_ref, b_out_ref,
                    o_ref):
    dot = functools.partial(jnp.dot, preferred_element_type=jnp.float32)

    def layer(h_bf16, w, b):
        # bf16 x bf16 MXU matmul with f32 accumulation; epilogue (bias + ReLU)
        # in bf16 on v6e/v7x (2x VALU rate), f32 on older gens.
        y = dot(h_bf16, w)
        if bf16_epilogue:
            return jnp.maximum(y.astype(jnp.bfloat16) + b, 0.0)
        return jnp.maximum(y + b, 0.0).astype(jnp.bfloat16)

    def apply(hs, w, b):
        if bf16_epilogue:
            b = b.astype(jnp.bfloat16)
        # Each sub-chain is independent -> MXU (next sub-chain's matmul) can
        # overlap VPU (previous sub-chain's epilogue).
        return tuple(layer(h, w, b) for h in hs)

    def stack(hs, w_stack_ref, b_stack_ref, count):
        if count == 0:
            return hs
        if count <= _UNROLL_THRESHOLD:
            for s in range(count):
                hs = apply(hs, w_stack_ref[s], b_stack_ref[s])
            return hs

        def body(s, carry):
            return apply(carry, w_stack_ref[s], b_stack_ref[s])

        return lax.fori_loop(0, count, body, hs)

    tb = x_ref.shape[0]
    if n_sub == 2:
        half = tb // 2
        hs = (x_ref[pl.ds(0, half), :], x_ref[pl.ds(half, half), :])
    else:
        hs = (x_ref[...],)

    hs = apply(hs, w_in_ref[...], b_in_ref[...])
    hs = apply(hs, w_c12_ref[...], b_c12_ref[...])
    hs = apply(hs, w_c23_ref[...], b_c23_ref[...])
    hs = stack(hs, w_sh_ref, b_sh_ref, n_shared)
    hs = apply(hs, w_cf_ref[...], b_cf_ref[...])
    hs = stack(hs, w_sp_ref, b_sp_ref, n_specific)

    # Final layer: no activation; f32 accumulation + f32 bias, bf16 lane-dense store.
    w_out = w_out_ref[...]
    b_out = b_out_ref[...]
    if n_sub == 2:
        half = tb // 2
        o_ref[pl.ds(0, half), :] = (dot(hs[0], w_out) + b_out).astype(o_ref.dtype)
        o_ref[pl.ds(half, half), :] = (dot(hs[1], w_out) + b_out).astype(o_ref.dtype)
    else:
        o_ref[...] = (dot(hs[0], w_out) + b_out).astype(o_ref.dtype)


def sisonet_forward(x, params, *, n_shared, n_specific, tile_b=None):
    """x: [batch, n_input] float32. params: dict of pre-transposed f32 weights."""
    batch, n_input = x.shape

    def pad2(a, rows, cols):
        return jnp.pad(a, ((0, rows - a.shape[0]), (0, cols - a.shape[1])))

    def pad3(a, rows, cols):
        return jnp.pad(a, ((0, 0), (0, rows - a.shape[1]), (0, cols - a.shape[2])))

    # Lane-dense padded feature widths (multiples of 128).
    d_in = _round_up(n_input, _LANE)
    d1 = _round_up(params["w_in"].shape[1], _LANE)      # 2*n_hidden
    d2 = _round_up(params["w_c12"].shape[1], _LANE)     # n_hidden // 2
    d3 = _round_up(params["w_c23"].shape[1], _LANE)     # n_hidden
    n_out = params["w_out"].shape[1]                    # 3
    d_out = _round_up(n_out, _LANE)                     # 3 -> 128

    bf = jnp.bfloat16
    w_in = pad2(params["w_in"], d_in, d1).astype(bf)
    b_in = pad2(params["b_in"], 1, d1)
    w_c12 = pad2(params["w_c12"], d1, d2).astype(bf)
    b_c12 = pad2(params["b_c12"], 1, d2)
    w_c23 = pad2(params["w_c23"], d2, d3).astype(bf)
    b_c23 = pad2(params["b_c23"], 1, d3)
    w_sh = pad3(params["w_sh"], d3, d3).astype(bf)
    b_sh = pad3(params["b_sh"], 1, d3)
    w_cf = pad2(params["w_cf"], d3, d3).astype(bf)
    b_cf = pad2(params["b_cf"], 1, d3)
    w_sp = pad3(params["w_sp"], d3, d3).astype(bf)
    b_sp = pad3(params["b_sp"], 1, d3)
    w_out = pad2(params["w_out"], d3, d_out).astype(bf)
    b_out = pad2(params["b_out"], 1, d_out)

    # Batch tiling (MXU-filling, megacore-friendly).
    if tile_b is None:
        tile_b = _choose_tile_b(batch)
    tile_b = max(_LANE, _round_up(int(tile_b), _LANE))
    tile_b = min(tile_b, _round_up(batch, _LANE))
    padded_batch = _round_up(batch, tile_b)
    n_sub = 2 if tile_b >= 2 * _LANE else 1

    x_p = jnp.pad(x, ((0, padded_batch - batch), (0, d_in - n_input))).astype(bf)

    ordered = [
        w_in, b_in, w_c12, b_c12, w_c23, b_c23,
        w_sh, b_sh, w_cf, b_cf, w_sp, b_sp, w_out, b_out,
    ]

    # bf16 epilogue on v6e/v7x (bf16 VALU); f32 epilogue on v5 and older.
    kind = _device_kind()
    bf16_epilogue = not any(t in kind for t in ("v2", "v3", "v4", "v5"))

    # Advisory cost estimate for XLA scheduling.
    matmul_dims = ([(d_in, d1), (d1, d2), (d2, d3)]
                   + [(d3, d3)] * (n_shared + 1 + n_specific)
                   + [(d3, d_out)])
    flops = 2 * padded_batch * sum(a * b for a, b in matmul_dims)
    operand_bytes = sum(int(a.size) * a.dtype.itemsize for a in ordered)
    io_bytes = (operand_bytes
                + int(x_p.size) * x_p.dtype.itemsize
                + padded_batch * d_out * 2)
    cost = pl.CostEstimate(flops=int(flops), transcendentals=0,
                           bytes_accessed=int(io_bytes))

    # Generation-aware VMEM budget: resident weights (x buffer count),
    # double-buffered x/out tiles, and the in-kernel activation live set.
    vmem_cap = _vmem_capacity_bytes()
    dmax = max(d_in, d1, d2, d3, d_out)
    act_bytes = 8 * tile_b * dmax * 4                    # f32 acc + bf16 copies, both chains, margin
    io_tile_bytes = 2 * (tile_b * d_in * 2 + tile_b * d_out * 2)

    def vmem_limit_for(weight_buffers):
        need = weight_buffers * operand_bytes + io_tile_bytes + act_bytes + (4 << 20)
        return max(min(int(need), int(0.85 * vmem_cap)), 16 << 20)

    kernel = functools.partial(_sisonet_kernel, n_shared, n_specific, n_sub,
                               bf16_epilogue)

    def build_call(single_buffer_weights):
        def const_spec(arr):
            nd = arr.ndim
            kwargs = {}
            if single_buffer_weights:
                # Constant index_map -> DMA'd once; 1 buffer halves resident VMEM.
                kwargs["pipeline_mode"] = pl.Buffered(1)
            return pl.BlockSpec(arr.shape, lambda i, _nd=nd: (0,) * _nd, **kwargs)

        return pl.pallas_call(
            kernel,
            out_shape=jax.ShapeDtypeStruct((padded_batch, d_out), jnp.bfloat16),
            grid_spec=pltpu.PrefetchScalarGridSpec(
                num_scalar_prefetch=0,
                grid=(padded_batch // tile_b,),
                in_specs=[pl.BlockSpec((tile_b, d_in), lambda i: (i, 0))]
                         + [const_spec(a) for a in ordered],
                out_specs=pl.BlockSpec((tile_b, d_out), lambda i: (i, 0)),
            ),
            compiler_params=pltpu.CompilerParams(
                dimension_semantics=("parallel",),
                vmem_limit_bytes=vmem_limit_for(1 if single_buffer_weights else 2)),
            cost_estimate=cost,
        )

    try:
        out_p = build_call(True)(x_p, *ordered)
    except Exception:
        # Fallback if pipeline_mode / Buffered(1) is unsupported in this jax build.
        out_p = build_call(False)(x_p, *ordered)

    return out_p[:batch, :n_out].astype(jnp.float32)


def init_params(key, n_input, n_hidden, n_shared, n_specific):
    """Deterministic synthetic params. Weights stored as [in, out] (pre-transposed)."""
    ks = jax.random.split(key, 16)
    s = 0.1

    def w(k, shp):
        return s * jax.random.normal(k, shp, dtype=jnp.float32)

    return {
        "w_in": w(ks[0], (n_input, 2 * n_hidden)),
        "b_in": w(ks[1], (1, 2 * n_hidden)),
        "w_c12": w(ks[2], (2 * n_hidden, n_hidden // 2)),
        "b_c12": w(ks[3], (1, n_hidden // 2)),
        "w_c23": w(ks[4], (n_hidden // 2, n_hidden)),
        "b_c23": w(ks[5], (1, n_hidden)),
        "w_sh": w(ks[6], (max(n_shared, 1), n_hidden, n_hidden)),
        "b_sh": w(ks[7], (max(n_shared, 1), 1, n_hidden)),
        "w_cf": w(ks[8], (n_hidden, n_hidden)),
        "b_cf": w(ks[9], (1, n_hidden)),
        "w_sp": w(ks[10], (max(n_specific, 1), n_hidden, n_hidden)),
        "b_sp": w(ks[11], (max(n_specific, 1), 1, n_hidden)),
        "w_out": w(ks[12], (n_hidden, 3)),
        "b_out": w(ks[13], (1, 3)),
    }


def sisonet_reference(x, p, *, n_shared, n_specific):
    """Pure-JAX f32 reference matching the torch forward (eval mode, ReLU)."""
    act = lambda v: jnp.maximum(v, 0.0)
    h = act(x @ p["w_in"] + p["b_in"])
    h = act(h @ p["w_c12"] + p["b_c12"])
    h = act(h @ p["w_c23"] + p["b_c23"])
    for s in range(n_shared):
        h = act(h @ p["w_sh"][s] + p["b_sh"][s])
    h = act(h @ p["w_cf"] + p["b_cf"])
    for s in range(n_specific):
        h = act(h @ p["w_sp"][s] + p["b_sp"][s])
    return h @ p["w_out"] + p["b_out"]


if __name__ == "__main__":
    # --- Small test (module's natural small config) ---
    n_input, n_hidden, n_shared, n_specific, batch = 16, 32, 2, 2, 16
    key = jax.random.PRNGKey(0)
    kx, kp = jax.random.split(key)
    x = jax.random.normal(kx, (batch, n_input), dtype=jnp.float32)
    params = init_params(kp, n_input, n_hidden, n_shared, n_specific)

    out = jax.block_until_ready(
        sisonet_forward(x, params, n_shared=n_shared, n_specific=n_specific))
    ref = sisonet_reference(x, params, n_shared=n_shared, n_specific=n_specific)
    assert out.shape == (batch, 3)
    # bf16 weights/activations with f32 accumulation -> loose tolerance vs f32 ref.
    assert jnp.allclose(out, ref, atol=2e-2, rtol=2e-2), "small-test mismatch"

    # --- Larger test exercising the >=2-step megacore grid, the two-sub-chain
    #     interleave (tile_b >= 256) and the fori_loop layer-stack path ---
    n_input2, n_hidden2, n_shared2, n_specific2, batch2 = 24, 64, 6, 5, 600
    kx2, kp2 = jax.random.split(jax.random.PRNGKey(1))
    x2 = jax.random.normal(kx2, (batch2, n_input2), dtype=jnp.float32)
    params2 = init_params(kp2, n_input2, n_hidden2, n_shared2, n_specific2)

    out2 = jax.block_until_ready(
        sisonet_forward(x2, params2, n_shared=n_shared2, n_specific=n_specific2))
    ref2 = sisonet_reference(x2, params2, n_shared=n_shared2, n_specific=n_specific2)
    assert out2.shape == (batch2, 3)
    assert jnp.allclose(out2, ref2, atol=5e-2, rtol=5e-2), "large-test mismatch"

    print("KERNEL_OK")
</pallas_src>

<mosaic_0001>
module attributes {stable_mosaic.version = 11 : i64} {
  func.func @_sisonet_kernel(%arg0: i32, %arg1: memref<128x128xbf16, #tpu.memory_space<vmem>>, %arg2: memref<128x128xbf16, #tpu.memory_space<vmem>>, %arg3: memref<1x128xf32, #tpu.memory_space<vmem>>, %arg4: memref<128x128xbf16, #tpu.memory_space<vmem>>, %arg5: memref<1x128xf32, #tpu.memory_space<vmem>>, %arg6: memref<128x128xbf16, #tpu.memory_space<vmem>>, %arg7: memref<1x128xf32, #tpu.memory_space<vmem>>, %arg8: memref<2x128x128xbf16, #tpu.memory_space<vmem>>, %arg9: memref<2x1x128xf32, #tpu.memory_space<vmem>>, %arg10: memref<128x128xbf16, #tpu.memory_space<vmem>>, %arg11: memref<1x128xf32, #tpu.memory_space<vmem>>, %arg12: memref<2x128x128xbf16, #tpu.memory_space<vmem>>, %arg13: memref<2x1x128xf32, #tpu.memory_space<vmem>>, %arg14: memref<128x128xbf16, #tpu.memory_space<vmem>>, %arg15: memref<1x128xf32, #tpu.memory_space<vmem>>, %arg16: memref<128x128xbf16, #tpu.memory_space<vmem>>) attributes {dimension_semantics = [#tpu.dimension_semantics<parallel>], iteration_bounds = array<i64: 1>, scalar_prefetch = 0 : i64, scratch_operands = 0 : i64, tpu.core_type = #tpu.core_type<tc>, window_params = [{transform_indices = @transform_0, window_bounds = array<i64: 128, 128>}, {pipeline_mode = #tpu.pipeline_mode<synchronous>, transform_indices = @transform_1, window_bounds = array<i64: 128, 128>}, {pipeline_mode = #tpu.pipeline_mode<synchronous>, transform_indices = @transform_2, window_bounds = array<i64: 1, 128>}, {pipeline_mode = #tpu.pipeline_mode<synchronous>, transform_indices = @transform_3, window_bounds = array<i64: 128, 128>}, {pipeline_mode = #tpu.pipeline_mode<synchronous>, transform_indices = @transform_4, window_bounds = array<i64: 1, 128>}, {pipeline_mode = #tpu.pipeline_mode<synchronous>, transform_indices = @transform_5, window_bounds = array<i64: 128, 128>}, {pipeline_mode = #tpu.pipeline_mode<synchronous>, transform_indices = @transform_6, window_bounds = array<i64: 1, 128>}, {pipeline_mode = #tpu.pipeline_mode<synchronous>, transform_indices = @transform_7, window_bounds = array<i64: 2, 128, 128>}, {pipeline_mode = #tpu.pipeline_mode<synchronous>, transform_indices = @transform_8, window_bounds = array<i64: 2, 1, 128>}, {pipeline_mode = #tpu.pipeline_mode<synchronous>, transform_indices = @transform_9, window_bounds = array<i64: 128, 128>}, {pipeline_mode = #tpu.pipeline_mode<synchronous>, transform_indices = @transform_10, window_bounds = array<i64: 1, 128>}, {pipeline_mode = #tpu.pipeline_mode<synchronous>, transform_indices = @transform_11, window_bounds = array<i64: 2, 128, 128>}, {pipeline_mode = #tpu.pipeline_mode<synchronous>, transform_indices = @transform_12, window_bounds = array<i64: 2, 1, 128>}, {pipeline_mode = #tpu.pipeline_mode<synchronous>, transform_indices = @transform_13, window_bounds = array<i64: 128, 128>}, {pipeline_mode = #tpu.pipeline_mode<synchronous>, transform_indices = @transform_14, window_bounds = array<i64: 1, 128>}, {transform_indices = @transform_15, window_bounds = array<i64: 128, 128>}]} {
    %c0 = arith.constant 0 : index
    %c0_0 = arith.constant 0 : index
    %0 = vector.load %arg1[%c0, %c0_0] : memref<128x128xbf16, #tpu.memory_space<vmem>>, vector<128x128xbf16>
    %c0_1 = arith.constant 0 : index
    %c0_2 = arith.constant 0 : index
    %1 = vector.load %arg2[%c0_1, %c0_2] : memref<128x128xbf16, #tpu.memory_space<vmem>>, vector<128x128xbf16>
    %c0_3 = arith.constant 0 : index
    %c0_4 = arith.constant 0 : index
    %2 = vector.load %arg3[%c0_3, %c0_4] : memref<1x128xf32, #tpu.memory_space<vmem>>, vector<1x128xf32>
    %3 = arith.truncf %2 : vector<1x128xf32> to vector<1x128xbf16>
    %cst = arith.constant dense<0.000000e+00> : vector<128x128xf32>
    %4 = tpu.matmul %0, %1, %cst {dimension_numbers = #tpu.dot_dimension_numbers<[1], [0], [0], [1], [0, 0, 1, 1], [], []>} : vector<128x128xbf16>, vector<128x128xbf16>, vector<128x128xf32> -> vector<128x128xf32>
    %5 = arith.truncf %4 : vector<128x128xf32> to vector<128x128xbf16>
    %6 = vector.broadcast %3 : vector<1x128xbf16> to vector<128x128xbf16>
    %7 = arith.addf %5, %6 : vector<128x128xbf16>
    %cst_5 = arith.constant 0.000000e+00 : bf16
    %8 = vector.broadcast %cst_5 : bf16 to vector<128x128xbf16>
    %9 = arith.maximumf %7, %8 : vector<128x128xbf16>
    %c0_6 = arith.constant 0 : index
    %c0_7 = arith.constant 0 : index
    %10 = vector.load %arg4[%c0_6, %c0_7] : memref<128x128xbf16, #tpu.memory_space<vmem>>, vector<128x128xbf16>
    %c0_8 = arith.constant 0 : index
    %c0_9 = arith.constant 0 : index
    %11 = vector.load %arg5[%c0_8, %c0_9] : memref<1x128xf32, #tpu.memory_space<vmem>>, vector<1x128xf32>
    %12 = arith.truncf %11 : vector<1x128xf32> to vector<1x128xbf16>
    %cst_10 = arith.constant dense<0.000000e+00> : vector<128x128xf32>
    %13 = tpu.matmul %9, %10, %cst_10 {dimension_numbers = #tpu.dot_dimension_numbers<[1], [0], [0], [1], [0, 0, 1, 1], [], []>} : vector<128x128xbf16>, vector<128x128xbf16>, vector<128x128xf32> -> vector<128x128xf32>
    %14 = arith.truncf %13 : vector<128x128xf32> to vector<128x128xbf16>
    %15 = vector.broadcast %12 : vector<1x128xbf16> to vector<128x128xbf16>
    %16 = arith.addf %14, %15 : vector<128x128xbf16>
    %cst_11 = arith.constant 0.000000e+00 : bf16
    %17 = vector.broadcast %cst_11 : bf16 to vector<128x128xbf16>
    %18 = arith.maximumf %16, %17 : vector<128x128xbf16>
    %c0_12 = arith.constant 0 : index
    %c0_13 = arith.constant 0 : index
    %19 = vector.load %arg6[%c0_12, %c0_13] : memref<128x128xbf16, #tpu.memory_space<vmem>>, vector<128x128xbf16>
    %c0_14 = arith.constant 0 : index
    %c0_15 = arith.constant 0 : index
    %20 = vector.load %arg7[%c0_14, %c0_15] : memref<1x128xf32, #tpu.memory_space<vmem>>, vector<1x128xf32>
    %21 = arith.truncf %20 : vector<1x128xf32> to vector<1x128xbf16>
    %cst_16 = arith.constant dense<0.000000e+00> : vector<128x128xf32>
    %22 = tpu.matmul %18, %19, %cst_16 {dimension_numbers = #tpu.dot_dimension_numbers<[1], [0], [0], [1], [0, 0, 1, 1], [], []>} : vector<128x128xbf16>, vector<128x128xbf16>, vector<128x128xf32> -> vector<128x128xf32>
    %23 = arith.truncf %22 : vector<128x128xf32> to vector<128x128xbf16>
    %24 = vector.broadcast %21 : vector<1x128xbf16> to vector<128x128xbf16>
    %25 = arith.addf %23, %24 : vector<128x128xbf16>
    %cst_17 = arith.constant 0.000000e+00 : bf16
    %26 = vector.broadcast %cst_17 : bf16 to vector<128x128xbf16>
    %27 = arith.maximumf %25, %26 : vector<128x128xbf16>
    %c0_18 = arith.constant 0 : index
    %c0_19 = arith.constant 0 : index
    %c0_20 = arith.constant 0 : index
    %28 = vector.load %arg8[%c0_18, %c0_19, %c0_20] : memref<2x128x128xbf16, #tpu.memory_space<vmem>>, vector<1x128x128xbf16>
    %29 = vector.shape_cast %28 : vector<1x128x128xbf16> to vector<128x128xbf16>
    %c0_21 = arith.constant 0 : index
    %c0_22 = arith.constant 0 : index
    %c0_23 = arith.constant 0 : index
    %30 = vector.load %arg9[%c0_21, %c0_22, %c0_23] : memref<2x1x128xf32, #tpu.memory_space<vmem>>, vector<1x1x128xf32>
    %31 = vector.shape_cast %30 : vector<1x1x128xf32> to vector<1x128xf32>
    %32 = arith.truncf %31 : vector<1x128xf32> to vector<1x128xbf16>
    %cst_24 = arith.constant dense<0.000000e+00> : vector<128x128xf32>
    %33 = tpu.matmul %27, %29, %cst_24 {dimension_numbers = #tpu.dot_dimension_numbers<[1], [0], [0], [1], [0, 0, 1, 1], [], []>} : vector<128x128xbf16>, vector<128x128xbf16>, vector<128x128xf32> -> vector<128x128xf32>
    %34 = arith.truncf %33 : vector<128x128xf32> to vector<128x128xbf16>
    %35 = vector.broadcast %32 : vector<1x128xbf16> to vector<128x128xbf16>
    %36 = arith.addf %34, %35 : vector<128x128xbf16>
    %cst_25 = arith.constant 0.000000e+00 : bf16
    %37 = vector.broadcast %cst_25 : bf16 to vector<128x128xbf16>
    %38 = arith.maximumf %36, %37 : vector<128x128xbf16>
    %c1 = arith.constant 1 : index
    %c0_26 = arith.constant 0 : index
    %c0_27 = arith.constant 0 : index
    %39 = vector.load %arg8[%c1, %c0_26, %c0_27] : memref<2x128x128xbf16, #tpu.memory_space<vmem>>, vector<1x128x128xbf16>
    %40 = vector.shape_cast %39 : vector<1x128x128xbf16> to vector<128x128xbf16>
    %c1_28 = arith.constant 1 : index
    %c0_29 = arith.constant 0 : index
    %c0_30 = arith.constant 0 : index
    %41 = vector.load %arg9[%c1_28, %c0_29, %c0_30] : memref<2x1x128xf32, #tpu.memory_space<vmem>>, vector<1x1x128xf32>
    %42 = vector.shape_cast %41 : vector<1x1x128xf32> to vector<1x128xf32>
    %43 = arith.truncf %42 : vector<1x128xf32> to vector<1x128xbf16>
    %cst_31 = arith.constant dense<0.000000e+00> : vector<128x128xf32>
    %44 = tpu.matmul %38, %40, %cst_31 {dimension_numbers = #tpu.dot_dimension_numbers<[1], [0], [0], [1], [0, 0, 1, 1], [], []>} : vector<128x128xbf16>, vector<128x128xbf16>, vector<128x128xf32> -> vector<128x128xf32>
    %45 = arith.truncf %44 : vector<128x128xf32> to vector<128x128xbf16>
    %46 = vector.broadcast %43 : vector<1x128xbf16> to vector<128x128xbf16>
    %47 = arith.addf %45, %46 : vector<128x128xbf16>
    %cst_32 = arith.constant 0.000000e+00 : bf16
    %48 = vector.broadcast %cst_32 : bf16 to vector<128x128xbf16>
    %49 = arith.maximumf %47, %48 : vector<128x128xbf16>
    %c0_33 = arith.constant 0 : index
    %c0_34 = arith.constant 0 : index
    %50 = vector.load %arg10[%c0_33, %c0_34] : memref<128x128xbf16, #tpu.memory_space<vmem>>, vector<128x128xbf16>
    %c0_35 = arith.constant 0 : index
    %c0_36 = arith.constant 0 : index
    %51 = vector.load %arg11[%c0_35, %c0_36] : memref<1x128xf32, #tpu.memory_space<vmem>>, vector<1x128xf32>
    %52 = arith.truncf %51 : vector<1x128xf32> to vector<1x128xbf16>
    %cst_37 = arith.constant dense<0.000000e+00> : vector<128x128xf32>
    %53 = tpu.matmul %49, %50, %cst_37 {dimension_numbers = #tpu.dot_dimension_numbers<[1], [0], [0], [1], [0, 0, 1, 1], [], []>} : vector<128x128xbf16>, vector<128x128xbf16>, vector<128x128xf32> -> vector<128x128xf32>
    %54 = arith.truncf %53 : vector<128x128xf32> to vector<128x128xbf16>
    %55 = vector.broadcast %52 : vector<1x128xbf16> to vector<128x128xbf16>
    %56 = arith.addf %54, %55 : vector<128x128xbf16>
    %cst_38 = arith.constant 0.000000e+00 : bf16
    %57 = vector.broadcast %cst_38 : bf16 to vector<128x128xbf16>
    %58 = arith.maximumf %56, %57 : vector<128x128xbf16>
    %c0_39 = arith.constant 0 : index
    %c0_40 = arith.constant 0 : index
    %c0_41 = arith.constant 0 : index
    %59 = vector.load %arg12[%c0_39, %c0_40, %c0_41] : memref<2x128x128xbf16, #tpu.memory_space<vmem>>, vector<1x128x128xbf16>
    %60 = vector.shape_cast %59 : vector<1x128x128xbf16> to vector<128x128xbf16>
    %c0_42 = arith.constant 0 : index
    %c0_43 = arith.constant 0 : index
    %c0_44 = arith.constant 0 : index
    %61 = vector.load %arg13[%c0_42, %c0_43, %c0_44] : memref<2x1x128xf32, #tpu.memory_space<vmem>>, vector<1x1x128xf32>
    %62 = vector.shape_cast %61 : vector<1x1x128xf32> to vector<1x128xf32>
    %63 = arith.truncf %62 : vector<1x128xf32> to vector<1x128xbf16>
    %cst_45 = arith.constant dense<0.000000e+00> : vector<128x128xf32>
    %64 = tpu.matmul %58, %60, %cst_45 {dimension_numbers = #tpu.dot_dimension_numbers<[1], [0], [0], [1], [0, 0, 1, 1], [], []>} : vector<128x128xbf16>, vector<128x128xbf16>, vector<128x128xf32> -> vector<128x128xf32>
    %65 = arith.truncf %64 : vector<128x128xf32> to vector<128x128xbf16>
    %66 = vector.broadcast %63 : vector<1x128xbf16> to vector<128x128xbf16>
    %67 = arith.addf %65, %66 : vector<128x128xbf16>
    %cst_46 = arith.constant 0.000000e+00 : bf16
    %68 = vector.broadcast %cst_46 : bf16 to vector<128x128xbf16>
    %69 = arith.maximumf %67, %68 : vector<128x128xbf16>
    %c1_47 = arith.constant 1 : index
    %c0_48 = arith.constant 0 : index
    %c0_49 = arith.constant 0 : index
    %70 = vector.load %arg12[%c1_47, %c0_48, %c0_49] : memref<2x128x128xbf16, #tpu.memory_space<vmem>>, vector<1x128x128xbf16>
    %71 = vector.shape_cast %70 : vector<1x128x128xbf16> to vector<128x128xbf16>
    %c1_50 = arith.constant 1 : index
    %c0_51 = arith.constant 0 : index
    %c0_52 = arith.constant 0 : index
    %72 = vector.load %arg13[%c1_50, %c0_51, %c0_52] : memref<2x1x128xf32, #tpu.memory_space<vmem>>, vector<1x1x128xf32>
    %73 = vector.shape_cast %72 : vector<1x1x128xf32> to vector<1x128xf32>
    %74 = arith.truncf %73 : vector<1x128xf32> to vector<1x128xbf16>
    %cst_53 = arith.constant dense<0.000000e+00> : vector<128x128xf32>
    %75 = tpu.matmul %69, %71, %cst_53 {dimension_numbers = #tpu.dot_dimension_numbers<[1], [0], [0], [1], [0, 0, 1, 1], [], []>} : vector<128x128xbf16>, vector<128x128xbf16>, vector<128x128xf32> -> vector<128x128xf32>
    %76 = arith.truncf %75 : vector<128x128xf32> to vector<128x128xbf16>
    %77 = vector.broadcast %74 : vector<1x128xbf16> to vector<128x128xbf16>
    %78 = arith.addf %76, %77 : vector<128x128xbf16>
    %cst_54 = arith.constant 0.000000e+00 : bf16
    %79 = vector.broadcast %cst_54 : bf16 to vector<128x128xbf16>
    %80 = arith.maximumf %78, %79 : vector<128x128xbf16>
    %c0_55 = arith.constant 0 : index
    %c0_56 = arith.constant 0 : index
    %81 = vector.load %arg14[%c0_55, %c0_56] : memref<128x128xbf16, #tpu.memory_space<vmem>>, vector<128x128xbf16>
    %c0_57 = arith.constant 0 : index
    %c0_58 = arith.constant 0 : index
    %82 = vector.load %arg15[%c0_57, %c0_58] : memref<1x128xf32, #tpu.memory_space<vmem>>, vector<1x128xf32>
    %cst_59 = arith.constant dense<0.000000e+00> : vector<128x128xf32>
    %83 = tpu.matmul %80, %81, %cst_59 {dimension_numbers = #tpu.dot_dimension_numbers<[1], [0], [0], [1], [0, 0, 1, 1], [], []>} : vector<128x128xbf16>, vector<128x128xbf16>, vector<128x128xf32> -> vector<128x128xf32>
    %84 = vector.broadcast %82 : vector<1x128xf32> to vector<128x128xf32>
    %85 = arith.addf %83, %84 : vector<128x128xf32>
    %86 = arith.truncf %85 : vector<128x128xf32> to vector<128x128xbf16>
    %c0_60 = arith.constant 0 : index
    %c0_61 = arith.constant 0 : index
    %87 = vector.load %arg16[%c0_60, %c0_61] : memref<128x128xbf16, #tpu.memory_space<vmem>>, vector<128x128xbf16>
    tpu.vector_store %arg16[%c0_60, %c0_61], %86 {strides = array<i32>} : memref<128x128xbf16, #tpu.memory_space<vmem>>, vector<128x128xbf16>,
    return
  }
  func.func @transform_0(%arg0: i32) -> (i32, i32) {
    %c0_i32 = arith.constant 0 : i32
    %c0_i32_0 = arith.constant 0 : i32
    return %arg0, %c0_i32 : i32, i32
  }
  func.func @transform_1(%arg0: i32) -> (i32, i32) {
    %c0_i32 = arith.constant 0 : i32
    %c0_i32_0 = arith.constant 0 : i32
    %c0_i32_1 = arith.constant 0 : i32
    return %c0_i32, %c0_i32_0 : i32, i32
  }
  func.func @transform_2(%arg0: i32) -> (i32, i32) {
    %c0_i32 = arith.constant 0 : i32
    %c0_i32_0 = arith.constant 0 : i32
    %c0_i32_1 = arith.constant 0 : i32
    return %c0_i32, %c0_i32_0 : i32, i32
  }
  func.func @transform_3(%arg0: i32) -> (i32, i32) {
    %c0_i32 = arith.constant 0 : i32
    %c0_i32_0 = arith.constant 0 : i32
    %c0_i32_1 = arith.constant 0 : i32
    return %c0_i32, %c0_i32_0 : i32, i32
  }
  func.func @transform_4(%arg0: i32) -> (i32, i32) {
    %c0_i32 = arith.constant 0 : i32
    %c0_i32_0 = arith.constant 0 : i32
    %c0_i32_1 = arith.constant 0 : i32
    return %c0_i32, %c0_i32_0 : i32, i32
  }
  func.func @transform_5(%arg0: i32) -> (i32, i32) {
    %c0_i32 = arith.constant 0 : i32
    %c0_i32_0 = arith.constant 0 : i32
    %c0_i32_1 = arith.constant 0 : i32
    return %c0_i32, %c0_i32_0 : i32, i32
  }
  func.func @transform_6(%arg0: i32) -> (i32, i32) {
    %c0_i32 = arith.constant 0 : i32
    %c0_i32_0 = arith.constant 0 : i32
    %c0_i32_1 = arith.constant 0 : i32
    return %c0_i32, %c0_i32_0 : i32, i32
  }
  func.func @transform_7(%arg0: i32) -> (i32, i32, i32) {
    %c0_i32 = arith.constant 0 : i32
    %c0_i32_0 = arith.constant 0 : i32
    %c0_i32_1 = arith.constant 0 : i32
    %c0_i32_2 = arith.constant 0 : i32
    return %c0_i32, %c0_i32_0, %c0_i32_1 : i32, i32, i32
  }
  func.func @transform_8(%arg0: i32) -> (i32, i32, i32) {
    %c0_i32 = arith.constant 0 : i32
    %c0_i32_0 = arith.constant 0 : i32
    %c0_i32_1 = arith.constant 0 : i32
    %c0_i32_2 = arith.constant 0 : i32
    return %c0_i32, %c0_i32_0, %c0_i32_1 : i32, i32, i32
  }
  func.func @transform_9(%arg0: i32) -> (i32, i32) {
    %c0_i32 = arith.constant 0 : i32
    %c0_i32_0 = arith.constant 0 : i32
    %c0_i32_1 = arith.constant 0 : i32
    return %c0_i32, %c0_i32_0 : i32, i32
  }
  func.func @transform_10(%arg0: i32) -> (i32, i32) {
    %c0_i32 = arith.constant 0 : i32
    %c0_i32_0 = arith.constant 0 : i32
    %c0_i32_1 = arith.constant 0 : i32
    return %c0_i32, %c0_i32_0 : i32, i32
  }
  func.func @transform_11(%arg0: i32) -> (i32, i32, i32) {
    %c0_i32 = arith.constant 0 : i32
    %c0_i32_0 = arith.constant 0 : i32
    %c0_i32_1 = arith.constant 0 : i32
    %c0_i32_2 = arith.constant 0 : i32
    return %c0_i32, %c0_i32_0, %c0_i32_1 : i32, i32, i32
  }
  func.func @transform_12(%arg0: i32) -> (i32, i32, i32) {
    %c0_i32 = arith.constant 0 : i32
    %c0_i32_0 = arith.constant 0 : i32
    %c0_i32_1 = arith.constant 0 : i32
    %c0_i32_2 = arith.constant 0 : i32
    return %c0_i32, %c0_i32_0, %c0_i32_1 : i32, i32, i32
  }
  func.func @transform_13(%arg0: i32) -> (i32, i32) {
    %c0_i32 = arith.constant 0 : i32
    %c0_i32_0 = arith.constant 0 : i32
    %c0_i32_1 = arith.constant 0 : i32
    return %c0_i32, %c0_i32_0 : i32, i32
  }
  func.func @transform_14(%arg0: i32) -> (i32, i32) {
    %c0_i32 = arith.constant 0 : i32
    %c0_i32_0 = arith.constant 0 : i32
    %c0_i32_1 = arith.constant 0 : i32
    return %c0_i32, %c0_i32_0 : i32, i32
  }
  func.func @transform_15(%arg0: i32) -> (i32, i32) {
    %c0_i32 = arith.constant 0 : i32
    %c0_i32_0 = arith.constant 0 : i32
    return %arg0, %c0_i32 : i32, i32
  }
}

module attributes {stable_mosaic.version = 11 : i64} {
  func.func @_sisonet_kernel(%arg0: i32, %arg1: memref<128x128xbf16, #tpu.memory_space<vmem>>, %arg2: memref<128x128xbf16, #tpu.memory_space<vmem>>, %arg3: memref<1x128xf32, #tpu.memory_space<vmem>>, %arg4: memref<128x128xbf16, #tpu.memory_space<vmem>>, %arg5: memref<1x128xf32, #tpu.memory_space<vmem>>, %arg6: memref<128x128xbf16, #tpu.memory_space<vmem>>, %arg7: memref<1x128xf32, #tpu.memory_space<vmem>>, %arg8: memref<2x128x128xbf16, #tpu.memory_space<vmem>>, %arg9: memref<2x1x128xf32, #tpu.memory_space<vmem>>, %arg10: memref<128x128xbf16, #tpu.memory_space<vmem>>, %arg11: memref<1x128xf32, #tpu.memory_space<vmem>>, %arg12: memref<2x128x128xbf16, #tpu.memory_space<vmem>>, %arg13: memref<2x1x128xf32, #tpu.memory_space<vmem>>, %arg14: memref<128x128xbf16, #tpu.memory_space<vmem>>, %arg15: memref<1x128xf32, #tpu.memory_space<vmem>>, %arg16: memref<128x128xbf16, #tpu.memory_space<vmem>>) attributes {dimension_semantics = [#tpu.dimension_semantics<parallel>], iteration_bounds = array<i64: 1>, scalar_prefetch = 0 : i64, scratch_operands = 0 : i64, tpu.core_type = #tpu.core_type<tc>, window_params = [{transform_indices = @transform_0, window_bounds = array<i64: 128, 128>}, {pipeline_mode = #tpu.pipeline_mode<synchronous>, transform_indices = @transform_1, window_bounds = array<i64: 128, 128>}, {pipeline_mode = #tpu.pipeline_mode<synchronous>, transform_indices = @transform_2, window_bounds = array<i64: 1, 128>}, {pipeline_mode = #tpu.pipeline_mode<synchronous>, transform_indices = @transform_3, window_bounds = array<i64: 128, 128>}, {pipeline_mode = #tpu.pipeline_mode<synchronous>, transform_indices = @transform_4, window_bounds = array<i64: 1, 128>}, {pipeline_mode = #tpu.pipeline_mode<synchronous>, transform_indices = @transform_5, window_bounds = array<i64: 128, 128>}, {pipeline_mode = #tpu.pipeline_mode<synchronous>, transform_indices = @transform_6, window_bounds = array<i64: 1, 128>}, {pipeline_mode = #tpu.pipeline_mode<synchronous>, transform_indices = @transform_7, window_bounds = array<i64: 2, 128, 128>}, {pipeline_mode = #tpu.pipeline_mode<synchronous>, transform_indices = @transform_8, window_bounds = array<i64: 2, 1, 128>}, {pipeline_mode = #tpu.pipeline_mode<synchronous>, transform_indices = @transform_9, window_bounds = array<i64: 128, 128>}, {pipeline_mode = #tpu.pipeline_mode<synchronous>, transform_indices = @transform_10, window_bounds = array<i64: 1, 128>}, {pipeline_mode = #tpu.pipeline_mode<synchronous>, transform_indices = @transform_11, window_bounds = array<i64: 2, 128, 128>}, {pipeline_mode = #tpu.pipeline_mode<synchronous>, transform_indices = @transform_12, window_bounds = array<i64: 2, 1, 128>}, {pipeline_mode = #tpu.pipeline_mode<synchronous>, transform_indices = @transform_13, window_bounds = array<i64: 128, 128>}, {pipeline_mode = #tpu.pipeline_mode<synchronous>, transform_indices = @transform_14, window_bounds = array<i64: 1, 128>}, {transform_indices = @transform_15, window_bounds = array<i64: 128, 128>}]} {
    %c0 = arith.constant 0 : index
    %c0_0 = arith.constant 0 : index
    %0 = vector.load %arg1[%c0, %c0_0] : memref<128x128xbf16, #tpu.memory_space<vmem>>, vector<128x128xbf16>
    %c0_1 = arith.constant 0 : index
    %c0_2 = arith.constant 0 : index
    %1 = vector.load %arg2[%c0_1, %c0_2] : memref<128x128xbf16, #tpu.memory_space<vmem>>, vector<128x128xbf16>
    %c0_3 = arith.constant 0 : index
    %c0_4 = arith.constant 0 : index
    %2 = vector.load %arg3[%c0_3, %c0_4] : memref<1x128xf32, #tpu.memory_space<vmem>>, vector<1x128xf32>
    %3 = arith.truncf %2 : vector<1x128xf32> to vector<1x128xbf16>
    %cst = arith.constant dense<0.000000e+00> : vector<128x128xf32>
    %4 = tpu.matmul %0, %1, %cst {dimension_numbers = #tpu.dot_dimension_numbers<[1], [0], [0], [1], [0, 0, 1, 1], [], []>} : vector<128x128xbf16>, vector<128x128xbf16>, vector<128x128xf32> -> vector<128x128xf32>
    %5 = arith.truncf %4 : vector<128x128xf32> to vector<128x128xbf16>
    %6 = vector.broadcast %3 : vector<1x128xbf16> to vector<128x128xbf16>
    %7 = arith.addf %5, %6 : vector<128x128xbf16>
    %cst_5 = arith.constant 0.000000e+00 : bf16
    %8 = vector.broadcast %cst_5 : bf16 to vector<128x128xbf16>
    %9 = arith.maximumf %7, %8 : vector<128x128xbf16>
    %c0_6 = arith.constant 0 : index
    %c0_7 = arith.constant 0 : index
    %10 = vector.load %arg4[%c0_6, %c0_7] : memref<128x128xbf16, #tpu.memory_space<vmem>>, vector<128x128xbf16>
    %c0_8 = arith.constant 0 : index
    %c0_9 = arith.constant 0 : index
    %11 = vector.load %arg5[%c0_8, %c0_9] : memref<1x128xf32, #tpu.memory_space<vmem>>, vector<1x128xf32>
    %12 = arith.truncf %11 : vector<1x128xf32> to vector<1x128xbf16>
    %cst_10 = arith.constant dense<0.000000e+00> : vector<128x128xf32>
    %13 = tpu.matmul %9, %10, %cst_10 {dimension_numbers = #tpu.dot_dimension_numbers<[1], [0], [0], [1], [0, 0, 1, 1], [], []>} : vector<128x128xbf16>, vector<128x128xbf16>, vector<128x128xf32> -> vector<128x128xf32>
    %14 = arith.truncf %13 : vector<128x128xf32> to vector<128x128xbf16>
    %15 = vector.broadcast %12 : vector<1x128xbf16> to vector<128x128xbf16>
    %16 = arith.addf %14, %15 : vector<128x128xbf16>
    %cst_11 = arith.constant 0.000000e+00 : bf16
    %17 = vector.broadcast %cst_11 : bf16 to vector<128x128xbf16>
    %18 = arith.maximumf %16, %17 : vector<128x128xbf16>
    %c0_12 = arith.constant 0 : index
    %c0_13 = arith.constant 0 : index
    %19 = vector.load %arg6[%c0_12, %c0_13] : memref<128x128xbf16, #tpu.memory_space<vmem>>, vector<128x128xbf16>
    %c0_14 = arith.constant 0 : index
    %c0_15 = arith.constant 0 : index
    %20 = vector.load %arg7[%c0_14, %c0_15] : memref<1x128xf32, #tpu.memory_space<vmem>>, vector<1x128xf32>
    %21 = arith.truncf %20 : vector<1x128xf32> to vector<1x128xbf16>
    %cst_16 = arith.constant dense<0.000000e+00> : vector<128x128xf32>
    %22 = tpu.matmul %18, %19, %cst_16 {dimension_numbers = #tpu.dot_dimension_numbers<[1], [0], [0], [1], [0, 0, 1, 1], [], []>} : vector<128x128xbf16>, vector<128x128xbf16>, vector<128x128xf32> -> vector<128x128xf32>
    %23 = arith.truncf %22 : vector<128x128xf32> to vector<128x128xbf16>
    %24 = vector.broadcast %21 : vector<1x128xbf16> to vector<128x128xbf16>
    %25 = arith.addf %23, %24 : vector<128x128xbf16>
    %cst_17 = arith.constant 0.000000e+00 : bf16
    %26 = vector.broadcast %cst_17 : bf16 to vector<128x128xbf16>
    %27 = arith.maximumf %25, %26 : vector<128x128xbf16>
    %c0_18 = arith.constant 0 : index
    %c0_19 = arith.constant 0 : index
    %c0_20 = arith.constant 0 : index
    %28 = vector.load %arg8[%c0_18, %c0_19, %c0_20] : memref<2x128x128xbf16, #tpu.memory_space<vmem>>, vector<1x128x128xbf16>
    %29 = vector.shape_cast %28 : vector<1x128x128xbf16> to vector<128x128xbf16>
    %c0_21 = arith.constant 0 : index
    %c0_22 = arith.constant 0 : index
    %c0_23 = arith.constant 0 : index
    %30 = vector.load %arg9[%c0_21, %c0_22, %c0_23] : memref<2x1x128xf32, #tpu.memory_space<vmem>>, vector<1x1x128xf32>
    %31 = vector.shape_cast %30 : vector<1x1x128xf32> to vector<1x128xf32>
    %32 = arith.truncf %31 : vector<1x128xf32> to vector<1x128xbf16>
    %cst_24 = arith.constant dense<0.000000e+00> : vector<128x128xf32>
    %33 = tpu.matmul %27, %29, %cst_24 {dimension_numbers = #tpu.dot_dimension_numbers<[1], [0], [0], [1], [0, 0, 1, 1], [], []>} : vector<128x128xbf16>, vector<128x128xbf16>, vector<128x128xf32> -> vector<128x128xf32>
    %34 = arith.truncf %33 : vector<128x128xf32> to vector<128x128xbf16>
    %35 = vector.broadcast %32 : vector<1x128xbf16> to vector<128x128xbf16>
    %36 = arith.addf %34, %35 : vector<128x128xbf16>
    %cst_25 = arith.constant 0.000000e+00 : bf16
    %37 = vector.broadcast %cst_25 : bf16 to vector<128x128xbf16>
    %38 = arith.maximumf %36, %37 : vector<128x128xbf16>
    %c1 = arith.constant 1 : index
    %c0_26 = arith.constant 0 : index
    %c0_27 = arith.constant 0 : index
    %39 = vector.load %arg8[%c1, %c0_26, %c0_27] : memref<2x128x128xbf16, #tpu.memory_space<vmem>>, vector<1x128x128xbf16>
    %40 = vector.shape_cast %39 : vector<1x128x128xbf16> to vector<128x128xbf16>
    %c1_28 = arith.constant 1 : index
    %c0_29 = arith.constant 0 : index
    %c0_30 = arith.constant 0 : index
    %41 = vector.load %arg9[%c1_28, %c0_29, %c0_30] : memref<2x1x128xf32, #tpu.memory_space<vmem>>, vector<1x1x128xf32>
    %42 = vector.shape_cast %41 : vector<1x1x128xf32> to vector<1x128xf32>
    %43 = arith.truncf %42 : vector<1x128xf32> to vector<1x128xbf16>
    %cst_31 = arith.constant dense<0.000000e+00> : vector<128x128xf32>
    %44 = tpu.matmul %38, %40, %cst_31 {dimension_numbers = #tpu.dot_dimension_numbers<[1], [0], [0], [1], [0, 0, 1, 1], [], []>} : vector<128x128xbf16>, vector<128x128xbf16>, vector<128x128xf32> -> vector<128x128xf32>
    %45 = arith.truncf %44 : vector<128x128xf32> to vector<128x128xbf16>
    %46 = vector.broadcast %43 : vector<1x128xbf16> to vector<128x128xbf16>
    %47 = arith.addf %45, %46 : vector<128x128xbf16>
    %cst_32 = arith.constant 0.000000e+00 : bf16
    %48 = vector.broadcast %cst_32 : bf16 to vector<128x128xbf16>
    %49 = arith.maximumf %47, %48 : vector<128x128xbf16>
    %c0_33 = arith.constant 0 : index
    %c0_34 = arith.constant 0 : index
    %50 = vector.load %arg10[%c0_33, %c0_34] : memref<128x128xbf16, #tpu.memory_space<vmem>>, vector<128x128xbf16>
    %c0_35 = arith.constant 0 : index
    %c0_36 = arith.constant 0 : index
    %51 = vector.load %arg11[%c0_35, %c0_36] : memref<1x128xf32, #tpu.memory_space<vmem>>, vector<1x128xf32>
    %52 = arith.truncf %51 : vector<1x128xf32> to vector<1x128xbf16>
    %cst_37 = arith.constant dense<0.000000e+00> : vector<128x128xf32>
    %53 = tpu.matmul %49, %50, %cst_37 {dimension_numbers = #tpu.dot_dimension_numbers<[1], [0], [0], [1], [0, 0, 1, 1], [], []>} : vector<128x128xbf16>, vector<128x128xbf16>, vector<128x128xf32> -> vector<128x128xf32>
    %54 = arith.truncf %53 : vector<128x128xf32> to vector<128x128xbf16>
    %55 = vector.broadcast %52 : vector<1x128xbf16> to vector<128x128xbf16>
    %56 = arith.addf %54, %55 : vector<128x128xbf16>
    %cst_38 = arith.constant 0.000000e+00 : bf16
    %57 = vector.broadcast %cst_38 : bf16 to vector<128x128xbf16>
    %58 = arith.maximumf %56, %57 : vector<128x128xbf16>
    %c0_39 = arith.constant 0 : index
    %c0_40 = arith.constant 0 : index
    %c0_41 = arith.constant 0 : index
    %59 = vector.load %arg12[%c0_39, %c0_40, %c0_41] : memref<2x128x128xbf16, #tpu.memory_space<vmem>>, vector<1x128x128xbf16>
    %60 = vector.shape_cast %59 : vector<1x128x128xbf16> to vector<128x128xbf16>
    %c0_42 = arith.constant 0 : index
    %c0_43 = arith.constant 0 : index
    %c0_44 = arith.constant 0 : index
    %61 = vector.load %arg13[%c0_42, %c0_43, %c0_44] : memref<2x1x128xf32, #tpu.memory_space<vmem>>, vector<1x1x128xf32>
    %62 = vector.shape_cast %61 : vector<1x1x128xf32> to vector<1x128xf32>
    %63 = arith.truncf %62 : vector<1x128xf32> to vector<1x128xbf16>
    %cst_45 = arith.constant dense<0.000000e+00> : vector<128x128xf32>
    %64 = tpu.matmul %58, %60, %cst_45 {dimension_numbers = #tpu.dot_dimension_numbers<[1], [0], [0], [1], [0, 0, 1, 1], [], []>} : vector<128x128xbf16>, vector<128x128xbf16>, vector<128x128xf32> -> vector<128x128xf32>
    %65 = arith.truncf %64 : vector<128x128xf32> to vector<128x128xbf16>
    %66 = vector.broadcast %63 : vector<1x128xbf16> to vector<128x128xbf16>
    %67 = arith.addf %65, %66 : vector<128x128xbf16>
    %cst_46 = arith.constant 0.000000e+00 : bf16
    %68 = vector.broadcast %cst_46 : bf16 to vector<128x128xbf16>
    %69 = arith.maximumf %67, %68 : vector<128x128xbf16>
    %c1_47 = arith.constant 1 : index
    %c0_48 = arith.constant 0 : index
    %c0_49 = arith.constant 0 : index
    %70 = vector.load %arg12[%c1_47, %c0_48, %c0_49] : memref<2x128x128xbf16, #tpu.memory_space<vmem>>, vector<1x128x128xbf16>
    %71 = vector.shape_cast %70 : vector<1x128x128xbf16> to vector<128x128xbf16>
    %c1_50 = arith.constant 1 : index
    %c0_51 = arith.constant 0 : index
    %c0_52 = arith.constant 0 : index
    %72 = vector.load %arg13[%c1_50, %c0_51, %c0_52] : memref<2x1x128xf32, #tpu.memory_space<vmem>>, vector<1x1x128xf32>
    %73 = vector.shape_cast %72 : vector<1x1x128xf32> to vector<1x128xf32>
    %74 = arith.truncf %73 : vector<1x128xf32> to vector<1x128xbf16>
    %cst_53 = arith.constant dense<0.000000e+00> : vector<128x128xf32>
    %75 = tpu.matmul %69, %71, %cst_53 {dimension_numbers = #tpu.dot_dimension_numbers<[1], [0], [0], [1], [0, 0, 1, 1], [], []>} : vector<128x128xbf16>, vector<128x128xbf16>, vector<128x128xf32> -> vector<128x128xf32>
    %76 = arith.truncf %75 : vector<128x128xf32> to vector<128x128xbf16>
    %77 = vector.broadcast %74 : vector<1x128xbf16> to vector<128x128xbf16>
    %78 = arith.addf %76, %77 : vector<128x128xbf16>
    %cst_54 = arith.constant 0.000000e+00 : bf16
    %79 = vector.broadcast %cst_54 : bf16 to vector<128x128xbf16>
    %80 = arith.maximumf %78, %79 : vector<128x128xbf16>
    %c0_55 = arith.constant 0 : index
    %c0_56 = arith.constant 0 : index
    %81 = vector.load %arg14[%c0_55, %c0_56] : memref<128x128xbf16, #tpu.memory_space<vmem>>, vector<128x128xbf16>
    %c0_57 = arith.constant 0 : index
    %c0_58 = arith.constant 0 : index
    %82 = vector.load %arg15[%c0_57, %c0_58] : memref<1x128xf32, #tpu.memory_space<vmem>>, vector<1x128xf32>
    %cst_59 = arith.constant dense<0.000000e+00> : vector<128x128xf32>
    %83 = tpu.matmul %80, %81, %cst_59 {dimension_numbers = #tpu.dot_dimension_numbers<[1], [0], [0], [1], [0, 0, 1, 1], [], []>} : vector<128x128xbf16>, vector<128x128xbf16>, vector<128x128xf32> -> vector<128x128xf32>
    %84 = vector.broadcast %82 : vector<1x128xf32> to vector<128x128xf32>
    %85 = arith.addf %83, %84 : vector<128x128xf32>
    %86 = arith.truncf %85 : vector<128x128xf32> to vector<128x128xbf16>
    %c0_60 = arith.constant 0 : index
    %c0_61 = arith.constant 0 : index
    %87 = vector.load %arg16[%c0_60, %c0_61] : memref<128x128xbf16, #tpu.memory_space<vmem>>, vector<128x128xbf16>
    tpu.vector_store %arg16[%c0_60, %c0_61], %86 {strides = array<i32>} : memref<128x128xbf16, #tpu.memory_space<vmem>>, vector<128x128xbf16>,
    return
  }
  func.func @transform_0(%arg0: i32) -> (i32, i32) {
    %c0_i32 = arith.constant 0 : i32
    %c0_i32_0 = arith.constant 0 : i32
    return %arg0, %c0_i32 : i32, i32
  }
  func.func @transform_1(%arg0: i32) -> (i32, i32) {
    %c0_i32 = arith.constant 0 : i32
    %c0_i32_0 = arith.constant 0 : i32
    %c0_i32_1 = arith.constant 0 : i32
    return %c0_i32, %c0_i32_0 : i32, i32
  }
  func.func @transform_2(%arg0: i32) -> (i32, i32) {
    %c0_i32 = arith.constant 0 : i32
    %c0_i32_0 = arith.constant 0 : i32
    %c0_i32_1 = arith.constant 0 : i32
    return %c0_i32, %c0_i32_0 : i32, i32
  }
  func.func @transform_3(%arg0: i32) -> (i32, i32) {
    %c0_i32 = arith.constant 0 : i32
    %c0_i32_0 = arith.constant 0 : i32
    %c0_i32_1 = arith.constant 0 : i32
    return %c0_i32, %c0_i32_0 : i32, i32
  }
  func.func @transform_4(%arg0: i32) -> (i32, i32) {
    %c0_i32 = arith.constant 0 : i32
    %c0_i32_0 = arith.constant 0 : i32
    %c0_i32_1 = arith.constant 0 : i32
    return %c0_i32, %c0_i32_0 : i32, i32
  }
  func.func @transform_5(%arg0: i32) -> (i32, i32) {
    %c0_i32 = arith.constant 0 : i32
    %c0_i32_0 = arith.constant 0 : i32
    %c0_i32_1 = arith.constant 0 : i32
    return %c0_i32, %c0_i32_0 : i32, i32
  }
  func.func @transform_6(%arg0: i32) -> (i32, i32) {
    %c0_i32 = arith.constant 0 : i32
    %c0_i32_0 = arith.constant 0 : i32
    %c0_i32_1 = arith.constant 0 : i32
    return %c0_i32, %c0_i32_0 : i32, i32
  }
  func.func @transform_7(%arg0: i32) -> (i32, i32, i32) {
    %c0_i32 = arith.constant 0 : i32
    %c0_i32_0 = arith.constant 0 : i32
    %c0_i32_1 = arith.constant 0 : i32
    %c0_i32_2 = arith.constant 0 : i32
    return %c0_i32, %c0_i32_0, %c0_i32_1 : i32, i32, i32
  }
  func.func @transform_8(%arg0: i32) -> (i32, i32, i32) {
    %c0_i32 = arith.constant 0 : i32
    %c0_i32_0 = arith.constant 0 : i32
    %c0_i32_1 = arith.constant 0 : i32
    %c0_i32_2 = arith.constant 0 : i32
    return %c0_i32, %c0_i32_0, %c0_i32_1 : i32, i32, i32
  }
  func.func @transform_9(%arg0: i32) -> (i32, i32) {
    %c0_i32 = arith.constant 0 : i32
    %c0_i32_0 = arith.constant 0 : i32
    %c0_i32_1 = arith.constant 0 : i32
    return %c0_i32, %c0_i32_0 : i32, i32
  }
  func.func @transform_10(%arg0: i32) -> (i32, i32) {
    %c0_i32 = arith.constant 0 : i32
    %c0_i32_0 = arith.constant 0 : i32
    %c0_i32_1 = arith.constant 0 : i32
    return %c0_i32, %c0_i32_0 : i32, i32
  }
  func.func @transform_11(%arg0: i32) -> (i32, i32, i32) {
    %c0_i32 = arith.constant 0 : i32
    %c0_i32_0 = arith.constant 0 : i32
    %c0_i32_1 = arith.constant 0 : i32
    %c0_i32_2 = arith.constant 0 : i32
    return %c0_i32, %c0_i32_0, %c0_i32_1 : i32, i32, i32
  }
  func.func @transform_12(%arg0: i32) -> (i32, i32, i32) {
    %c0_i32 = arith.constant 0 : i32
    %c0_i32_0 = arith.constant 0 : i32
    %c0_i32_1 = arith.constant 0 : i32
    %c0_i32_2 = arith.constant 0 : i32
    return %c0_i32, %c0_i32_0, %c0_i32_1 : i32, i32, i32
  }
  func.func @transform_13(%arg0: i32) -> (i32, i32) {
    %c0_i32 = arith.constant 0 : i32
    %c0_i32_0 = arith.constant 0 : i32
    %c0_i32_1 = arith.constant 0 : i32
    return %c0_i32, %c0_i32_0 : i32, i32
  }
  func.func @transform_14(%arg0: i32) -> (i32, i32) {
    %c0_i32 = arith.constant 0 : i32
    %c0_i32_0 = arith.constant 0 : i32
    %c0_i32_1 = arith.constant 0 : i32
    return %c0_i32, %c0_i32_0 : i32, i32
  }
  func.func @transform_15(%arg0: i32) -> (i32, i32) {
    %c0_i32 = arith.constant 0 : i32
    %c0_i32_0 = arith.constant 0 : i32
    return %arg0, %c0_i32 : i32, i32
  }
}

</mosaic_0001>

<llo_original>
// kernel: tpu_custom_call.1
$region0: #{tpu_custom_call.1}
  #allocation0 [shape = 'u32[]', space=smem, size = 0x4, offset = 0x4, fixed_abs, tag = 'smem constant byte address 0x4 - core index']
  #allocation1 [shape = 'u32[144,128]{1,0:T(1,128)}', space=vmem, size = 0x12000, scoped, tag = 'internal scratch']
  %s0 = inlined_call_operand.hbm [shape: bf16[128,128], index: 0, kind: input, shape index: {}]
  %s1 = inlined_call_operand.hbm [shape: bf16[128,128], index: 1, kind: input, shape index: {}]
  %s2 = inlined_call_operand.vmem [shape: f32[1,128], index: 2, kind: input, shape index: {}]
  %s3 = inlined_call_operand.hbm [shape: bf16[128,128], index: 3, kind: input, shape index: {}]
  %s4 = inlined_call_operand.vmem [shape: f32[1,128], index: 4, kind: input, shape index: {}]
  %s5 = inlined_call_operand.hbm [shape: bf16[128,128], index: 5, kind: input, shape index: {}]
  %s6 = inlined_call_operand.vmem [shape: f32[1,128], index: 6, kind: input, shape index: {}]
  %s7 = inlined_call_operand.hbm [shape: bf16[2,128,128], index: 7, kind: input, shape index: {}]
  %s8 = inlined_call_operand.vmem [shape: f32[2,1,128], index: 8, kind: input, shape index: {}]
  %s9 = inlined_call_operand.hbm [shape: bf16[128,128], index: 9, kind: input, shape index: {}]
  %s10 = inlined_call_operand.vmem [shape: f32[1,128], index: 10, kind: input, shape index: {}]
  %s11 = inlined_call_operand.hbm [shape: bf16[2,128,128], index: 11, kind: input, shape index: {}]
  %s12 = inlined_call_operand.vmem [shape: f32[2,1,128], index: 12, kind: input, shape index: {}]
  %s13 = inlined_call_operand.hbm [shape: bf16[128,128], index: 13, kind: input, shape index: {}]
  %s14 = inlined_call_operand.vmem [shape: f32[1,128], index: 14, kind: input, shape index: {}]
  %s15 = inlined_call_operand.hbm [shape: bf16[128,128], index: 15, kind: output, shape index: {}]
  %s16 = sld [smem:[#allocation0]]
  $region102: #{tpu_custom_call.1} parent=0
    _
  %s18 = ssub.s32 1, %s16
  %s19 = scalar_select 0, %s18, %s16
  $region1: #{tpu_custom_call.1} parent=0
    #allocation2 [shape = 'u8[32768]{0}', space=vmem, size = 0x8000, scoped, tag = 'input window, operand 0, single buffered']
    #allocation3 [shape = 's32[1]{0}', space=sflag, size = 0x4, scoped, tag = 'scoped memory for tpu_custom_call.1']
    #allocation4 [shape = 's32[1]{0}', space=sflag, size = 0x4, scoped, tag = 'scoped memory for tpu_custom_call.1']
    #allocation5 [shape = 'u8[32768]{0}', space=vmem, size = 0x8000, scoped, tag = 'input window, operand 1, single buffered']
    #allocation6 [shape = 's32[1]{0}', space=sflag, size = 0x4, scoped, tag = 'scoped memory for tpu_custom_call.1']
    #allocation7 [shape = 'u8[32768]{0}', space=vmem, size = 0x8000, scoped, tag = 'input window, operand 3, single buffered']
    #allocation8 [shape = 'u8[32768]{0}', space=vmem, size = 0x8000, scoped, tag = 'input window, operand 5, single buffered']
    #allocation9 [shape = 's32[1]{0}', space=sflag, size = 0x4, scoped, tag = 'scoped memory for tpu_custom_call.1']
    #allocation10 [shape = 'u8[65536]{0}', space=vmem, size = 0x10000, scoped, tag = 'input window, operand 7, single buffered']
    #allocation11 [shape = 'u8[32768]{0}', space=vmem, size = 0x8000, scoped, tag = 'input window, operand 9, single buffered']
    #allocation12 [shape = 's32[1]{0}', space=sflag, size = 0x4, scoped, tag = 'scoped memory for tpu_custom_call.1']
    #allocation13 [shape = 'u8[65536]{0}', space=vmem, size = 0x10000, scoped, tag = 'input window, operand 11, single buffered']
    #allocation14 [shape = 'u8[32768]{0}', space=vmem, size = 0x8000, scoped, tag = 'input window, operand 13, single buffered']
    #allocation15 [shape = 's32[1]{0}', space=sflag, size = 0x4, scoped, tag = 'scoped memory for tpu_custom_call.1']
    #allocation16 [shape = 'u8[32768]{0}', space=vmem, size = 0x8000, scoped, tag = 'output window, operand 0, single buffered']
    %20 = vsyncpa [#allocation3], 0
    %21 = vsyncpa [#allocation6], 0
    %22 = vsyncpa [#allocation9], 0
    %23 = vsyncpa [#allocation12], 0
    %24 = vsyncpa [#allocation15], 0
    %25 = vsyncpa [#allocation4], 0
    // Predicated region
    $region2: #{tpu_custom_call.1} parent=1 // pred_check
      _
    $region3: #{tpu_custom_call.1} parent=1 // pred_check_branch
      %27 = sbr.rel (0) target = $region5
    $region4: #{tpu_custom_call.1} parent=1 // pred_region
      %s29 = ssub.s32 1024, 1024
      %30 = vsyncadd [#allocation3], %s29
      %s31 = sshll.u32 [#allocation2], 4
      %s32 = int_to_ptr.vmem [resolvable:$true] %s31
      %37 = dma.hbm_to_vmem [thread:$0]  %s0, 1024, %s32, [#allocation3], 64, 64, 4
    $region5: #{tpu_custom_call.1} parent=1 // pred_fallthru
      _
    // Predicated region
    $region6: #{tpu_custom_call.1} parent=1 // pred_check
      _
    $region7: #{tpu_custom_call.1} parent=1 // pred_check_branch
      %39 = sbr.rel (0) target = $region9
    $region8: #{tpu_custom_call.1} parent=1 // pred_region
      %s41 = ssub.s32 1024, 1024
      %42 = vsyncadd [#allocation6], %s41
      %s43 = sshll.u32 [#allocation5], 4
      %s44 = int_to_ptr.vmem [resolvable:$true] %s43
      %49 = dma.hbm_to_vmem [thread:$0]  %s1, 1024, %s44, [#allocation6], 64, 64, 4
    $region9: #{tpu_custom_call.1} parent=1 // pred_fallthru
      _
    // Predicated region
    $region10: #{tpu_custom_call.1} parent=1 // pred_check
      _
    $region11: #{tpu_custom_call.1} parent=1 // pred_check_branch
      %51 = sbr.rel (0) target = $region13
    $region12: #{tpu_custom_call.1} parent=1 // pred_region
      _
    $region13: #{tpu_custom_call.1} parent=1 // pred_fallthru
      _
    // Predicated region
    $region14: #{tpu_custom_call.1} parent=1 // pred_check
      _
    $region15: #{tpu_custom_call.1} parent=1 // pred_check_branch
      %53 = sbr.rel (0) target = $region17
    $region16: #{tpu_custom_call.1} parent=1 // pred_region
      %s55 = ssub.s32 1024, 1024
      %56 = vsyncadd [#allocation6], %s55
      %s57 = sshll.u32 [#allocation7], 4
      %s58 = int_to_ptr.vmem [resolvable:$true] %s57
      %63 = dma.hbm_to_vmem [thread:$0]  %s3, 1024, %s58, [#allocation6], 64, 64, 4
    $region17: #{tpu_custom_call.1} parent=1 // pred_fallthru
      _
    // Predicated region
    $region18: #{tpu_custom_call.1} parent=1 // pred_check
      _
    $region19: #{tpu_custom_call.1} parent=1 // pred_check_branch
      %65 = sbr.rel (0) target = $region21
    $region20: #{tpu_custom_call.1} parent=1 // pred_region
      _
    $region21: #{tpu_custom_call.1} parent=1 // pred_fallthru
      _
    // Predicated region
    $region22: #{tpu_custom_call.1} parent=1 // pred_check
      _
    $region23: #{tpu_custom_call.1} parent=1 // pred_check_branch
      %67 = sbr.rel (0) target = $region25
    $region24: #{tpu_custom_call.1} parent=1 // pred_region
      %s69 = ssub.s32 1024, 1024
      %70 = vsyncadd [#allocation9], %s69
      %s71 = sshll.u32 [#allocation8], 4
      %s72 = int_to_ptr.vmem [resolvable:$true] %s71
      %77 = dma.hbm_to_vmem [thread:$0]  %s5, 1024, %s72, [#allocation9], 64, 64, 4
    $region25: #{tpu_custom_call.1} parent=1 // pred_fallthru
      _
    // Predicated region
    $region26: #{tpu_custom_call.1} parent=1 // pred_check
      _
    $region27: #{tpu_custom_call.1} parent=1 // pred_check_branch
      %79 = sbr.rel (0) target = $region29
    $region28: #{tpu_custom_call.1} parent=1 // pred_region
      _
    $region29: #{tpu_custom_call.1} parent=1 // pred_fallthru
      _
    // Predicated region
    $region30: #{tpu_custom_call.1} parent=1 // pred_check
      _
    $region31: #{tpu_custom_call.1} parent=1 // pred_check_branch
      %81 = sbr.rel (0) target = $region33
    $region32: #{tpu_custom_call.1} parent=1 // pred_region
      %s83 = ssub.s32 2048, 2048
      %84 = vsyncadd [#allocation9], %s83
      %s85 = sshll.u32 [#allocation10], 4
      %s86 = int_to_ptr.vmem [resolvable:$true] %s85
      %91 = dma.hbm_to_vmem [thread:$0]  %s7, 2048, %s86, [#allocation9], 64, 64, 4
    $region33: #{tpu_custom_call.1} parent=1 // pred_fallthru
      _
    // Predicated region
    $region34: #{tpu_custom_call.1} parent=1 // pred_check
      _
    $region35: #{tpu_custom_call.1} parent=1 // pred_check_branch
      %93 = sbr.rel (0) target = $region37
    $region36: #{tpu_custom_call.1} parent=1 // pred_region
      _
    $region37: #{tpu_custom_call.1} parent=1 // pred_fallthru
      _
    // Predicated region
    $region38: #{tpu_custom_call.1} parent=1 // pred_check
      _
    $region39: #{tpu_custom_call.1} parent=1 // pred_check_branch
      %95 = sbr.rel (0) target = $region41
    $region40: #{tpu_custom_call.1} parent=1 // pred_region
      %s97 = ssub.s32 1024, 1024
      %98 = vsyncadd [#allocation12], %s97
      %s99 = sshll.u32 [#allocation11], 4
      %s100 = int_to_ptr.vmem [resolvable:$true] %s99
      %105 = dma.hbm_to_vmem [thread:$0]  %s9, 1024, %s100, [#allocation12], 64, 64, 4
    $region41: #{tpu_custom_call.1} parent=1 // pred_fallthru
      _
    // Predicated region
    $region42: #{tpu_custom_call.1} parent=1 // pred_check
      _
    $region43: #{tpu_custom_call.1} parent=1 // pred_check_branch
      %107 = sbr.rel (0) target = $region45
    $region44: #{tpu_custom_call.1} parent=1 // pred_region
      _
    $region45: #{tpu_custom_call.1} parent=1 // pred_fallthru
      _
    // Predicated region
    $region46: #{tpu_custom_call.1} parent=1 // pred_check
      _
    $region47: #{tpu_custom_call.1} parent=1 // pred_check_branch
      %109 = sbr.rel (0) target = $region49
    $region48: #{tpu_custom_call.1} parent=1 // pred_region
      %s111 = ssub.s32 2048, 2048
      %112 = vsyncadd [#allocation12], %s111
      %s113 = sshll.u32 [#allocation13], 4
      %s114 = int_to_ptr.vmem [resolvable:$true] %s113
      %119 = dma.hbm_to_vmem [thread:$0]  %s11, 2048, %s114, [#allocation12], 64, 64, 4
    $region49: #{tpu_custom_call.1} parent=1 // pred_fallthru
      _
    // Predicated region
    $region50: #{tpu_custom_call.1} parent=1 // pred_check
      _
    $region51: #{tpu_custom_call.1} parent=1 // pred_check_branch
      %121 = sbr.rel (0) target = $region53
    $region52: #{tpu_custom_call.1} parent=1 // pred_region
      _
    $region53: #{tpu_custom_call.1} parent=1 // pred_fallthru
      _
    // Predicated region
    $region54: #{tpu_custom_call.1} parent=1 // pred_check
      _
    $region55: #{tpu_custom_call.1} parent=1 // pred_check_branch
      %123 = sbr.rel (0) target = $region57
    $region56: #{tpu_custom_call.1} parent=1 // pred_region
      %s125 = ssub.s32 1024, 1024
      %126 = vsyncadd [#allocation15], %s125
      %s127 = sshll.u32 [#allocation14], 4
      %s128 = int_to_ptr.vmem [resolvable:$true] %s127
      %133 = dma.hbm_to_vmem [thread:$0]  %s13, 1024, %s128, [#allocation15], 64, 64, 4
    $region57: #{tpu_custom_call.1} parent=1 // pred_fallthru
      _
    // Predicated region
    $region58: #{tpu_custom_call.1} parent=1 // pred_check
      _
    $region59: #{tpu_custom_call.1} parent=1 // pred_check_branch
      %135 = sbr.rel (0) target = $region61
    $region60: #{tpu_custom_call.1} parent=1 // pred_region
      _
    $region61: #{tpu_custom_call.1} parent=1 // pred_fallthru
      _
    // Predicated region
    $region62: #{tpu_custom_call.1} parent=1 // pred_check
      _
    $region63: #{tpu_custom_call.1} parent=1 // pred_check_branch
      %137 = sbr.rel (0) target = $region65
    $region64: #{tpu_custom_call.1} parent=1 // pred_region
      %138 = dma.done [#allocation3], 1024
    $region65: #{tpu_custom_call.1} parent=1 // pred_fallthru
      _
    // Predicated region
    $region66: #{tpu_custom_call.1} parent=1 // pred_check
      _
    $region67: #{tpu_custom_call.1} parent=1 // pred_check_branch
      %140 = sbr.rel (0) target = $region69
    $region68: #{tpu_custom_call.1} parent=1 // pred_region
      %141 = dma.done [#allocation6], 1024
    $region69: #{tpu_custom_call.1} parent=1 // pred_fallthru
      _
    // Predicated region
    $region70: #{tpu_custom_call.1} parent=1 // pred_check
      _
    $region71: #{tpu_custom_call.1} parent=1 // pred_check_branch
      %143 = sbr.rel (0) target = $region73
    $region72: #{tpu_custom_call.1} parent=1 // pred_region
      %144 = dma.done [#allocation6], 1024
    $region73: #{tpu_custom_call.1} parent=1 // pred_fallthru
      _
    // Predicated region
    $region74: #{tpu_custom_call.1} parent=1 // pred_check
      _
    $region75: #{tpu_custom_call.1} parent=1 // pred_check_branch
      %146 = sbr.rel (0) target = $region77
    $region76: #{tpu_custom_call.1} parent=1 // pred_region
      %147 = dma.done [#allocation9], 1024
    $region77: #{tpu_custom_call.1} parent=1 // pred_fallthru
      _
    // Predicated region
    $region78: #{tpu_custom_call.1} parent=1 // pred_check
      _
    $region79: #{tpu_custom_call.1} parent=1 // pred_check_branch
      %149 = sbr.rel (0) target = $region81
    $region80: #{tpu_custom_call.1} parent=1 // pred_region
      %150 = dma.done [#allocation9], 2048
    $region81: #{tpu_custom_call.1} parent=1 // pred_fallthru
      _
    // Predicated region
    $region82: #{tpu_custom_call.1} parent=1 // pred_check
      _
    $region83: #{tpu_custom_call.1} parent=1 // pred_check_branch
      %152 = sbr.rel (0) target = $region85
    $region84: #{tpu_custom_call.1} parent=1 // pred_region
      %153 = dma.done [#allocation12], 1024
    $region85: #{tpu_custom_call.1} parent=1 // pred_fallthru
      _
    // Predicated region
    $region86: #{tpu_custom_call.1} parent=1 // pred_check
      _
    $region87: #{tpu_custom_call.1} parent=1 // pred_check_branch
      %155 = sbr.rel (0) target = $region89
    $region88: #{tpu_custom_call.1} parent=1 // pred_region
      %156 = dma.done [#allocation12], 2048
    $region89: #{tpu_custom_call.1} parent=1 // pred_fallthru
      _
    // Predicated region
    $region90: #{tpu_custom_call.1} parent=1 // pred_check
      _
    $region91: #{tpu_custom_call.1} parent=1 // pred_check_branch
      %158 = sbr.rel (0) target = $region93
    $region92: #{tpu_custom_call.1} parent=1 // pred_region
      %159 = dma.done [#allocation15], 1024
    $region93: #{tpu_custom_call.1} parent=1 // pred_fallthru
      _
    %v161 = vld [vmem:[#allocation2] sm:$0xf]
    %v162 = vld [vmem:[#allocation2 + $0x4] sm:$0xf]
    %v163 = vld [vmem:[#allocation2 + $0x8] sm:$0xf]
    %v164 = vld [vmem:[#allocation2 + $0xc] sm:$0xf]
    %v165 = vld [vmem:[#allocation2 + $0x10] sm:$0xf]
    %v166 = vld [vmem:[#allocation2 + $0x14] sm:$0xf]
    %v167 = vld [vmem:[#allocation2 + $0x18] sm:$0xf]
    %v168 = vld [vmem:[#allocation2 + $0x1c] sm:$0xf]
    %v169 = vld [vmem:[#allocation2 + $0x20] sm:$0xf]
    %v170 = vld [vmem:[#allocation2 + $0x24] sm:$0xf]
    %v171 = vld [vmem:[#allocation2 + $0x28] sm:$0xf]
    %v172 = vld [vmem:[#allocation2 + $0x2c] sm:$0xf]
    %v173 = vld [vmem:[#allocation2 + $0x30] sm:$0xf]
    %v174 = vld [vmem:[#allocation2 + $0x34] sm:$0xf]
    %v175 = vld [vmem:[#allocation2 + $0x38] sm:$0xf]
    %v176 = vld [vmem:[#allocation2 + $0x3c] sm:$0xf]
    %v177 = vld [vmem:[#allocation5] sm:$0xf]
    %v178 = vld [vmem:[#allocation5 + $0x4] sm:$0xf]
    %v179 = vld [vmem:[#allocation5 + $0x8] sm:$0xf]
    %v180 = vld [vmem:[#allocation5 + $0xc] sm:$0xf]
    %v181 = vld [vmem:[#allocation5 + $0x10] sm:$0xf]
    %v182 = vld [vmem:[#allocation5 + $0x14] sm:$0xf]
    %v183 = vld [vmem:[#allocation5 + $0x18] sm:$0xf]
    %v184 = vld [vmem:[#allocation5 + $0x1c] sm:$0xf]
    %v185 = vld [vmem:[#allocation5 + $0x20] sm:$0xf]
    %v186 = vld [vmem:[#allocation5 + $0x24] sm:$0xf]
    %v187 = vld [vmem:[#allocation5 + $0x28] sm:$0xf]
    %v188 = vld [vmem:[#allocation5 + $0x2c] sm:$0xf]
    %v189 = vld [vmem:[#allocation5 + $0x30] sm:$0xf]
    %v190 = vld [vmem:[#allocation5 + $0x34] sm:$0xf]
    %v191 = vld [vmem:[#allocation5 + $0x38] sm:$0xf]
    %v192 = vld [vmem:[#allocation5 + $0x3c] sm:$0xf]
    %v193 = vld [vmem:[%s2] sm:$0x1]
    %v194 = vpack.c.bf16 %v193, %v193
    %v211 = vunpack.c.l.b16 %v161
    %v212 = vunpack.c.l.b16 %v162
    %v213 = vunpack.c.l.b16 %v163
    %v214 = vunpack.c.l.b16 %v164
    %v215 = vunpack.c.l.b16 %v165
    %v216 = vunpack.c.l.b16 %v166
    %v217 = vunpack.c.l.b16 %v167
    %v218 = vunpack.c.l.b16 %v168
    %v219 = vunpack.c.l.b16 %v169
    %v220 = vunpack.c.l.b16 %v170
    %v221 = vunpack.c.l.b16 %v171
    %v222 = vunpack.c.l.b16 %v172
    %v223 = vunpack.c.l.b16 %v173
    %v224 = vunpack.c.l.b16 %v174
    %v225 = vunpack.c.l.b16 %v175
    %v226 = vunpack.c.l.b16 %v176
    %v227 = vpack.c.b16 %v212, %v211
    %v228 = vpack.c.b16 %v214, %v213
    %v229 = vpack.c.b16 %v216, %v215
    %v230 = vpack.c.b16 %v218, %v217
    %v231 = vpack.c.b16 %v220, %v219
    %v232 = vpack.c.b16 %v222, %v221
    %v233 = vpack.c.b16 %v224, %v223
    %v234 = vpack.c.b16 %v226, %v225
    %v259 = vunpack.c.l.b16 %v177
    %v260 = vunpack.c.l.b16 %v178
    %v261 = vunpack.c.l.b16 %v179
    %v262 = vunpack.c.l.b16 %v180
    %v263 = vunpack.c.l.b16 %v181
    %v264 = vunpack.c.l.b16 %v182
    %v265 = vunpack.c.l.b16 %v183
    %v266 = vunpack.c.l.b16 %v184
    %v267 = vunpack.c.l.b16 %v185
    %v268 = vunpack.c.l.b16 %v186
    %v269 = vunpack.c.l.b16 %v187
    %v270 = vunpack.c.l.b16 %v188
    %v271 = vunpack.c.l.b16 %v189
    %v272 = vunpack.c.l.b16 %v190
    %v273 = vunpack.c.l.b16 %v191
    %v274 = vunpack.c.l.b16 %v192
    %v275 = vpack.c.b16 %v260, %v259
    %v276 = vpack.c.b16 %v262, %v261
    %v277 = vpack.c.b16 %v264, %v263
    %v278 = vpack.c.b16 %v266, %v265
    %v279 = vpack.c.b16 %v268, %v267
    %v280 = vpack.c.b16 %v270, %v269
    %v281 = vpack.c.b16 %v272, %v271
    %v282 = vpack.c.b16 %v274, %v273
    %291 = vmatprep.subr.bf16.mxu0 0
    %292 = vmatpush1.bf16.msra.mxu0 %v275
    %293 = vmatprep.subr.bf16.mxu0 0
    %294 = vmatpush1.bf16.msra.mxu0 %v276
    %295 = vmatprep.subr.bf16.mxu0 0
    %296 = vmatpush1.bf16.msra.mxu0 %v277
    %297 = vmatprep.subr.bf16.mxu0 0
    %298 = vmatpush1.bf16.msra.mxu0 %v278
    %299 = vmatprep.subr.bf16.mxu0 0
    %300 = vmatpush1.bf16.msra.mxu0 %v279
    %301 = vmatprep.subr.bf16.mxu0 0
    %302 = vmatpush1.bf16.msra.mxu0 %v280
    %303 = vmatprep.subr.bf16.mxu0 0
    %304 = vmatpush1.bf16.msra.mxu0 %v281
    %305 = vmatprep.subr.bf16.mxu0 0
    %306 = vmatpush1.bf16.msra.mxu0 %v282
    %307 = vmatprep.subr.bf16.mxu0 0
    %308 = vmatpush1.bf16.msra.mxu0 0
    %309 = vmatprep.subr.bf16.mxu0 0
    %310 = vmatpush1.bf16.msra.mxu0 0
    %311 = vmatprep.subr.bf16.mxu0 0
    %312 = vmatpush1.bf16.msra.mxu0 0
    %313 = vmatprep.subr.bf16.mxu0 0
    %314 = vmatpush1.bf16.msra.mxu0 0
    %315 = vmatprep.subr.bf16.mxu0 0
    %316 = vmatpush1.bf16.msra.mxu0 0
    %317 = vmatprep.subr.bf16.mxu0 0
    %318 = vmatpush1.bf16.msra.mxu0 0
    %319 = vmatprep.subr.bf16.mxu0 0
    %320 = vmatpush1.bf16.msra.mxu0 0
    %321 = vmatprep.subr.bf16.mxu0 0
    %322 = vmatpush1.bf16.msra.mxu0 0
    %323 = vmatprep.mubr.bf16.mxu0 0
    %324 = vmatmul.mubr.bf16.gmra.mrb[0].mxu0 %v227
    %v325 = vpop.f32.mrb[0].mxu0
    %v326 = vadd.f32 0.0, %v325
    %v327 = vpop.f32.mrb[0].mxu0
    %v328 = vpop.f32.mrb[0].mxu0
    %v329 = vadd.f32 0.0, %v328
    %v330 = vpop.f32.mrb[0].mxu0
    %331 = vmatprep.mubr.bf16.mxu0 0
    %332 = vmatmul.mubr.bf16.gmra.mrb[0].mxu0 %v228
    %v333 = vpop.f32.mrb[0].mxu0
    %v334 = vadd.f32 0.0, %v333
    %v335 = vpop.f32.mrb[0].mxu0
    %v336 = vpop.f32.mrb[0].mxu0
    %v337 = vadd.f32 0.0, %v336
    %v338 = vpop.f32.mrb[0].mxu0
    %339 = vmatprep.mubr.bf16.mxu0 0
    %340 = vmatmul.mubr.bf16.gmra.mrb[0].mxu0 %v229
    %v341 = vpop.f32.mrb[0].mxu0
    %v342 = vadd.f32 0.0, %v341
    %v343 = vpop.f32.mrb[0].mxu0
    %v344 = vpop.f32.mrb[0].mxu0
    %v345 = vadd.f32 0.0, %v344
    %v346 = vpop.f32.mrb[0].mxu0
    %347 = vmatprep.mubr.bf16.mxu0 0
    %348 = vmatmul.mubr.bf16.gmra.mrb[0].mxu0 %v230
    %v349 = vpop.f32.mrb[0].mxu0
    %v350 = vadd.f32 0.0, %v349
    %v351 = vpop.f32.mrb[0].mxu0
    %v352 = vpop.f32.mrb[0].mxu0
    %v353 = vadd.f32 0.0, %v352
    %v354 = vpop.f32.mrb[0].mxu0
    %355 = vmatprep.mubr.bf16.mxu0 0
    %356 = vmatmul.mubr.bf16.gmra.mrb[0].mxu0 %v231
    %v357 = vpop.f32.mrb[0].mxu0
    %v358 = vadd.f32 0.0, %v357
    %v359 = vpop.f32.mrb[0].mxu0
    %v360 = vpop.f32.mrb[0].mxu0
    %v361 = vadd.f32 0.0, %v360
    %v362 = vpop.f32.mrb[0].mxu0
    %363 = vmatprep.mubr.bf16.mxu0 0
    %364 = vmatmul.mubr.bf16.gmra.mrb[0].mxu0 %v232
    %v365 = vpop.f32.mrb[0].mxu0
    %v366 = vadd.f32 0.0, %v365
    %v367 = vpop.f32.mrb[0].mxu0
    %v368 = vpop.f32.mrb[0].mxu0
    %v369 = vadd.f32 0.0, %v368
    %v370 = vpop.f32.mrb[0].mxu0
    %371 = vmatprep.mubr.bf16.mxu0 0
    %372 = vmatmul.mubr.bf16.gmra.mrb[0].mxu0 %v233
    %v373 = vpop.f32.mrb[0].mxu0
    %v374 = vadd.f32 0.0, %v373
    %v375 = vpop.f32.mrb[0].mxu0
    %v376 = vpop.f32.mrb[0].mxu0
    %v377 = vadd.f32 0.0, %v376
    %v378 = vpop.f32.mrb[0].mxu0
    %379 = vmatprep.mubr.bf16.mxu0 0
    %380 = vmatmul.mubr.bf16.gmra.mrb[0].mxu0 %v234
    %v381 = vpop.f32.mrb[0].mxu0
    %v382 = vadd.f32 0.0, %v381
    %v383 = vpop.f32.mrb[0].mxu0
    %v384 = vpop.f32.mrb[0].mxu0
    %v385 = vadd.f32 0.0, %v384
    %v386 = vpop.f32.mrb[0].mxu0
    %387 = vdwg.mxu0
    %v388 = vpack.c.bf16 %v329, %v326
    %v389 = vpack.c.bf16 %v337, %v334
    %v390 = vpack.c.bf16 %v345, %v342
    %v391 = vpack.c.bf16 %v353, %v350
    %v392 = vpack.c.bf16 %v361, %v358
    %v393 = vpack.c.bf16 %v369, %v366
    %v394 = vpack.c.bf16 %v377, %v374
    %v395 = vpack.c.bf16 %v385, %v382
    %v397 = vpack.i.b16 %v194, %v194
    %v399 = vlaneseq
    %v400 = vshrl.u32 %v399, 7
    %v401 = vsub.s32 0, %v400
    %v402 = vrot.slane %v397, %v401
    %v403 = vadd.bf16 %v388, %v402
    %v404 = vadd.bf16 %v389, %v402
    %v405 = vadd.bf16 %v390, %v402
    %v406 = vadd.bf16 %v391, %v402
    %v407 = vadd.bf16 %v392, %v402
    %v408 = vadd.bf16 %v393, %v402
    %v409 = vadd.bf16 %v394, %v402
    %v410 = vadd.bf16 %v395, %v402
    %v411 = vmax.bf16 %v403, 0
    %v412 = vmax.bf16 %v404, 0
    %v413 = vmax.bf16 %v405, 0
    %v414 = vmax.bf16 %v406, 0
    %v415 = vmax.bf16 %v407, 0
    %v416 = vmax.bf16 %v408, 0
    %v417 = vmax.bf16 %v409, 0
    %v418 = vmax.bf16 %v410, 0
    %v419 = vld [vmem:[#allocation7] sm:$0xf]
    %v420 = vld [vmem:[#allocation7 + $0x4] sm:$0xf]
    %v421 = vld [vmem:[#allocation7 + $0x8] sm:$0xf]
    %v422 = vld [vmem:[#allocation7 + $0xc] sm:$0xf]
    %v423 = vld [vmem:[#allocation7 + $0x10] sm:$0xf]
    %v424 = vld [vmem:[#allocation7 + $0x14] sm:$0xf]
    %v425 = vld [vmem:[#allocation7 + $0x18] sm:$0xf]
    %v426 = vld [vmem:[#allocation7 + $0x1c] sm:$0xf]
    %v427 = vld [vmem:[#allocation7 + $0x20] sm:$0xf]
    %v428 = vld [vmem:[#allocation7 + $0x24] sm:$0xf]
    %v429 = vld [vmem:[#allocation7 + $0x28] sm:$0xf]
    %v430 = vld [vmem:[#allocation7 + $0x2c] sm:$0xf]
    %v431 = vld [vmem:[#allocation7 + $0x30] sm:$0xf]
    %v432 = vld [vmem:[#allocation7 + $0x34] sm:$0xf]
    %v433 = vld [vmem:[#allocation7 + $0x38] sm:$0xf]
    %v434 = vld [vmem:[#allocation7 + $0x3c] sm:$0xf]
    %v435 = vld [vmem:[%s4] sm:$0x1]
    %v436 = vpack.c.bf16 %v435, %v435
    %v453 = vunpack.c.l.b16 %v419
    %v454 = vunpack.c.l.b16 %v420
    %v455 = vunpack.c.l.b16 %v421
    %v456 = vunpack.c.l.b16 %v422
    %v457 = vunpack.c.l.b16 %v423
    %v458 = vunpack.c.l.b16 %v424
    %v459 = vunpack.c.l.b16 %v425
    %v460 = vunpack.c.l.b16 %v426
    %v461 = vunpack.c.l.b16 %v427
    %v462 = vunpack.c.l.b16 %v428
    %v463 = vunpack.c.l.b16 %v429
    %v464 = vunpack.c.l.b16 %v430
    %v465 = vunpack.c.l.b16 %v431
    %v466 = vunpack.c.l.b16 %v432
    %v467 = vunpack.c.l.b16 %v433
    %v468 = vunpack.c.l.b16 %v434
    %v469 = vpack.c.b16 %v454, %v453
    %v470 = vpack.c.b16 %v456, %v455
    %v471 = vpack.c.b16 %v458, %v457
    %v472 = vpack.c.b16 %v460, %v459
    %v473 = vpack.c.b16 %v462, %v461
    %v474 = vpack.c.b16 %v464, %v463
    %v475 = vpack.c.b16 %v466, %v465
    %v476 = vpack.c.b16 %v468, %v467
    %485 = vmatprep.subr.bf16.mxu0 0
    %486 = vmatpush1.bf16.msra.mxu0 %v469
    %487 = vmatprep.subr.bf16.mxu0 0
    %488 = vmatpush1.bf16.msra.mxu0 %v470
    %489 = vmatprep.subr.bf16.mxu0 0
    %490 = vmatpush1.bf16.msra.mxu0 %v471
    %491 = vmatprep.subr.bf16.mxu0 0
    %492 = vmatpush1.bf16.msra.mxu0 %v472
    %493 = vmatprep.subr.bf16.mxu0 0
    %494 = vmatpush1.bf16.msra.mxu0 %v473
    %495 = vmatprep.subr.bf16.mxu0 0
    %496 = vmatpush1.bf16.msra.mxu0 %v474
    %497 = vmatprep.subr.bf16.mxu0 0
    %498 = vmatpush1.bf16.msra.mxu0 %v475
    %499 = vmatprep.subr.bf16.mxu0 0
    %500 = vmatpush1.bf16.msra.mxu0 %v476
    %501 = vmatprep.subr.bf16.mxu0 0
    %502 = vmatpush1.bf16.msra.mxu0 0
    %503 = vmatprep.subr.bf16.mxu0 0
    %504 = vmatpush1.bf16.msra.mxu0 0
    %505 = vmatprep.subr.bf16.mxu0 0
    %506 = vmatpush1.bf16.msra.mxu0 0
    %507 = vmatprep.subr.bf16.mxu0 0
    %508 = vmatpush1.bf16.msra.mxu0 0
    %509 = vmatprep.subr.bf16.mxu0 0
    %510 = vmatpush1.bf16.msra.mxu0 0
    %511 = vmatprep.subr.bf16.mxu0 0
    %512 = vmatpush1.bf16.msra.mxu0 0
    %513 = vmatprep.subr.bf16.mxu0 0
    %514 = vmatpush1.bf16.msra.mxu0 0
    %515 = vmatprep.subr.bf16.mxu0 0
    %516 = vmatpush1.bf16.msra.mxu0 0
    %517 = vmatprep.mubr.bf16.mxu0 0
    %518 = vmatmul.mubr.bf16.gmra.mrb[0].mxu0 %v411
    %v519 = vpop.f32.mrb[0].mxu0
    %v520 = vadd.f32 0.0, %v519
    %v521 = vpop.f32.mrb[0].mxu0
    %v522 = vpop.f32.mrb[0].mxu0
    %v523 = vadd.f32 0.0, %v522
    %v524 = vpop.f32.mrb[0].mxu0
    %525 = vmatprep.mubr.bf16.mxu0 0
    %526 = vmatmul.mubr.bf16.gmra.mrb[0].mxu0 %v412
    %v527 = vpop.f32.mrb[0].mxu0
    %v528 = vadd.f32 0.0, %v527
    %v529 = vpop.f32.mrb[0].mxu0
    %v530 = vpop.f32.mrb[0].mxu0
    %v531 = vadd.f32 0.0, %v530
    %v532 = vpop.f32.mrb[0].mxu0
    %533 = vmatprep.mubr.bf16.mxu0 0
    %534 = vmatmul.mubr.bf16.gmra.mrb[0].mxu0 %v413
    %v535 = vpop.f32.mrb[0].mxu0
    %v536 = vadd.f32 0.0, %v535
    %v537 = vpop.f32.mrb[0].mxu0
    %v538 = vpop.f32.mrb[0].mxu0
    %v539 = vadd.f32 0.0, %v538
    %v540 = vpop.f32.mrb[0].mxu0
    %541 = vmatprep.mubr.bf16.mxu0 0
    %542 = vmatmul.mubr.bf16.gmra.mrb[0].mxu0 %v414
    %v543 = vpop.f32.mrb[0].mxu0
    %v544 = vadd.f32 0.0, %v543
    %v545 = vpop.f32.mrb[0].mxu0
    %v546 = vpop.f32.mrb[0].mxu0
    %v547 = vadd.f32 0.0, %v546
    %v548 = vpop.f32.mrb[0].mxu0
    %549 = vmatprep.mubr.bf16.mxu0 0
    %550 = vmatmul.mubr.bf16.gmra.mrb[0].mxu0 %v415
    %v551 = vpop.f32.mrb[0].mxu0
    %v552 = vadd.f32 0.0, %v551
    %v553 = vpop.f32.mrb[0].mxu0
    %v554 = vpop.f32.mrb[0].mxu0
    %v555 = vadd.f32 0.0, %v554
    %v556 = vpop.f32.mrb[0].mxu0
    %557 = vmatprep.mubr.bf16.mxu0 0
    %558 = vmatmul.mubr.bf16.gmra.mrb[0].mxu0 %v416
    %v559 = vpop.f32.mrb[0].mxu0
    %v560 = vadd.f32 0.0, %v559
    %v561 = vpop.f32.mrb[0].mxu0
    %v562 = vpop.f32.mrb[0].mxu0
    %v563 = vadd.f32 0.0, %v562
    %v564 = vpop.f32.mrb[0].mxu0
    %565 = vmatprep.mubr.bf16.mxu0 0
    %566 = vmatmul.mubr.bf16.gmra.mrb[0].mxu0 %v417
    %v567 = vpop.f32.mrb[0].mxu0
    %v568 = vadd.f32 0.0, %v567
    %v569 = vpop.f32.mrb[0].mxu0
    %v570 = vpop.f32.mrb[0].mxu0
    %v571 = vadd.f32 0.0, %v570
    %v572 = vpop.f32.mrb[0].mxu0
    %573 = vmatprep.mubr.bf16.mxu0 0
    %574 = vmatmul.mubr.bf16.gmra.mrb[0].mxu0 %v418
    %v575 = vpop.f32.mrb[0].mxu0
    %v576 = vadd.f32 0.0, %v575
    %v577 = vpop.f32.mrb[0].mxu0
    %v578 = vpop.f32.mrb[0].mxu0
    %v579 = vadd.f32 0.0, %v578
    %v580 = vpop.f32.mrb[0].mxu0
    %581 = vdwg.mxu0
    %v582 = vpack.c.bf16 %v523, %v520
    %v583 = vpack.c.bf16 %v531, %v528
    %v584 = vpack.c.bf16 %v539, %v536
    %v585 = vpack.c.bf16 %v547, %v544
    %v586 = vpack.c.bf16 %v555, %v552
    %v587 = vpack.c.bf16 %v563, %v560
    %v588 = vpack.c.bf16 %v571, %v568
    %v589 = vpack.c.bf16 %v579, %v576
    %v591 = vpack.i.b16 %v436, %v436
    %v593 = vlaneseq
    %v594 = vshrl.u32 %v593, 7
    %v595 = vsub.s32 0, %v594
    %v596 = vrot.slane %v591, %v595
    %v597 = vadd.bf16 %v582, %v596
    %v598 = vadd.bf16 %v583, %v596
    %v599 = vadd.bf16 %v584, %v596
    %v600 = vadd.bf16 %v585, %v596
    %v601 = vadd.bf16 %v586, %v596
    %v602 = vadd.bf16 %v587, %v596
    %v603 = vadd.bf16 %v588, %v596
    %v604 = vadd.bf16 %v589, %v596
    %v605 = vmax.bf16 %v597, 0
    %v606 = vmax.bf16 %v598, 0
    %v607 = vmax.bf16 %v599, 0
    %v608 = vmax.bf16 %v600, 0
    %v609 = vmax.bf16 %v601, 0
    %v610 = vmax.bf16 %v602, 0
    %v611 = vmax.bf16 %v603, 0
    %v612 = vmax.bf16 %v604, 0
    %v613 = vld [vmem:[#allocation8] sm:$0xf]
    %v614 = vld [vmem:[#allocation8 + $0x4] sm:$0xf]
    %v615 = vld [vmem:[#allocation8 + $0x8] sm:$0xf]
    %v616 = vld [vmem:[#allocation8 + $0xc] sm:$0xf]
    %v617 = vld [vmem:[#allocation8 + $0x10] sm:$0xf]
    %v618 = vld [vmem:[#allocation8 + $0x14] sm:$0xf]
    %v619 = vld [vmem:[#allocation8 + $0x18] sm:$0xf]
    %v620 = vld [vmem:[#allocation8 + $0x1c] sm:$0xf]
    %v621 = vld [vmem:[#allocation8 + $0x20] sm:$0xf]
    %v622 = vld [vmem:[#allocation8 + $0x24] sm:$0xf]
    %v623 = vld [vmem:[#allocation8 + $0x28] sm:$0xf]
    %v624 = vld [vmem:[#allocation8 + $0x2c] sm:$0xf]
    %v625 = vld [vmem:[#allocation8 + $0x30] sm:$0xf]
    %v626 = vld [vmem:[#allocation8 + $0x34] sm:$0xf]
    %v627 = vld [vmem:[#allocation8 + $0x38] sm:$0xf]
    %v628 = vld [vmem:[#allocation8 + $0x3c] sm:$0xf]
    %v629 = vld [vmem:[%s6] sm:$0x1]
    %v630 = vpack.c.bf16 %v629, %v629
    %v647 = vunpack.c.l.b16 %v613
    %v648 = vunpack.c.l.b16 %v614
    %v649 = vunpack.c.l.b16 %v615
    %v650 = vunpack.c.l.b16 %v616
    %v651 = vunpack.c.l.b16 %v617
    %v652 = vunpack.c.l.b16 %v618
    %v653 = vunpack.c.l.b16 %v619
    %v654 = vunpack.c.l.b16 %v620
    %v655 = vunpack.c.l.b16 %v621
    %v656 = vunpack.c.l.b16 %v622
    %v657 = vunpack.c.l.b16 %v623
    %v658 = vunpack.c.l.b16 %v624
    %v659 = vunpack.c.l.b16 %v625
    %v660 = vunpack.c.l.b16 %v626
    %v661 = vunpack.c.l.b16 %v627
    %v662 = vunpack.c.l.b16 %v628
    %v663 = vpack.c.b16 %v648, %v647
    %v664 = vpack.c.b16 %v650, %v649
    %v665 = vpack.c.b16 %v652, %v651
    %v666 = vpack.c.b16 %v654, %v653
    %v667 = vpack.c.b16 %v656, %v655
    %v668 = vpack.c.b16 %v658, %v657
    %v669 = vpack.c.b16 %v660, %v659
    %v670 = vpack.c.b16 %v662, %v661
    %679 = vmatprep.subr.bf16.mxu0 0
    %680 = vmatpush1.bf16.msra.mxu0 %v663
    %681 = vmatprep.subr.bf16.mxu0 0
    %682 = vmatpush1.bf16.msra.mxu0 %v664
    %683 = vmatprep.subr.bf16.mxu0 0
    %684 = vmatpush1.bf16.msra.mxu0 %v665
    %685 = vmatprep.subr.bf16.mxu0 0
    %686 = vmatpush1.bf16.msra.mxu0 %v666
    %687 = vmatprep.subr.bf16.mxu0 0
    %688 = vmatpush1.bf16.msra.mxu0 %v667
    %689 = vmatprep.subr.bf16.mxu0 0
    %690 = vmatpush1.bf16.msra.mxu0 %v668
    %691 = vmatprep.subr.bf16.mxu0 0
    %692 = vmatpush1.bf16.msra.mxu0 %v669
    %693 = vmatprep.subr.bf16.mxu0 0
    %694 = vmatpush1.bf16.msra.mxu0 %v670
    %695 = vmatprep.subr.bf16.mxu0 0
    %696 = vmatpush1.bf16.msra.mxu0 0
    %697 = vmatprep.subr.bf16.mxu0 0
    %698 = vmatpush1.bf16.msra.mxu0 0
    %699 = vmatprep.subr.bf16.mxu0 0
    %700 = vmatpush1.bf16.msra.mxu0 0
    %701 = vmatprep.subr.bf16.mxu0 0
    %702 = vmatpush1.bf16.msra.mxu0 0
    %703 = vmatprep.subr.bf16.mxu0 0
    %704 = vmatpush1.bf16.msra.mxu0 0
    %705 = vmatprep.subr.bf16.mxu0 0
    %706 = vmatpush1.bf16.msra.mxu0 0
    %707 = vmatprep.subr.bf16.mxu0 0
    %708 = vmatpush1.bf16.msra.mxu0 0
    %709 = vmatprep.subr.bf16.mxu0 0
    %710 = vmatpush1.bf16.msra.mxu0 0
    %711 = vmatprep.mubr.bf16.mxu0 0
    %712 = vmatmul.mubr.bf16.gmra.mrb[0].mxu0 %v605
    %v713 = vpop.f32.mrb[0].mxu0
    %v714 = vadd.f32 0.0, %v713
    %v715 = vpop.f32.mrb[0].mxu0
    %v716 = vpop.f32.mrb[0].mxu0
    %v717 = vadd.f32 0.0, %v716
    %v718 = vpop.f32.mrb[0].mxu0
    %719 = vmatprep.mubr.bf16.mxu0 0
    %720 = vmatmul.mubr.bf16.gmra.mrb[0].mxu0 %v606
    %v721 = vpop.f32.mrb[0].mxu0
    %v722 = vadd.f32 0.0, %v721
    %v723 = vpop.f32.mrb[0].mxu0
    %v724 = vpop.f32.mrb[0].mxu0
    %v725 = vadd.f32 0.0, %v724
    %v726 = vpop.f32.mrb[0].mxu0
    %727 = vmatprep.mubr.bf16.mxu0 0
    %728 = vmatmul.mubr.bf16.gmra.mrb[0].mxu0 %v607
    %v729 = vpop.f32.mrb[0].mxu0
    %v730 = vadd.f32 0.0, %v729
    %v731 = vpop.f32.mrb[0].mxu0
    %v732 = vpop.f32.mrb[0].mxu0
    %v733 = vadd.f32 0.0, %v732
    %v734 = vpop.f32.mrb[0].mxu0
    %735 = vmatprep.mubr.bf16.mxu0 0
    %736 = vmatmul.mubr.bf16.gmra.mrb[0].mxu0 %v608
    %v737 = vpop.f32.mrb[0].mxu0
    %v738 = vadd.f32 0.0, %v737
    %v739 = vpop.f32.mrb[0].mxu0
    %v740 = vpop.f32.mrb[0].mxu0
    %v741 = vadd.f32 0.0, %v740
    %v742 = vpop.f32.mrb[0].mxu0
    %743 = vmatprep.mubr.bf16.mxu0 0
    %744 = vmatmul.mubr.bf16.gmra.mrb[0].mxu0 %v609
    %v745 = vpop.f32.mrb[0].mxu0
    %v746 = vadd.f32 0.0, %v745
    %v747 = vpop.f32.mrb[0].mxu0
    %v748 = vpop.f32.mrb[0].mxu0
    %v749 = vadd.f32 0.0, %v748
    %v750 = vpop.f32.mrb[0].mxu0
    %751 = vmatprep.mubr.bf16.mxu0 0
    %752 = vmatmul.mubr.bf16.gmra.mrb[0].mxu0 %v610
    %v753 = vpop.f32.mrb[0].mxu0
    %v754 = vadd.f32 0.0, %v753
    %v755 = vpop.f32.mrb[0].mxu0
    %v756 = vpop.f32.mrb[0].mxu0
    %v757 = vadd.f32 0.0, %v756
    %v758 = vpop.f32.mrb[0].mxu0
    %759 = vmatprep.mubr.bf16.mxu0 0
    %760 = vmatmul.mubr.bf16.gmra.mrb[0].mxu0 %v611
    %v761 = vpop.f32.mrb[0].mxu0
    %v762 = vadd.f32 0.0, %v761
    %v763 = vpop.f32.mrb[0].mxu0
    %v764 = vpop.f32.mrb[0].mxu0
    %v765 = vadd.f32 0.0, %v764
    %v766 = vpop.f32.mrb[0].mxu0
    %767 = vmatprep.mubr.bf16.mxu0 0
    %768 = vmatmul.mubr.bf16.gmra.mrb[0].mxu0 %v612
    %v769 = vpop.f32.mrb[0].mxu0
    %v770 = vadd.f32 0.0, %v769
    %v771 = vpop.f32.mrb[0].mxu0
    %v772 = vpop.f32.mrb[0].mxu0
    %v773 = vadd.f32 0.0, %v772
    %v774 = vpop.f32.mrb[0].mxu0
    %775 = vdwg.mxu0
    %v776 = vpack.c.bf16 %v717, %v714
    %v777 = vpack.c.bf16 %v725, %v722
    %v778 = vpack.c.bf16 %v733, %v730
    %v779 = vpack.c.bf16 %v741, %v738
    %v780 = vpack.c.bf16 %v749, %v746
    %v781 = vpack.c.bf16 %v757, %v754
    %v782 = vpack.c.bf16 %v765, %v762
    %v783 = vpack.c.bf16 %v773, %v770
    %v785 = vpack.i.b16 %v630, %v630
    %v787 = vlaneseq
    %v788 = vshrl.u32 %v787, 7
    %v789 = vsub.s32 0, %v788
    %v790 = vrot.slane %v785, %v789
    %v791 = vadd.bf16 %v776, %v790
    %v792 = vadd.bf16 %v777, %v790
    %v793 = vadd.bf16 %v778, %v790
    %v794 = vadd.bf16 %v779, %v790
    %v795 = vadd.bf16 %v780, %v790
    %v796 = vadd.bf16 %v781, %v790
    %v797 = vadd.bf16 %v782, %v790
    %v798 = vadd.bf16 %v783, %v790
    %v799 = vmax.bf16 %v791, 0
    %v800 = vmax.bf16 %v792, 0
    %v801 = vmax.bf16 %v793, 0
    %v802 = vmax.bf16 %v794, 0
    %v803 = vmax.bf16 %v795, 0
    %v804 = vmax.bf16 %v796, 0
    %v805 = vmax.bf16 %v797, 0
    %v806 = vmax.bf16 %v798, 0
    %v807 = vld [vmem:[#allocation10] sm:$0xf]
    %v808 = vld [vmem:[#allocation10 + $0x4] sm:$0xf]
    %v809 = vld [vmem:[#allocation10 + $0x8] sm:$0xf]
    %v810 = vld [vmem:[#allocation10 + $0xc] sm:$0xf]
    %v811 = vld [vmem:[#allocation10 + $0x10] sm:$0xf]
    %v812 = vld [vmem:[#allocation10 + $0x14] sm:$0xf]
    %v813 = vld [vmem:[#allocation10 + $0x18] sm:$0xf]
    %v814 = vld [vmem:[#allocation10 + $0x1c] sm:$0xf]
    %v815 = vld [vmem:[#allocation10 + $0x20] sm:$0xf]
    %v816 = vld [vmem:[#allocation10 + $0x24] sm:$0xf]
    %v817 = vld [vmem:[#allocation10 + $0x28] sm:$0xf]
    %v818 = vld [vmem:[#allocation10 + $0x2c] sm:$0xf]
    %v819 = vld [vmem:[#allocation10 + $0x30] sm:$0xf]
    %v820 = vld [vmem:[#allocation10 + $0x34] sm:$0xf]
    %v821 = vld [vmem:[#allocation10 + $0x38] sm:$0xf]
    %v822 = vld [vmem:[#allocation10 + $0x3c] sm:$0xf]
    %v823 = vld [vmem:[%s8] sm:$0x1]
    %v824 = vpack.c.bf16 %v823, %v823
    %v841 = vunpack.c.l.b16 %v807
    %v842 = vunpack.c.l.b16 %v808
    %v843 = vunpack.c.l.b16 %v809
    %v844 = vunpack.c.l.b16 %v810
    %v845 = vunpack.c.l.b16 %v811
    %v846 = vunpack.c.l.b16 %v812
    %v847 = vunpack.c.l.b16 %v813
    %v848 = vunpack.c.l.b16 %v814
    %v849 = vunpack.c.l.b16 %v815
    %v850 = vunpack.c.l.b16 %v816
    %v851 = vunpack.c.l.b16 %v817
    %v852 = vunpack.c.l.b16 %v818
    %v853 = vunpack.c.l.b16 %v819
    %v854 = vunpack.c.l.b16 %v820
    %v855 = vunpack.c.l.b16 %v821
    %v856 = vunpack.c.l.b16 %v822
    %v857 = vpack.c.b16 %v842, %v841
    %v858 = vpack.c.b16 %v844, %v843
    %v859 = vpack.c.b16 %v846, %v845
    %v860 = vpack.c.b16 %v848, %v847
    %v861 = vpack.c.b16 %v850, %v849
    %v862 = vpack.c.b16 %v852, %v851
    %v863 = vpack.c.b16 %v854, %v853
    %v864 = vpack.c.b16 %v856, %v855
    %873 = vmatprep.subr.bf16.mxu0 0
    %874 = vmatpush1.bf16.msra.mxu0 %v857
    %875 = vmatprep.subr.bf16.mxu0 0
    %876 = vmatpush1.bf16.msra.mxu0 %v858
    %877 = vmatprep.subr.bf16.mxu0 0
    %878 = vmatpush1.bf16.msra.mxu0 %v859
    %879 = vmatprep.subr.bf16.mxu0 0
    %880 = vmatpush1.bf16.msra.mxu0 %v860
    %881 = vmatprep.subr.bf16.mxu0 0
    %882 = vmatpush1.bf16.msra.mxu0 %v861
    %883 = vmatprep.subr.bf16.mxu0 0
    %884 = vmatpush1.bf16.msra.mxu0 %v862
    %885 = vmatprep.subr.bf16.mxu0 0
    %886 = vmatpush1.bf16.msra.mxu0 %v863
    %887 = vmatprep.subr.bf16.mxu0 0
    %888 = vmatpush1.bf16.msra.mxu0 %v864
    %889 = vmatprep.subr.bf16.mxu0 0
    %890 = vmatpush1.bf16.msra.mxu0 0
    %891 = vmatprep.subr.bf16.mxu0 0
    %892 = vmatpush1.bf16.msra.mxu0 0
    %893 = vmatprep.subr.bf16.mxu0 0
    %894 = vmatpush1.bf16.msra.mxu0 0
    %895 = vmatprep.subr.bf16.mxu0 0
    %896 = vmatpush1.bf16.msra.mxu0 0
    %897 = vmatprep.subr.bf16.mxu0 0
    %898 = vmatpush1.bf16.msra.mxu0 0
    %899 = vmatprep.subr.bf16.mxu0 0
    %900 = vmatpush1.bf16.msra.mxu0 0
    %901 = vmatprep.subr.bf16.mxu0 0
    %902 = vmatpush1.bf16.msra.mxu0 0
    %903 = vmatprep.subr.bf16.mxu0 0
    %904 = vmatpush1.bf16.msra.mxu0 0
    %905 = vmatprep.mubr.bf16.mxu0 0
    %906 = vmatmul.mubr.bf16.gmra.mrb[0].mxu0 %v799
    %v907 = vpop.f32.mrb[0].mxu0
    %v908 = vadd.f32 0.0, %v907
    %v909 = vpop.f32.mrb[0].mxu0
    %v910 = vpop.f32.mrb[0].mxu0
    %v911 = vadd.f32 0.0, %v910
    %v912 = vpop.f32.mrb[0].mxu0
    %913 = vmatprep.mubr.bf16.mxu0 0
    %914 = vmatmul.mubr.bf16.gmra.mrb[0].mxu0 %v800
    %v915 = vpop.f32.mrb[0].mxu0
    %v916 = vadd.f32 0.0, %v915
    %v917 = vpop.f32.mrb[0].mxu0
    %v918 = vpop.f32.mrb[0].mxu0
    %v919 = vadd.f32 0.0, %v918
    %v920 = vpop.f32.mrb[0].mxu0
    %921 = vmatprep.mubr.bf16.mxu0 0
    %922 = vmatmul.mubr.bf16.gmra.mrb[0].mxu0 %v801
    %v923 = vpop.f32.mrb[0].mxu0
    %v924 = vadd.f32 0.0, %v923
    %v925 = vpop.f32.mrb[0].mxu0
    %v926 = vpop.f32.mrb[0].mxu0
    %v927 = vadd.f32 0.0, %v926
    %v928 = vpop.f32.mrb[0].mxu0
    %929 = vmatprep.mubr.bf16.mxu0 0
    %930 = vmatmul.mubr.bf16.gmra.mrb[0].mxu0 %v802
    %v931 = vpop.f32.mrb[0].mxu0
    %v932 = vadd.f32 0.0, %v931
    %v933 = vpop.f32.mrb[0].mxu0
    %v934 = vpop.f32.mrb[0].mxu0
    %v935 = vadd.f32 0.0, %v934
    %v936 = vpop.f32.mrb[0].mxu0
    %937 = vmatprep.mubr.bf16.mxu0 0
    %938 = vmatmul.mubr.bf16.gmra.mrb[0].mxu0 %v803
    %v939 = vpop.f32.mrb[0].mxu0
    %v940 = vadd.f32 0.0, %v939
    %v941 = vpop.f32.mrb[0].mxu0
    %v942 = vpop.f32.mrb[0].mxu0
    %v943 = vadd.f32 0.0, %v942
    %v944 = vpop.f32.mrb[0].mxu0
    %945 = vmatprep.mubr.bf16.mxu0 0
    %946 = vmatmul.mubr.bf16.gmra.mrb[0].mxu0 %v804
    %v947 = vpop.f32.mrb[0].mxu0
    %v948 = vadd.f32 0.0, %v947
    %v949 = vpop.f32.mrb[0].mxu0
    %v950 = vpop.f32.mrb[0].mxu0
    %v951 = vadd.f32 0.0, %v950
    %v952 = vpop.f32.mrb[0].mxu0
    %953 = vmatprep.mubr.bf16.mxu0 0
    %954 = vmatmul.mubr.bf16.gmra.mrb[0].mxu0 %v805
    %v955 = vpop.f32.mrb[0].mxu0
    %v956 = vadd.f32 0.0, %v955
    %v957 = vpop.f32.mrb[0].mxu0
    %v958 = vpop.f32.mrb[0].mxu0
    %v959 = vadd.f32 0.0, %v958
    %v960 = vpop.f32.mrb[0].mxu0
    %961 = vmatprep.mubr.bf16.mxu0 0
    %962 = vmatmul.mubr.bf16.gmra.mrb[0].mxu0 %v806
    %v963 = vpop.f32.mrb[0].mxu0
    %v964 = vadd.f32 0.0, %v963
    %v965 = vpop.f32.mrb[0].mxu0
    %v966 = vpop.f32.mrb[0].mxu0
    %v967 = vadd.f32 0.0, %v966
    %v968 = vpop.f32.mrb[0].mxu0
    %969 = vdwg.mxu0
    %v970 = vpack.c.bf16 %v911, %v908
    %v971 = vpack.c.bf16 %v919, %v916
    %v972 = vpack.c.bf16 %v927, %v924
    %v973 = vpack.c.bf16 %v935, %v932
    %v974 = vpack.c.bf16 %v943, %v940
    %v975 = vpack.c.bf16 %v951, %v948
    %v976 = vpack.c.bf16 %v959, %v956
    %v977 = vpack.c.bf16 %v967, %v964
    %v979 = vpack.i.b16 %v824, %v824
    %v981 = vlaneseq
    %v982 = vshrl.u32 %v981, 7
    %v983 = vsub.s32 0, %v982
    %v984 = vrot.slane %v979, %v983
    %v985 = vadd.bf16 %v970, %v984
    %v986 = vadd.bf16 %v971, %v984
    %v987 = vadd.bf16 %v972, %v984
    %v988 = vadd.bf16 %v973, %v984
    %v989 = vadd.bf16 %v974, %v984
    %v990 = vadd.bf16 %v975, %v984
    %v991 = vadd.bf16 %v976, %v984
    %v992 = vadd.bf16 %v977, %v984
    %v993 = vmax.bf16 %v985, 0
    %v994 = vmax.bf16 %v986, 0
    %v995 = vmax.bf16 %v987, 0
    %v996 = vmax.bf16 %v988, 0
    %v997 = vmax.bf16 %v989, 0
    %v998 = vmax.bf16 %v990, 0
    %v999 = vmax.bf16 %v991, 0
    %v1000 = vmax.bf16 %v992, 0
    %s1001 = scalar_lea.vmem [#allocation10], 64
    %v1002 = vld [vmem:[%s1001] sm:$0xf]
    %v1003 = vld [vmem:[%s1001 + $0x4] sm:$0xf]
    %v1004 = vld [vmem:[%s1001 + $0x8] sm:$0xf]
    %v1005 = vld [vmem:[%s1001 + $0xc] sm:$0xf]
    %v1006 = vld [vmem:[%s1001 + $0x10] sm:$0xf]
    %v1007 = vld [vmem:[%s1001 + $0x14] sm:$0xf]
    %v1008 = vld [vmem:[%s1001 + $0x18] sm:$0xf]
    %v1009 = vld [vmem:[%s1001 + $0x1c] sm:$0xf]
    %v1010 = vld [vmem:[%s1001 + $0x20] sm:$0xf]
    %v1011 = vld [vmem:[%s1001 + $0x24] sm:$0xf]
    %v1012 = vld [vmem:[%s1001 + $0x28] sm:$0xf]
    %v1013 = vld [vmem:[%s1001 + $0x2c] sm:$0xf]
    %v1014 = vld [vmem:[%s1001 + $0x30] sm:$0xf]
    %v1015 = vld [vmem:[%s1001 + $0x34] sm:$0xf]
    %v1016 = vld [vmem:[%s1001 + $0x38] sm:$0xf]
    %v1017 = vld [vmem:[%s1001 + $0x3c] sm:$0xf]
    %s1018 = scalar_lea.vmem %s8, 1
    %v1019 = vld [vmem:[%s1018] sm:$0x1]
    %v1020 = vpack.c.bf16 %v1019, %v1019
    %v1037 = vunpack.c.l.b16 %v1002
    %v1038 = vunpack.c.l.b16 %v1003
    %v1039 = vunpack.c.l.b16 %v1004
    %v1040 = vunpack.c.l.b16 %v1005
    %v1041 = vunpack.c.l.b16 %v1006
    %v1042 = vunpack.c.l.b16 %v1007
    %v1043 = vunpack.c.l.b16 %v1008
    %v1044 = vunpack.c.l.b16 %v1009
    %v1045 = vunpack.c.l.b16 %v1010
    %v1046 = vunpack.c.l.b16 %v1011
    %v1047 = vunpack.c.l.b16 %v1012
    %v1048 = vunpack.c.l.b16 %v1013
    %v1049 = vunpack.c.l.b16 %v1014
    %v1050 = vunpack.c.l.b16 %v1015
    %v1051 = vunpack.c.l.b16 %v1016
    %v1052 = vunpack.c.l.b16 %v1017
    %v1053 = vpack.c.b16 %v1038, %v1037
    %v1054 = vpack.c.b16 %v1040, %v1039
    %v1055 = vpack.c.b16 %v1042, %v1041
    %v1056 = vpack.c.b16 %v1044, %v1043
    %v1057 = vpack.c.b16 %v1046, %v1045
    %v1058 = vpack.c.b16 %v1048, %v1047
    %v1059 = vpack.c.b16 %v1050, %v1049
    %v1060 = vpack.c.b16 %v1052, %v1051
    %1069 = vmatprep.subr.bf16.mxu0 0
    %1070 = vmatpush1.bf16.msra.mxu0 %v1053
    %1071 = vmatprep.subr.bf16.mxu0 0
    %1072 = vmatpush1.bf16.msra.mxu0 %v1054
    %1073 = vmatprep.subr.bf16.mxu0 0
    %1074 = vmatpush1.bf16.msra.mxu0 %v1055
    %1075 = vmatprep.subr.bf16.mxu0 0
    %1076 = vmatpush1.bf16.msra.mxu0 %v1056
    %1077 = vmatprep.subr.bf16.mxu0 0
    %1078 = vmatpush1.bf16.msra.mxu0 %v1057
    %1079 = vmatprep.subr.bf16.mxu0 0
    %1080 = vmatpush1.bf16.msra.mxu0 %v1058
    %1081 = vmatprep.subr.bf16.mxu0 0
    %1082 = vmatpush1.bf16.msra.mxu0 %v1059
    %1083 = vmatprep.subr.bf16.mxu0 0
    %1084 = vmatpush1.bf16.msra.mxu0 %v1060
    %1085 = vmatprep.subr.bf16.mxu0 0
    %1086 = vmatpush1.bf16.msra.mxu0 0
    %1087 = vmatprep.subr.bf16.mxu0 0
    %1088 = vmatpush1.bf16.msra.mxu0 0
    %1089 = vmatprep.subr.bf16.mxu0 0
    %1090 = vmatpush1.bf16.msra.mxu0 0
    %1091 = vmatprep.subr.bf16.mxu0 0
    %1092 = vmatpush1.bf16.msra.mxu0 0
    %1093 = vmatprep.subr.bf16.mxu0 0
    %1094 = vmatpush1.bf16.msra.mxu0 0
    %1095 = vmatprep.subr.bf16.mxu0 0
    %1096 = vmatpush1.bf16.msra.mxu0 0
    %1097 = vmatprep.subr.bf16.mxu0 0
    %1098 = vmatpush1.bf16.msra.mxu0 0
    %1099 = vmatprep.subr.bf16.mxu0 0
    %1100 = vmatpush1.bf16.msra.mxu0 0
    %1101 = vmatprep.mubr.bf16.mxu0 0
    %1102 = vmatmul.mubr.bf16.gmra.mrb[0].mxu0 %v993
    %v1103 = vpop.f32.mrb[0].mxu0
    %v1104 = vadd.f32 0.0, %v1103
    %v1105 = vpop.f32.mrb[0].mxu0
    %v1106 = vpop.f32.mrb[0].mxu0
    %v1107 = vadd.f32 0.0, %v1106
    %v1108 = vpop.f32.mrb[0].mxu0
    %1109 = vmatprep.mubr.bf16.mxu0 0
    %1110 = vmatmul.mubr.bf16.gmra.mrb[0].mxu0 %v994
    %v1111 = vpop.f32.mrb[0].mxu0
    %v1112 = vadd.f32 0.0, %v1111
    %v1113 = vpop.f32.mrb[0].mxu0
    %v1114 = vpop.f32.mrb[0].mxu0
    %v1115 = vadd.f32 0.0, %v1114
    %v1116 = vpop.f32.mrb[0].mxu0
    %1117 = vmatprep.mubr.bf16.mxu0 0
    %1118 = vmatmul.mubr.bf16.gmra.mrb[0].mxu0 %v995
    %v1119 = vpop.f32.mrb[0].mxu0
    %v1120 = vadd.f32 0.0, %v1119
    %v1121 = vpop.f32.mrb[0].mxu0
    %v1122 = vpop.f32.mrb[0].mxu0
    %v1123 = vadd.f32 0.0, %v1122
    %v1124 = vpop.f32.mrb[0].mxu0
    %1125 = vmatprep.mubr.bf16.mxu0 0
    %1126 = vmatmul.mubr.bf16.gmra.mrb[0].mxu0 %v996
    %v1127 = vpop.f32.mrb[0].mxu0
    %v1128 = vadd.f32 0.0, %v1127
    %v1129 = vpop.f32.mrb[0].mxu0
    %v1130 = vpop.f32.mrb[0].mxu0
    %v1131 = vadd.f32 0.0, %v1130
    %v1132 = vpop.f32.mrb[0].mxu0
    %1133 = vmatprep.mubr.bf16.mxu0 0
    %1134 = vmatmul.mubr.bf16.gmra.mrb[0].mxu0 %v997
    %v1135 = vpop.f32.mrb[0].mxu0
    %v1136 = vadd.f32 0.0, %v1135
    %v1137 = vpop.f32.mrb[0].mxu0
    %v1138 = vpop.f32.mrb[0].mxu0
    %v1139 = vadd.f32 0.0, %v1138
    %v1140 = vpop.f32.mrb[0].mxu0
    %1141 = vmatprep.mubr.bf16.mxu0 0
    %1142 = vmatmul.mubr.bf16.gmra.mrb[0].mxu0 %v998
    %v1143 = vpop.f32.mrb[0].mxu0
    %v1144 = vadd.f32 0.0, %v1143
    %v1145 = vpop.f32.mrb[0].mxu0
    %v1146 = vpop.f32.mrb[0].mxu0
    %v1147 = vadd.f32 0.0, %v1146
    %v1148 = vpop.f32.mrb[0].mxu0
    %1149 = vmatprep.mubr.bf16.mxu0 0
    %1150 = vmatmul.mubr.bf16.gmra.mrb[0].mxu0 %v999
    %v1151 = vpop.f32.mrb[0].mxu0
    %v1152 = vadd.f32 0.0, %v1151
    %v1153 = vpop.f32.mrb[0].mxu0
    %v1154 = vpop.f32.mrb[0].mxu0
    %v1155 = vadd.f32 0.0, %v1154
    %v1156 = vpop.f32.mrb[0].mxu0
    %1157 = vmatprep.mubr.bf16.mxu0 0
    %1158 = vmatmul.mubr.bf16.gmra.mrb[0].mxu0 %v1000
    %v1159 = vpop.f32.mrb[0].mxu0
    %v1160 = vadd.f32 0.0, %v1159
    %v1161 = vpop.f32.mrb[0].mxu0
    %v1162 = vpop.f32.mrb[0].mxu0
    %v1163 = vadd.f32 0.0, %v1162
    %v1164 = vpop.f32.mrb[0].mxu0
    %1165 = vdwg.mxu0
    %v1166 = vpack.c.bf16 %v1107, %v1104
    %v1167 = vpack.c.bf16 %v1115, %v1112
    %v1168 = vpack.c.bf16 %v1123, %v1120
    %v1169 = vpack.c.bf16 %v1131, %v1128
    %v1170 = vpack.c.bf16 %v1139, %v1136
    %v1171 = vpack.c.bf16 %v1147, %v1144
    %v1172 = vpack.c.bf16 %v1155, %v1152
    %v1173 = vpack.c.bf16 %v1163, %v1160
    %v1175 = vpack.i.b16 %v1020, %v1020
    %v1177 = vlaneseq
    %v1178 = vshrl.u32 %v1177, 7
    %v1179 = vsub.s32 0, %v1178
    %v1180 = vrot.slane %v1175, %v1179
    %v1181 = vadd.bf16 %v1166, %v1180
    %v1182 = vadd.bf16 %v1167, %v1180
    %v1183 = vadd.bf16 %v1168, %v1180
    %v1184 = vadd.bf16 %v1169, %v1180
    %v1185 = vadd.bf16 %v1170, %v1180
    %v1186 = vadd.bf16 %v1171, %v1180
    %v1187 = vadd.bf16 %v1172, %v1180
    %v1188 = vadd.bf16 %v1173, %v1180
    %v1189 = vmax.bf16 %v1181, 0
    %v1190 = vmax.bf16 %v1182, 0
    %v1191 = vmax.bf16 %v1183, 0
    %v1192 = vmax.bf16 %v1184, 0
    %v1193 = vmax.bf16 %v1185, 0
    %v1194 = vmax.bf16 %v1186, 0
    %v1195 = vmax.bf16 %v1187, 0
    %v1196 = vmax.bf16 %v1188, 0
    %v1197 = vld [vmem:[#allocation11] sm:$0xf]
    %v1198 = vld [vmem:[#allocation11 + $0x4] sm:$0xf]
    %v1199 = vld [vmem:[#allocation11 + $0x8] sm:$0xf]
    %v1200 = vld [vmem:[#allocation11 + $0xc] sm:$0xf]
    %v1201 = vld [vmem:[#allocation11 + $0x10] sm:$0xf]
    %v1202 = vld [vmem:[#allocation11 + $0x14] sm:$0xf]
    %v1203 = vld [vmem:[#allocation11 + $0x18] sm:$0xf]
    %v1204 = vld [vmem:[#allocation11 + $0x1c] sm:$0xf]
    %v1205 = vld [vmem:[#allocation11 + $0x20] sm:$0xf]
    %v1206 = vld [vmem:[#allocation11 + $0x24] sm:$0xf]
    %v1207 = vld [vmem:[#allocation11 + $0x28] sm:$0xf]
    %v1208 = vld [vmem:[#allocation11 + $0x2c] sm:$0xf]
    %v1209 = vld [vmem:[#allocation11 + $0x30] sm:$0xf]
    %v1210 = vld [vmem:[#allocation11 + $0x34] sm:$0xf]
    %v1211 = vld [vmem:[#allocation11 + $0x38] sm:$0xf]
    %v1212 = vld [vmem:[#allocation11 + $0x3c] sm:$0xf]
    %v1213 = vld [vmem:[%s10] sm:$0x1]
    %v1214 = vpack.c.bf16 %v1213, %v1213
    %v1231 = vunpack.c.l.b16 %v1197
    %v1232 = vunpack.c.l.b16 %v1198
    %v1233 = vunpack.c.l.b16 %v1199
    %v1234 = vunpack.c.l.b16 %v1200
    %v1235 = vunpack.c.l.b16 %v1201
    %v1236 = vunpack.c.l.b16 %v1202
    %v1237 = vunpack.c.l.b16 %v1203
    %v1238 = vunpack.c.l.b16 %v1204
    %v1239 = vunpack.c.l.b16 %v1205
    %v1240 = vunpack.c.l.b16 %v1206
    %v1241 = vunpack.c.l.b16 %v1207
    %v1242 = vunpack.c.l.b16 %v1208
    %v1243 = vunpack.c.l.b16 %v1209
    %v1244 = vunpack.c.l.b16 %v1210
    %v1245 = vunpack.c.l.b16 %v1211
    %v1246 = vunpack.c.l.b16 %v1212
    %v1247 = vpack.c.b16 %v1232, %v1231
    %v1248 = vpack.c.b16 %v1234, %v1233
    %v1249 = vpack.c.b16 %v1236, %v1235
    %v1250 = vpack.c.b16 %v1238, %v1237
    %v1251 = vpack.c.b16 %v1240, %v1239
    %v1252 = vpack.c.b16 %v1242, %v1241
    %v1253 = vpack.c.b16 %v1244, %v1243
    %v1254 = vpack.c.b16 %v1246, %v1245
    %1263 = vmatprep.subr.bf16.mxu0 0
    %1264 = vmatpush1.bf16.msra.mxu0 %v1247
    %1265 = vmatprep.subr.bf16.mxu0 0
    %1266 = vmatpush1.bf16.msra.mxu0 %v1248
    %1267 = vmatprep.subr.bf16.mxu0 0
    %1268 = vmatpush1.bf16.msra.mxu0 %v1249
    %1269 = vmatprep.subr.bf16.mxu0 0
    %1270 = vmatpush1.bf16.msra.mxu0 %v1250
    %1271 = vmatprep.subr.bf16.mxu0 0
    %1272 = vmatpush1.bf16.msra.mxu0 %v1251
    %1273 = vmatprep.subr.bf16.mxu0 0
    %1274 = vmatpush1.bf16.msra.mxu0 %v1252
    %1275 = vmatprep.subr.bf16.mxu0 0
    %1276 = vmatpush1.bf16.msra.mxu0 %v1253
    %1277 = vmatprep.subr.bf16.mxu0 0
    %1278 = vmatpush1.bf16.msra.mxu0 %v1254
    %1279 = vmatprep.subr.bf16.mxu0 0
    %1280 = vmatpush1.bf16.msra.mxu0 0
    %1281 = vmatprep.subr.bf16.mxu0 0
    %1282 = vmatpush1.bf16.msra.mxu0 0
    %1283 = vmatprep.subr.bf16.mxu0 0
    %1284 = vmatpush1.bf16.msra.mxu0 0
    %1285 = vmatprep.subr.bf16.mxu0 0
    %1286 = vmatpush1.bf16.msra.mxu0 0
    %1287 = vmatprep.subr.bf16.mxu0 0
    %1288 = vmatpush1.bf16.msra.mxu0 0
    %1289 = vmatprep.subr.bf16.mxu0 0
    %1290 = vmatpush1.bf16.msra.mxu0 0
    %1291 = vmatprep.subr.bf16.mxu0 0
    %1292 = vmatpush1.bf16.msra.mxu0 0
    %1293 = vmatprep.subr.bf16.mxu0 0
    %1294 = vmatpush1.bf16.msra.mxu0 0
    %1295 = vmatprep.mubr.bf16.mxu0 0
    %1296 = vmatmul.mubr.bf16.gmra.mrb[0].mxu0 %v1189
    %v1297 = vpop.f32.mrb[0].mxu0
    %v1298 = vadd.f32 0.0, %v1297
    %v1299 = vpop.f32.mrb[0].mxu0
    %v1300 = vpop.f32.mrb[0].mxu0
    %v1301 = vadd.f32 0.0, %v1300
    %v1302 = vpop.f32.mrb[0].mxu0
    %1303 = vmatprep.mubr.bf16.mxu0 0
    %1304 = vmatmul.mubr.bf16.gmra.mrb[0].mxu0 %v1190
    %v1305 = vpop.f32.mrb[0].mxu0
    %v1306 = vadd.f32 0.0, %v1305
    %v1307 = vpop.f32.mrb[0].mxu0
    %v1308 = vpop.f32.mrb[0].mxu0
    %v1309 = vadd.f32 0.0, %v1308
    %v1310 = vpop.f32.mrb[0].mxu0
    %1311 = vmatprep.mubr.bf16.mxu0 0
    %1312 = vmatmul.mubr.bf16.gmra.mrb[0].mxu0 %v1191
    %v1313 = vpop.f32.mrb[0].mxu0
    %v1314 = vadd.f32 0.0, %v1313
    %v1315 = vpop.f32.mrb[0].mxu0
    %v1316 = vpop.f32.mrb[0].mxu0
    %v1317 = vadd.f32 0.0, %v1316
    %v1318 = vpop.f32.mrb[0].mxu0
    %1319 = vmatprep.mubr.bf16.mxu0 0
    %1320 = vmatmul.mubr.bf16.gmra.mrb[0].mxu0 %v1192
    %v1321 = vpop.f32.mrb[0].mxu0
    %v1322 = vadd.f32 0.0, %v1321
    %v1323 = vpop.f32.mrb[0].mxu0
    %v1324 = vpop.f32.mrb[0].mxu0
    %v1325 = vadd.f32 0.0, %v1324
    %v1326 = vpop.f32.mrb[0].mxu0
    %1327 = vmatprep.mubr.bf16.mxu0 0
    %1328 = vmatmul.mubr.bf16.gmra.mrb[0].mxu0 %v1193
    %v1329 = vpop.f32.mrb[0].mxu0
    %v1330 = vadd.f32 0.0, %v1329
    %v1331 = vpop.f32.mrb[0].mxu0
    %v1332 = vpop.f32.mrb[0].mxu0
    %v1333 = vadd.f32 0.0, %v1332
    %v1334 = vpop.f32.mrb[0].mxu0
    %1335 = vmatprep.mubr.bf16.mxu0 0
    %1336 = vmatmul.mubr.bf16.gmra.mrb[0].mxu0 %v1194
    %v1337 = vpop.f32.mrb[0].mxu0
    %v1338 = vadd.f32 0.0, %v1337
    %v1339 = vpop.f32.mrb[0].mxu0
    %v1340 = vpop.f32.mrb[0].mxu0
    %v1341 = vadd.f32 0.0, %v1340
    %v1342 = vpop.f32.mrb[0].mxu0
    %1343 = vmatprep.mubr.bf16.mxu0 0
    %1344 = vmatmul.mubr.bf16.gmra.mrb[0].mxu0 %v1195
    %v1345 = vpop.f32.mrb[0].mxu0
    %v1346 = vadd.f32 0.0, %v1345
    %v1347 = vpop.f32.mrb[0].mxu0
    %v1348 = vpop.f32.mrb[0].mxu0
    %v1349 = vadd.f32 0.0, %v1348
    %v1350 = vpop.f32.mrb[0].mxu0
    %1351 = vmatprep.mubr.bf16.mxu0 0
    %1352 = vmatmul.mubr.bf16.gmra.mrb[0].mxu0 %v1196
    %v1353 = vpop.f32.mrb[0].mxu0
    %v1354 = vadd.f32 0.0, %v1353
    %v1355 = vpop.f32.mrb[0].mxu0
    %v1356 = vpop.f32.mrb[0].mxu0
    %v1357 = vadd.f32 0.0, %v1356
    %v1358 = vpop.f32.mrb[0].mxu0
    %1359 = vdwg.mxu0
    %v1360 = vpack.c.bf16 %v1301, %v1298
    %v1361 = vpack.c.bf16 %v1309, %v1306
    %v1362 = vpack.c.bf16 %v1317, %v1314
    %v1363 = vpack.c.bf16 %v1325, %v1322
    %v1364 = vpack.c.bf16 %v1333, %v1330
    %v1365 = vpack.c.bf16 %v1341, %v1338
    %v1366 = vpack.c.bf16 %v1349, %v1346
    %v1367 = vpack.c.bf16 %v1357, %v1354
    %v1369 = vpack.i.b16 %v1214, %v1214
    %v1371 = vlaneseq
    %v1372 = vshrl.u32 %v1371, 7
    %v1373 = vsub.s32 0, %v1372
    %v1374 = vrot.slane %v1369, %v1373
    %v1375 = vadd.bf16 %v1360, %v1374
    %v1376 = vadd.bf16 %v1361, %v1374
    %v1377 = vadd.bf16 %v1362, %v1374
    %v1378 = vadd.bf16 %v1363, %v1374
    %v1379 = vadd.bf16 %v1364, %v1374
    %v1380 = vadd.bf16 %v1365, %v1374
    %v1381 = vadd.bf16 %v1366, %v1374
    %v1382 = vadd.bf16 %v1367, %v1374
    %v1383 = vmax.bf16 %v1375, 0
    %v1384 = vmax.bf16 %v1376, 0
    %v1385 = vmax.bf16 %v1377, 0
    %v1386 = vmax.bf16 %v1378, 0
    %v1387 = vmax.bf16 %v1379, 0
    %v1388 = vmax.bf16 %v1380, 0
    %v1389 = vmax.bf16 %v1381, 0
    %v1390 = vmax.bf16 %v1382, 0
    %v1391 = vld [vmem:[#allocation13] sm:$0xf]
    %v1392 = vld [vmem:[#allocation13 + $0x4] sm:$0xf]
    %v1393 = vld [vmem:[#allocation13 + $0x8] sm:$0xf]
    %v1394 = vld [vmem:[#allocation13 + $0xc] sm:$0xf]
    %v1395 = vld [vmem:[#allocation13 + $0x10] sm:$0xf]
    %v1396 = vld [vmem:[#allocation13 + $0x14] sm:$0xf]
    %v1397 = vld [vmem:[#allocation13 + $0x18] sm:$0xf]
    %v1398 = vld [vmem:[#allocation13 + $0x1c] sm:$0xf]
    %v1399 = vld [vmem:[#allocation13 + $0x20] sm:$0xf]
    %v1400 = vld [vmem:[#allocation13 + $0x24] sm:$0xf]
    %v1401 = vld [vmem:[#allocation13 + $0x28] sm:$0xf]
    %v1402 = vld [vmem:[#allocation13 + $0x2c] sm:$0xf]
    %v1403 = vld [vmem:[#allocation13 + $0x30] sm:$0xf]
    %v1404 = vld [vmem:[#allocation13 + $0x34] sm:$0xf]
    %v1405 = vld [vmem:[#allocation13 + $0x38] sm:$0xf]
    %v1406 = vld [vmem:[#allocation13 + $0x3c] sm:$0xf]
    %v1407 = vld [vmem:[%s12] sm:$0x1]
    %v1408 = vpack.c.bf16 %v1407, %v1407
    %v1425 = vunpack.c.l.b16 %v1391
    %v1426 = vunpack.c.l.b16 %v1392
    %v1427 = vunpack.c.l.b16 %v1393
    %v1428 = vunpack.c.l.b16 %v1394
    %v1429 = vunpack.c.l.b16 %v1395
    %v1430 = vunpack.c.l.b16 %v1396
    %v1431 = vunpack.c.l.b16 %v1397
    %v1432 = vunpack.c.l.b16 %v1398
    %v1433 = vunpack.c.l.b16 %v1399
    %v1434 = vunpack.c.l.b16 %v1400
    %v1435 = vunpack.c.l.b16 %v1401
    %v1436 = vunpack.c.l.b16 %v1402
    %v1437 = vunpack.c.l.b16 %v1403
    %v1438 = vunpack.c.l.b16 %v1404
    %v1439 = vunpack.c.l.b16 %v1405
    %v1440 = vunpack.c.l.b16 %v1406
    %v1441 = vpack.c.b16 %v1426, %v1425
    %v1442 = vpack.c.b16 %v1428, %v1427
    %v1443 = vpack.c.b16 %v1430, %v1429
    %v1444 = vpack.c.b16 %v1432, %v1431
    %v1445 = vpack.c.b16 %v1434, %v1433
    %v1446 = vpack.c.b16 %v1436, %v1435
    %v1447 = vpack.c.b16 %v1438, %v1437
    %v1448 = vpack.c.b16 %v1440, %v1439
    %1457 = vmatprep.subr.bf16.mxu0 0
    %1458 = vmatpush1.bf16.msra.mxu0 %v1441
    %1459 = vmatprep.subr.bf16.mxu0 0
    %1460 = vmatpush1.bf16.msra.mxu0 %v1442
    %1461 = vmatprep.subr.bf16.mxu0 0
    %1462 = vmatpush1.bf16.msra.mxu0 %v1443
    %1463 = vmatprep.subr.bf16.mxu0 0
    %1464 = vmatpush1.bf16.msra.mxu0 %v1444
    %1465 = vmatprep.subr.bf16.mxu0 0
    %1466 = vmatpush1.bf16.msra.mxu0 %v1445
    %1467 = vmatprep.subr.bf16.mxu0 0
    %1468 = vmatpush1.bf16.msra.mxu0 %v1446
    %1469 = vmatprep.subr.bf16.mxu0 0
    %1470 = vmatpush1.bf16.msra.mxu0 %v1447
    %1471 = vmatprep.subr.bf16.mxu0 0
    %1472 = vmatpush1.bf16.msra.mxu0 %v1448
    %1473 = vmatprep.subr.bf16.mxu0 0
    %1474 = vmatpush1.bf16.msra.mxu0 0
    %1475 = vmatprep.subr.bf16.mxu0 0
    %1476 = vmatpush1.bf16.msra.mxu0 0
    %1477 = vmatprep.subr.bf16.mxu0 0
    %1478 = vmatpush1.bf16.msra.mxu0 0
    %1479 = vmatprep.subr.bf16.mxu0 0
    %1480 = vmatpush1.bf16.msra.mxu0 0
    %1481 = vmatprep.subr.bf16.mxu0 0
    %1482 = vmatpush1.bf16.msra.mxu0 0
    %1483 = vmatprep.subr.bf16.mxu0 0
    %1484 = vmatpush1.bf16.msra.mxu0 0
    %1485 = vmatprep.subr.bf16.mxu0 0
    %1486 = vmatpush1.bf16.msra.mxu0 0
    %1487 = vmatprep.subr.bf16.mxu0 0
    %1488 = vmatpush1.bf16.msra.mxu0 0
    %1489 = vmatprep.mubr.bf16.mxu0 0
    %1490 = vmatmul.mubr.bf16.gmra.mrb[0].mxu0 %v1383
    %v1491 = vpop.f32.mrb[0].mxu0
    %v1492 = vadd.f32 0.0, %v1491
    %v1493 = vpop.f32.mrb[0].mxu0
    %v1494 = vpop.f32.mrb[0].mxu0
    %v1495 = vadd.f32 0.0, %v1494
    %v1496 = vpop.f32.mrb[0].mxu0
    %1497 = vmatprep.mubr.bf16.mxu0 0
    %1498 = vmatmul.mubr.bf16.gmra.mrb[0].mxu0 %v1384
    %v1499 = vpop.f32.mrb[0].mxu0
    %v1500 = vadd.f32 0.0, %v1499
    %v1501 = vpop.f32.mrb[0].mxu0
    %v1502 = vpop.f32.mrb[0].mxu0
    %v1503 = vadd.f32 0.0, %v1502
    %v1504 = vpop.f32.mrb[0].mxu0
    %1505 = vmatprep.mubr.bf16.mxu0 0
    %1506 = vmatmul.mubr.bf16.gmra.mrb[0].mxu0 %v1385
    %v1507 = vpop.f32.mrb[0].mxu0
    %v1508 = vadd.f32 0.0, %v1507
    %v1509 = vpop.f32.mrb[0].mxu0
    %v1510 = vpop.f32.mrb[0].mxu0
    %v1511 = vadd.f32 0.0, %v1510
    %v1512 = vpop.f32.mrb[0].mxu0
    %1513 = vmatprep.mubr.bf16.mxu0 0
    %1514 = vmatmul.mubr.bf16.gmra.mrb[0].mxu0 %v1386
    %v1515 = vpop.f32.mrb[0].mxu0
    %v1516 = vadd.f32 0.0, %v1515
    %v1517 = vpop.f32.mrb[0].mxu0
    %v1518 = vpop.f32.mrb[0].mxu0
    %v1519 = vadd.f32 0.0, %v1518
    %v1520 = vpop.f32.mrb[0].mxu0
    %1521 = vmatprep.mubr.bf16.mxu0 0
    %1522 = vmatmul.mubr.bf16.gmra.mrb[0].mxu0 %v1387
    %v1523 = vpop.f32.mrb[0].mxu0
    %v1524 = vadd.f32 0.0, %v1523
    %v1525 = vpop.f32.mrb[0].mxu0
    %v1526 = vpop.f32.mrb[0].mxu0
    %v1527 = vadd.f32 0.0, %v1526
    %v1528 = vpop.f32.mrb[0].mxu0
    %1529 = vmatprep.mubr.bf16.mxu0 0
    %1530 = vmatmul.mubr.bf16.gmra.mrb[0].mxu0 %v1388
    %v1531 = vpop.f32.mrb[0].mxu0
    %v1532 = vadd.f32 0.0, %v1531
    %v1533 = vpop.f32.mrb[0].mxu0
    %v1534 = vpop.f32.mrb[0].mxu0
    %v1535 = vadd.f32 0.0, %v1534
    %v1536 = vpop.f32.mrb[0].mxu0
    %1537 = vmatprep.mubr.bf16.mxu0 0
    %1538 = vmatmul.mubr.bf16.gmra.mrb[0].mxu0 %v1389
    %v1539 = vpop.f32.mrb[0].mxu0
    %v1540 = vadd.f32 0.0, %v1539
    %v1541 = vpop.f32.mrb[0].mxu0
    %v1542 = vpop.f32.mrb[0].mxu0
    %v1543 = vadd.f32 0.0, %v1542
    %v1544 = vpop.f32.mrb[0].mxu0
    %1545 = vmatprep.mubr.bf16.mxu0 0
    %1546 = vmatmul.mubr.bf16.gmra.mrb[0].mxu0 %v1390
    %v1547 = vpop.f32.mrb[0].mxu0
    %v1548 = vadd.f32 0.0, %v1547
    %v1549 = vpop.f32.mrb[0].mxu0
    %v1550 = vpop.f32.mrb[0].mxu0
    %v1551 = vadd.f32 0.0, %v1550
    %v1552 = vpop.f32.mrb[0].mxu0
    %1553 = vdwg.mxu0
    %v1554 = vpack.c.bf16 %v1495, %v1492
    %v1555 = vpack.c.bf16 %v1503, %v1500
    %v1556 = vpack.c.bf16 %v1511, %v1508
    %v1557 = vpack.c.bf16 %v1519, %v1516
    %v1558 = vpack.c.bf16 %v1527, %v1524
    %v1559 = vpack.c.bf16 %v1535, %v1532
    %v1560 = vpack.c.bf16 %v1543, %v1540
    %v1561 = vpack.c.bf16 %v1551, %v1548
    %v1563 = vpack.i.b16 %v1408, %v1408
    %v1565 = vlaneseq
    %v1566 = vshrl.u32 %v1565, 7
    %v1567 = vsub.s32 0, %v1566
    %v1568 = vrot.slane %v1563, %v1567
    %v1569 = vadd.bf16 %v1554, %v1568
    %v1570 = vadd.bf16 %v1555, %v1568
    %v1571 = vadd.bf16 %v1556, %v1568
    %v1572 = vadd.bf16 %v1557, %v1568
    %v1573 = vadd.bf16 %v1558, %v1568
    %v1574 = vadd.bf16 %v1559, %v1568
    %v1575 = vadd.bf16 %v1560, %v1568
    %v1576 = vadd.bf16 %v1561, %v1568
    %v1577 = vmax.bf16 %v1569, 0
    %v1578 = vmax.bf16 %v1570, 0
    %v1579 = vmax.bf16 %v1571, 0
    %v1580 = vmax.bf16 %v1572, 0
    %v1581 = vmax.bf16 %v1573, 0
    %v1582 = vmax.bf16 %v1574, 0
    %v1583 = vmax.bf16 %v1575, 0
    %v1584 = vmax.bf16 %v1576, 0
    %s1585 = scalar_lea.vmem [#allocation13], 64
    %v1586 = vld [vmem:[%s1585] sm:$0xf]
    %v1587 = vld [vmem:[%s1585 + $0x4] sm:$0xf]
    %v1588 = vld [vmem:[%s1585 + $0x8] sm:$0xf]
    %v1589 = vld [vmem:[%s1585 + $0xc] sm:$0xf]
    %v1590 = vld [vmem:[%s1585 + $0x10] sm:$0xf]
    %v1591 = vld [vmem:[%s1585 + $0x14] sm:$0xf]
    %v1592 = vld [vmem:[%s1585 + $0x18] sm:$0xf]
    %v1593 = vld [vmem:[%s1585 + $0x1c] sm:$0xf]
    %v1594 = vld [vmem:[%s1585 + $0x20] sm:$0xf]
    %v1595 = vld [vmem:[%s1585 + $0x24] sm:$0xf]
    %v1596 = vld [vmem:[%s1585 + $0x28] sm:$0xf]
    %v1597 = vld [vmem:[%s1585 + $0x2c] sm:$0xf]
    %v1598 = vld [vmem:[%s1585 + $0x30] sm:$0xf]
    %v1599 = vld [vmem:[%s1585 + $0x34] sm:$0xf]
    %v1600 = vld [vmem:[%s1585 + $0x38] sm:$0xf]
    %v1601 = vld [vmem:[%s1585 + $0x3c] sm:$0xf]
    %s1602 = scalar_lea.vmem %s12, 1
    %v1603 = vld [vmem:[%s1602] sm:$0x1]
    %v1604 = vpack.c.bf16 %v1603, %v1603
    %v1621 = vunpack.c.l.b16 %v1586
    %v1622 = vunpack.c.l.b16 %v1587
    %v1623 = vunpack.c.l.b16 %v1588
    %v1624 = vunpack.c.l.b16 %v1589
    %v1625 = vunpack.c.l.b16 %v1590
    %v1626 = vunpack.c.l.b16 %v1591
    %v1627 = vunpack.c.l.b16 %v1592
    %v1628 = vunpack.c.l.b16 %v1593
    %v1629 = vunpack.c.l.b16 %v1594
    %v1630 = vunpack.c.l.b16 %v1595
    %v1631 = vunpack.c.l.b16 %v1596
    %v1632 = vunpack.c.l.b16 %v1597
    %v1633 = vunpack.c.l.b16 %v1598
    %v1634 = vunpack.c.l.b16 %v1599
    %v1635 = vunpack.c.l.b16 %v1600
    %v1636 = vunpack.c.l.b16 %v1601
    %v1637 = vpack.c.b16 %v1622, %v1621
    %v1638 = vpack.c.b16 %v1624, %v1623
    %v1639 = vpack.c.b16 %v1626, %v1625
    %v1640 = vpack.c.b16 %v1628, %v1627
    %v1641 = vpack.c.b16 %v1630, %v1629
    %v1642 = vpack.c.b16 %v1632, %v1631
    %v1643 = vpack.c.b16 %v1634, %v1633
    %v1644 = vpack.c.b16 %v1636, %v1635
    %1653 = vmatprep.subr.bf16.mxu0 0
    %1654 = vmatpush1.bf16.msra.mxu0 %v1637
    %1655 = vmatprep.subr.bf16.mxu0 0
    %1656 = vmatpush1.bf16.msra.mxu0 %v1638
    %1657 = vmatprep.subr.bf16.mxu0 0
    %1658 = vmatpush1.bf16.msra.mxu0 %v1639
    %1659 = vmatprep.subr.bf16.mxu0 0
    %1660 = vmatpush1.bf16.msra.mxu0 %v1640
    %1661 = vmatprep.subr.bf16.mxu0 0
    %1662 = vmatpush1.bf16.msra.mxu0 %v1641
    %1663 = vmatprep.subr.bf16.mxu0 0
    %1664 = vmatpush1.bf16.msra.mxu0 %v1642
    %1665 = vmatprep.subr.bf16.mxu0 0
    %1666 = vmatpush1.bf16.msra.mxu0 %v1643
    %1667 = vmatprep.subr.bf16.mxu0 0
    %1668 = vmatpush1.bf16.msra.mxu0 %v1644
    %1669 = vmatprep.subr.bf16.mxu0 0
    %1670 = vmatpush1.bf16.msra.mxu0 0
    %1671 = vmatprep.subr.bf16.mxu0 0
    %1672 = vmatpush1.bf16.msra.mxu0 0
    %1673 = vmatprep.subr.bf16.mxu0 0
    %1674 = vmatpush1.bf16.msra.mxu0 0
    %1675 = vmatprep.subr.bf16.mxu0 0
    %1676 = vmatpush1.bf16.msra.mxu0 0
    %1677 = vmatprep.subr.bf16.mxu0 0
    %1678 = vmatpush1.bf16.msra.mxu0 0
    %1679 = vmatprep.subr.bf16.mxu0 0
    %1680 = vmatpush1.bf16.msra.mxu0 0
    %1681 = vmatprep.subr.bf16.mxu0 0
    %1682 = vmatpush1.bf16.msra.mxu0 0
    %1683 = vmatprep.subr.bf16.mxu0 0
    %1684 = vmatpush1.bf16.msra.mxu0 0
    %1685 = vmatprep.mubr.bf16.mxu0 0
    %1686 = vmatmul.mubr.bf16.gmra.mrb[0].mxu0 %v1577
    %v1687 = vpop.f32.mrb[0].mxu0
    %v1688 = vadd.f32 0.0, %v1687
    %v1689 = vpop.f32.mrb[0].mxu0
    %v1690 = vpop.f32.mrb[0].mxu0
    %v1691 = vadd.f32 0.0, %v1690
    %v1692 = vpop.f32.mrb[0].mxu0
    %1693 = vmatprep.mubr.bf16.mxu0 0
    %1694 = vmatmul.mubr.bf16.gmra.mrb[0].mxu0 %v1578
    %v1695 = vpop.f32.mrb[0].mxu0
    %v1696 = vadd.f32 0.0, %v1695
    %v1697 = vpop.f32.mrb[0].mxu0
    %v1698 = vpop.f32.mrb[0].mxu0
    %v1699 = vadd.f32 0.0, %v1698
    %v1700 = vpop.f32.mrb[0].mxu0
    %1701 = vmatprep.mubr.bf16.mxu0 0
    %1702 = vmatmul.mubr.bf16.gmra.mrb[0].mxu0 %v1579
    %v1703 = vpop.f32.mrb[0].mxu0
    %v1704 = vadd.f32 0.0, %v1703
    %v1705 = vpop.f32.mrb[0].mxu0
    %v1706 = vpop.f32.mrb[0].mxu0
    %v1707 = vadd.f32 0.0, %v1706
    %v1708 = vpop.f32.mrb[0].mxu0
    %1709 = vmatprep.mubr.bf16.mxu0 0
    %1710 = vmatmul.mubr.bf16.gmra.mrb[0].mxu0 %v1580
    %v1711 = vpop.f32.mrb[0].mxu0
    %v1712 = vadd.f32 0.0, %v1711
    %v1713 = vpop.f32.mrb[0].mxu0
    %v1714 = vpop.f32.mrb[0].mxu0
    %v1715 = vadd.f32 0.0, %v1714
    %v1716 = vpop.f32.mrb[0].mxu0
    %1717 = vmatprep.mubr.bf16.mxu0 0
    %1718 = vmatmul.mubr.bf16.gmra.mrb[0].mxu0 %v1581
    %v1719 = vpop.f32.mrb[0].mxu0
    %v1720 = vadd.f32 0.0, %v1719
    %v1721 = vpop.f32.mrb[0].mxu0
    %v1722 = vpop.f32.mrb[0].mxu0
    %v1723 = vadd.f32 0.0, %v1722
    %v1724 = vpop.f32.mrb[0].mxu0
    %1725 = vmatprep.mubr.bf16.mxu0 0
    %1726 = vmatmul.mubr.bf16.gmra.mrb[0].mxu0 %v1582
    %v1727 = vpop.f32.mrb[0].mxu0
    %v1728 = vadd.f32 0.0, %v1727
    %v1729 = vpop.f32.mrb[0].mxu0
    %v1730 = vpop.f32.mrb[0].mxu0
    %v1731 = vadd.f32 0.0, %v1730
    %v1732 = vpop.f32.mrb[0].mxu0
    %1733 = vmatprep.mubr.bf16.mxu0 0
    %1734 = vmatmul.mubr.bf16.gmra.mrb[0].mxu0 %v1583
    %v1735 = vpop.f32.mrb[0].mxu0
    %v1736 = vadd.f32 0.0, %v1735
    %v1737 = vpop.f32.mrb[0].mxu0
    %v1738 = vpop.f32.mrb[0].mxu0
    %v1739 = vadd.f32 0.0, %v1738
    %v1740 = vpop.f32.mrb[0].mxu0
    %1741 = vmatprep.mubr.bf16.mxu0 0
    %1742 = vmatmul.mubr.bf16.gmra.mrb[0].mxu0 %v1584
    %v1743 = vpop.f32.mrb[0].mxu0
    %v1744 = vadd.f32 0.0, %v1743
    %v1745 = vpop.f32.mrb[0].mxu0
    %v1746 = vpop.f32.mrb[0].mxu0
    %v1747 = vadd.f32 0.0, %v1746
    %v1748 = vpop.f32.mrb[0].mxu0
    %1749 = vdwg.mxu0
    %v1750 = vpack.c.bf16 %v1691, %v1688
    %v1751 = vpack.c.bf16 %v1699, %v1696
    %v1752 = vpack.c.bf16 %v1707, %v1704
    %v1753 = vpack.c.bf16 %v1715, %v1712
    %v1754 = vpack.c.bf16 %v1723, %v1720
    %v1755 = vpack.c.bf16 %v1731, %v1728
    %v1756 = vpack.c.bf16 %v1739, %v1736
    %v1757 = vpack.c.bf16 %v1747, %v1744
    %v1759 = vpack.i.b16 %v1604, %v1604
    %v1761 = vlaneseq
    %v1762 = vshrl.u32 %v1761, 7
    %v1763 = vsub.s32 0, %v1762
    %v1764 = vrot.slane %v1759, %v1763
    %v1765 = vadd.bf16 %v1750, %v1764
    %v1766 = vadd.bf16 %v1751, %v1764
    %v1767 = vadd.bf16 %v1752, %v1764
    %v1768 = vadd.bf16 %v1753, %v1764
    %v1769 = vadd.bf16 %v1754, %v1764
    %v1770 = vadd.bf16 %v1755, %v1764
    %v1771 = vadd.bf16 %v1756, %v1764
    %v1772 = vadd.bf16 %v1757, %v1764
    %v1773 = vmax.bf16 %v1765, 0
    %v1774 = vmax.bf16 %v1766, 0
    %v1775 = vmax.bf16 %v1767, 0
    %v1776 = vmax.bf16 %v1768, 0
    %v1777 = vmax.bf16 %v1769, 0
    %v1778 = vmax.bf16 %v1770, 0
    %v1779 = vmax.bf16 %v1771, 0
    %v1780 = vmax.bf16 %v1772, 0
    %v1781 = vld [vmem:[#allocation14] sm:$0xf]
    %v1782 = vld [vmem:[#allocation14 + $0x4] sm:$0xf]
    %v1783 = vld [vmem:[#allocation14 + $0x8] sm:$0xf]
    %v1784 = vld [vmem:[#allocation14 + $0xc] sm:$0xf]
    %v1785 = vld [vmem:[#allocation14 + $0x10] sm:$0xf]
    %v1786 = vld [vmem:[#allocation14 + $0x14] sm:$0xf]
    %v1787 = vld [vmem:[#allocation14 + $0x18] sm:$0xf]
    %v1788 = vld [vmem:[#allocation14 + $0x1c] sm:$0xf]
    %v1789 = vld [vmem:[#allocation14 + $0x20] sm:$0xf]
    %v1790 = vld [vmem:[#allocation14 + $0x24] sm:$0xf]
    %v1791 = vld [vmem:[#allocation14 + $0x28] sm:$0xf]
    %v1792 = vld [vmem:[#allocation14 + $0x2c] sm:$0xf]
    %v1793 = vld [vmem:[#allocation14 + $0x30] sm:$0xf]
    %v1794 = vld [vmem:[#allocation14 + $0x34] sm:$0xf]
    %v1795 = vld [vmem:[#allocation14 + $0x38] sm:$0xf]
    %v1796 = vld [vmem:[#allocation14 + $0x3c] sm:$0xf]
    %v1797 = vld [vmem:[%s14] sm:$0x1]
    %v1799 = vlaneseq
    %v1800 = vshrl.u32 %v1799, 7
    %v1801 = vsub.s32 0, %v1800
    %v1802 = vrot.slane %v1797, %v1801
    %v1820 = vunpack.c.l.b16 %v1781
    %v1821 = vunpack.c.l.b16 %v1782
    %v1822 = vunpack.c.l.b16 %v1783
    %v1823 = vunpack.c.l.b16 %v1784
    %v1824 = vunpack.c.l.b16 %v1785
    %v1825 = vunpack.c.l.b16 %v1786
    %v1826 = vunpack.c.l.b16 %v1787
    %v1827 = vunpack.c.l.b16 %v1788
    %v1828 = vunpack.c.l.b16 %v1789
    %v1829 = vunpack.c.l.b16 %v1790
    %v1830 = vunpack.c.l.b16 %v1791
    %v1831 = vunpack.c.l.b16 %v1792
    %v1832 = vunpack.c.l.b16 %v1793
    %v1833 = vunpack.c.l.b16 %v1794
    %v1834 = vunpack.c.l.b16 %v1795
    %v1835 = vunpack.c.l.b16 %v1796
    %v1836 = vpack.c.b16 %v1821, %v1820
    %v1837 = vpack.c.b16 %v1823, %v1822
    %v1838 = vpack.c.b16 %v1825, %v1824
    %v1839 = vpack.c.b16 %v1827, %v1826
    %v1840 = vpack.c.b16 %v1829, %v1828
    %v1841 = vpack.c.b16 %v1831, %v1830
    %v1842 = vpack.c.b16 %v1833, %v1832
    %v1843 = vpack.c.b16 %v1835, %v1834
    %1852 = vmatprep.subr.bf16.mxu0 0
    %1853 = vmatpush1.bf16.msra.mxu0 %v1836
    %1854 = vmatprep.subr.bf16.mxu0 0
    %1855 = vmatpush1.bf16.msra.mxu0 %v1837
    %1856 = vmatprep.subr.bf16.mxu0 0
    %1857 = vmatpush1.bf16.msra.mxu0 %v1838
    %1858 = vmatprep.subr.bf16.mxu0 0
    %1859 = vmatpush1.bf16.msra.mxu0 %v1839
    %1860 = vmatprep.subr.bf16.mxu0 0
    %1861 = vmatpush1.bf16.msra.mxu0 %v1840
    %1862 = vmatprep.subr.bf16.mxu0 0
    %1863 = vmatpush1.bf16.msra.mxu0 %v1841
    %1864 = vmatprep.subr.bf16.mxu0 0
    %1865 = vmatpush1.bf16.msra.mxu0 %v1842
    %1866 = vmatprep.subr.bf16.mxu0 0
    %1867 = vmatpush1.bf16.msra.mxu0 %v1843
    %1868 = vmatprep.subr.bf16.mxu0 0
    %1869 = vmatpush1.bf16.msra.mxu0 0
    %1870 = vmatprep.subr.bf16.mxu0 0
    %1871 = vmatpush1.bf16.msra.mxu0 0
    %1872 = vmatprep.subr.bf16.mxu0 0
    %1873 = vmatpush1.bf16.msra.mxu0 0
    %1874 = vmatprep.subr.bf16.mxu0 0
    %1875 = vmatpush1.bf16.msra.mxu0 0
    %1876 = vmatprep.subr.bf16.mxu0 0
    %1877 = vmatpush1.bf16.msra.mxu0 0
    %1878 = vmatprep.subr.bf16.mxu0 0
    %1879 = vmatpush1.bf16.msra.mxu0 0
    %1880 = vmatprep.subr.bf16.mxu0 0
    %1881 = vmatpush1.bf16.msra.mxu0 0
    %1882 = vmatprep.subr.bf16.mxu0 0
    %1883 = vmatpush1.bf16.msra.mxu0 0
    %1884 = vmatprep.mubr.bf16.mxu0 0
    %1885 = vmatmul.mubr.bf16.gmra.mrb[0].mxu0 %v1773
    %v1886 = vpop.f32.mrb[0].mxu0
    %v1887 = vadd.f32 %v1802, %v1886
    %v1888 = vpop.f32.mrb[0].mxu0
    %v1889 = vpop.f32.mrb[0].mxu0
    %v1890 = vadd.f32 %v1802, %v1889
    %v1891 = vpop.f32.mrb[0].mxu0
    %1892 = vmatprep.mubr.bf16.mxu0 0
    %1893 = vmatmul.mubr.bf16.gmra.mrb[0].mxu0 %v1774
    %v1894 = vpop.f32.mrb[0].mxu0
    %v1895 = vadd.f32 %v1802, %v1894
    %v1896 = vpop.f32.mrb[0].mxu0
    %v1897 = vpop.f32.mrb[0].mxu0
    %v1898 = vadd.f32 %v1802, %v1897
    %v1899 = vpop.f32.mrb[0].mxu0
    %1900 = vmatprep.mubr.bf16.mxu0 0
    %1901 = vmatmul.mubr.bf16.gmra.mrb[0].mxu0 %v1775
    %v1902 = vpop.f32.mrb[0].mxu0
    %v1903 = vadd.f32 %v1802, %v1902
    %v1904 = vpop.f32.mrb[0].mxu0
    %v1905 = vpop.f32.mrb[0].mxu0
    %v1906 = vadd.f32 %v1802, %v1905
    %v1907 = vpop.f32.mrb[0].mxu0
    %1908 = vmatprep.mubr.bf16.mxu0 0
    %1909 = vmatmul.mubr.bf16.gmra.mrb[0].mxu0 %v1776
    %v1910 = vpop.f32.mrb[0].mxu0
    %v1911 = vadd.f32 %v1802, %v1910
    %v1912 = vpop.f32.mrb[0].mxu0
    %v1913 = vpop.f32.mrb[0].mxu0
    %v1914 = vadd.f32 %v1802, %v1913
    %v1915 = vpop.f32.mrb[0].mxu0
    %1916 = vmatprep.mubr.bf16.mxu0 0
    %1917 = vmatmul.mubr.bf16.gmra.mrb[0].mxu0 %v1777
    %v1918 = vpop.f32.mrb[0].mxu0
    %v1919 = vadd.f32 %v1802, %v1918
    %v1920 = vpop.f32.mrb[0].mxu0
    %v1921 = vpop.f32.mrb[0].mxu0
    %v1922 = vadd.f32 %v1802, %v1921
    %v1923 = vpop.f32.mrb[0].mxu0
    %1924 = vmatprep.mubr.bf16.mxu0 0
    %1925 = vmatmul.mubr.bf16.gmra.mrb[0].mxu0 %v1778
    %v1926 = vpop.f32.mrb[0].mxu0
    %v1927 = vadd.f32 %v1802, %v1926
    %v1928 = vpop.f32.mrb[0].mxu0
    %v1929 = vpop.f32.mrb[0].mxu0
    %v1930 = vadd.f32 %v1802, %v1929
    %v1931 = vpop.f32.mrb[0].mxu0
    %1932 = vmatprep.mubr.bf16.mxu0 0
    %1933 = vmatmul.mubr.bf16.gmra.mrb[0].mxu0 %v1779
    %v1934 = vpop.f32.mrb[0].mxu0
    %v1935 = vadd.f32 %v1802, %v1934
    %v1936 = vpop.f32.mrb[0].mxu0
    %v1937 = vpop.f32.mrb[0].mxu0
    %v1938 = vadd.f32 %v1802, %v1937
    %v1939 = vpop.f32.mrb[0].mxu0
    %1940 = vmatprep.mubr.bf16.mxu0 0
    %1941 = vmatmul.mubr.bf16.gmra.mrb[0].mxu0 %v1780
    %v1942 = vpop.f32.mrb[0].mxu0
    %v1943 = vadd.f32 %v1802, %v1942
    %v1944 = vpop.f32.mrb[0].mxu0
    %v1945 = vpop.f32.mrb[0].mxu0
    %v1946 = vadd.f32 %v1802, %v1945
    %v1947 = vpop.f32.mrb[0].mxu0
    %1948 = vdwg.mxu0
    %v1949 = vpack.c.bf16 %v1890, %v1887
    %v1950 = vpack.c.bf16 %v1898, %v1895
    %v1951 = vpack.c.bf16 %v1906, %v1903
    %v1952 = vpack.c.bf16 %v1914, %v1911
    %v1953 = vpack.c.bf16 %v1922, %v1919
    %v1954 = vpack.c.bf16 %v1930, %v1927
    %v1955 = vpack.c.bf16 %v1938, %v1935
    %v1956 = vpack.c.bf16 %v1946, %v1943
    %v1965 = vunpack.c.l.b16 %v1949
    %v1966 = vunpack.c.h.b16 %v1949
    %v1967 = vunpack.c.l.b16 %v1950
    %v1968 = vunpack.c.h.b16 %v1950
    %v1969 = vunpack.c.l.b16 %v1951
    %v1970 = vunpack.c.h.b16 %v1951
    %v1971 = vunpack.c.l.b16 %v1952
    %v1972 = vunpack.c.h.b16 %v1952
    %v1973 = vunpack.c.l.b16 %v1953
    %v1974 = vunpack.c.h.b16 %v1953
    %v1975 = vunpack.c.l.b16 %v1954
    %v1976 = vunpack.c.h.b16 %v1954
    %v1977 = vunpack.c.l.b16 %v1955
    %v1978 = vunpack.c.h.b16 %v1955
    %v1979 = vunpack.c.l.b16 %v1956
    %v1980 = vunpack.c.h.b16 %v1956
    %v1981 = vpack.c.b16 %v1965, %v1965
    %v1982 = vpack.c.b16 %v1966, %v1966
    %v1983 = vpack.c.b16 %v1967, %v1967
    %v1984 = vpack.c.b16 %v1968, %v1968
    %v1985 = vpack.c.b16 %v1969, %v1969
    %v1986 = vpack.c.b16 %v1970, %v1970
    %v1987 = vpack.c.b16 %v1971, %v1971
    %v1988 = vpack.c.b16 %v1972, %v1972
    %v1989 = vpack.c.b16 %v1973, %v1973
    %v1990 = vpack.c.b16 %v1974, %v1974
    %v1991 = vpack.c.b16 %v1975, %v1975
    %v1992 = vpack.c.b16 %v1976, %v1976
    %v1993 = vpack.c.b16 %v1977, %v1977
    %v1994 = vpack.c.b16 %v1978, %v1978
    %v1995 = vpack.c.b16 %v1979, %v1979
    %v1996 = vpack.c.b16 %v1980, %v1980
    %2013 = vst [vmem:[#allocation16] sm:$0xf] %v1981
    %2014 = vst [vmem:[#allocation16 + $0x4] sm:$0xf] %v1982
    %2015 = vst [vmem:[#allocation16 + $0x8] sm:$0xf] %v1983
    %2016 = vst [vmem:[#allocation16 + $0xc] sm:$0xf] %v1984
    %2017 = vst [vmem:[#allocation16 + $0x10] sm:$0xf] %v1985
    %2018 = vst [vmem:[#allocation16 + $0x14] sm:$0xf] %v1986
    %2019 = vst [vmem:[#allocation16 + $0x18] sm:$0xf] %v1987
    %2020 = vst [vmem:[#allocation16 + $0x1c] sm:$0xf] %v1988
    %2021 = vst [vmem:[#allocation16 + $0x20] sm:$0xf] %v1989
    %2022 = vst [vmem:[#allocation16 + $0x24] sm:$0xf] %v1990
    %2023 = vst [vmem:[#allocation16 + $0x28] sm:$0xf] %v1991
    %2024 = vst [vmem:[#allocation16 + $0x2c] sm:$0xf] %v1992
    %2025 = vst [vmem:[#allocation16 + $0x30] sm:$0xf] %v1993
    %2026 = vst [vmem:[#allocation16 + $0x34] sm:$0xf] %v1994
    %2027 = vst [vmem:[#allocation16 + $0x38] sm:$0xf] %v1995
    %2028 = vst [vmem:[#allocation16 + $0x3c] sm:$0xf] %v1996
    // Predicated region
    $region94: #{tpu_custom_call.1} parent=1 // pred_check
      _
    $region95: #{tpu_custom_call.1} parent=1 // pred_check_branch
      %2030 = sbr.rel (0) target = $region97
    $region96: #{tpu_custom_call.1} parent=1 // pred_region
      %s2032 = ssub.s32 1024, 1024
      %2033 = vsyncadd [#allocation4], %s2032
      %s2034 = sshll.u32 [#allocation16], 4
      %s2035 = int_to_ptr.vmem [resolvable:$true] %s2034
      %2040 = dma.vmem_to_hbm [thread:$0]  %s2035, 1024, %s15, [#allocation4], 64, 64, 4
    $region97: #{tpu_custom_call.1} parent=1 // pred_fallthru
      _
    // Predicated region
    $region98: #{tpu_custom_call.1} parent=1 // pred_check
      _
    $region99: #{tpu_custom_call.1} parent=1 // pred_check_branch
      %2042 = sbr.rel (0) target = $region101
    $region100: #{tpu_custom_call.1} parent=1 // pred_region
      %2043 = dma.done [#allocation4], 1024
    $region101: #{tpu_custom_call.1} parent=1 // pred_fallthru
      _
    %2044 = vsyncpa [#allocation3], 1
    %2045 = vsyncpa [#allocation6], 1
    %2046 = vsyncpa [#allocation9], 1
    %2047 = vsyncpa [#allocation12], 1
    %2048 = vsyncpa [#allocation15], 1
    %2049 = vsyncpa [#allocation4], 1

// kernel: tpu_custom_call.1
$region0: #{tpu_custom_call.1}
  #allocation0 [shape = 'u32[]', space=smem, size = 0x4, offset = 0x4, fixed_abs, tag = 'smem constant byte address 0x4 - core index']
  #allocation1 [shape = 'u32[144,128]{1,0:T(1,128)}', space=vmem, size = 0x12000, scoped, tag = 'internal scratch']
  %s0 = inlined_call_operand.hbm [shape: bf16[128,128], index: 0, kind: input, shape index: {}]
  %s1 = inlined_call_operand.hbm [shape: bf16[128,128], index: 1, kind: input, shape index: {}]
  %s2 = inlined_call_operand.vmem [shape: f32[1,128], index: 2, kind: input, shape index: {}]
  %s3 = inlined_call_operand.hbm [shape: bf16[128,128], index: 3, kind: input, shape index: {}]
  %s4 = inlined_call_operand.vmem [shape: f32[1,128], index: 4, kind: input, shape index: {}]
  %s5 = inlined_call_operand.hbm [shape: bf16[128,128], index: 5, kind: input, shape index: {}]
  %s6 = inlined_call_operand.vmem [shape: f32[1,128], index: 6, kind: input, shape index: {}]
  %s7 = inlined_call_operand.hbm [shape: bf16[2,128,128], index: 7, kind: input, shape index: {}]
  %s8 = inlined_call_operand.vmem [shape: f32[2,1,128], index: 8, kind: input, shape index: {}]
  %s9 = inlined_call_operand.hbm [shape: bf16[128,128], index: 9, kind: input, shape index: {}]
  %s10 = inlined_call_operand.vmem [shape: f32[1,128], index: 10, kind: input, shape index: {}]
  %s11 = inlined_call_operand.hbm [shape: bf16[2,128,128], index: 11, kind: input, shape index: {}]
  %s12 = inlined_call_operand.vmem [shape: f32[2,1,128], index: 12, kind: input, shape index: {}]
  %s13 = inlined_call_operand.hbm [shape: bf16[128,128], index: 13, kind: input, shape index: {}]
  %s14 = inlined_call_operand.vmem [shape: f32[1,128], index: 14, kind: input, shape index: {}]
  %s15 = inlined_call_operand.hbm [shape: bf16[128,128], index: 15, kind: output, shape index: {}]
  %s16 = sld [smem:[#allocation0]]
  $region102: #{tpu_custom_call.1} parent=0
    _
  %s18 = ssub.s32 1, %s16
  %s19 = scalar_select 0, %s18, %s16
  $region1: #{tpu_custom_call.1} parent=0
    #allocation2 [shape = 'u8[32768]{0}', space=vmem, size = 0x8000, scoped, tag = 'input window, operand 0, single buffered']
    #allocation3 [shape = 's32[1]{0}', space=sflag, size = 0x4, scoped, tag = 'scoped memory for tpu_custom_call.1']
    #allocation4 [shape = 's32[1]{0}', space=sflag, size = 0x4, scoped, tag = 'scoped memory for tpu_custom_call.1']
    #allocation5 [shape = 'u8[32768]{0}', space=vmem, size = 0x8000, scoped, tag = 'input window, operand 1, single buffered']
    #allocation6 [shape = 's32[1]{0}', space=sflag, size = 0x4, scoped, tag = 'scoped memory for tpu_custom_call.1']
    #allocation7 [shape = 'u8[32768]{0}', space=vmem, size = 0x8000, scoped, tag = 'input window, operand 3, single buffered']
    #allocation8 [shape = 'u8[32768]{0}', space=vmem, size = 0x8000, scoped, tag = 'input window, operand 5, single buffered']
    #allocation9 [shape = 's32[1]{0}', space=sflag, size = 0x4, scoped, tag = 'scoped memory for tpu_custom_call.1']
    #allocation10 [shape = 'u8[65536]{0}', space=vmem, size = 0x10000, scoped, tag = 'input window, operand 7, single buffered']
    #allocation11 [shape = 'u8[32768]{0}', space=vmem, size = 0x8000, scoped, tag = 'input window, operand 9, single buffered']
    #allocation12 [shape = 's32[1]{0}', space=sflag, size = 0x4, scoped, tag = 'scoped memory for tpu_custom_call.1']
    #allocation13 [shape = 'u8[65536]{0}', space=vmem, size = 0x10000, scoped, tag = 'input window, operand 11, single buffered']
    #allocation14 [shape = 'u8[32768]{0}', space=vmem, size = 0x8000, scoped, tag = 'input window, operand 13, single buffered']
    #allocation15 [shape = 's32[1]{0}', space=sflag, size = 0x4, scoped, tag = 'scoped memory for tpu_custom_call.1']
    #allocation16 [shape = 'u8[32768]{0}', space=vmem, size = 0x8000, scoped, tag = 'output window, operand 0, single buffered']
    %20 = vsyncpa [#allocation3], 0
    %21 = vsyncpa [#allocation6], 0
    %22 = vsyncpa [#allocation9], 0
    %23 = vsyncpa [#allocation12], 0
    %24 = vsyncpa [#allocation15], 0
    %25 = vsyncpa [#allocation4], 0
    // Predicated region
    $region2: #{tpu_custom_call.1} parent=1 // pred_check
      _
    $region3: #{tpu_custom_call.1} parent=1 // pred_check_branch
      %27 = sbr.rel (0) target = $region5
    $region4: #{tpu_custom_call.1} parent=1 // pred_region
      %s29 = ssub.s32 1024, 1024
      %30 = vsyncadd [#allocation3], %s29
      %s31 = sshll.u32 [#allocation2], 4
      %s32 = int_to_ptr.vmem [resolvable:$true] %s31
      %37 = dma.hbm_to_vmem [thread:$0]  %s0, 1024, %s32, [#allocation3], 64, 64, 4
    $region5: #{tpu_custom_call.1} parent=1 // pred_fallthru
      _
    // Predicated region
    $region6: #{tpu_custom_call.1} parent=1 // pred_check
      _
    $region7: #{tpu_custom_call.1} parent=1 // pred_check_branch
      %39 = sbr.rel (0) target = $region9
    $region8: #{tpu_custom_call.1} parent=1 // pred_region
      %s41 = ssub.s32 1024, 1024
      %42 = vsyncadd [#allocation6], %s41
      %s43 = sshll.u32 [#allocation5], 4
      %s44 = int_to_ptr.vmem [resolvable:$true] %s43
      %49 = dma.hbm_to_vmem [thread:$0]  %s1, 1024, %s44, [#allocation6], 64, 64, 4
    $region9: #{tpu_custom_call.1} parent=1 // pred_fallthru
      _
    // Predicated region
    $region10: #{tpu_custom_call.1} parent=1 // pred_check
      _
    $region11: #{tpu_custom_call.1} parent=1 // pred_check_branch
      %51 = sbr.rel (0) target = $region13
    $region12: #{tpu_custom_call.1} parent=1 // pred_region
      _
    $region13: #{tpu_custom_call.1} parent=1 // pred_fallthru
      _
    // Predicated region
    $region14: #{tpu_custom_call.1} parent=1 // pred_check
      _
    $region15: #{tpu_custom_call.1} parent=1 // pred_check_branch
      %53 = sbr.rel (0) target = $region17
    $region16: #{tpu_custom_call.1} parent=1 // pred_region
      %s55 = ssub.s32 1024, 1024
      %56 = vsyncadd [#allocation6], %s55
      %s57 = sshll.u32 [#allocation7], 4
      %s58 = int_to_ptr.vmem [resolvable:$true] %s57
      %63 = dma.hbm_to_vmem [thread:$0]  %s3, 1024, %s58, [#allocation6], 64, 64, 4
    $region17: #{tpu_custom_call.1} parent=1 // pred_fallthru
      _
    // Predicated region
    $region18: #{tpu_custom_call.1} parent=1 // pred_check
      _
    $region19: #{tpu_custom_call.1} parent=1 // pred_check_branch
      %65 = sbr.rel (0) target = $region21
    $region20: #{tpu_custom_call.1} parent=1 // pred_region
      _
    $region21: #{tpu_custom_call.1} parent=1 // pred_fallthru
      _
    // Predicated region
    $region22: #{tpu_custom_call.1} parent=1 // pred_check
      _
    $region23: #{tpu_custom_call.1} parent=1 // pred_check_branch
      %67 = sbr.rel (0) target = $region25
    $region24: #{tpu_custom_call.1} parent=1 // pred_region
      %s69 = ssub.s32 1024, 1024
      %70 = vsyncadd [#allocation9], %s69
      %s71 = sshll.u32 [#allocation8], 4
      %s72 = int_to_ptr.vmem [resolvable:$true] %s71
      %77 = dma.hbm_to_vmem [thread:$0]  %s5, 1024, %s72, [#allocation9], 64, 64, 4
    $region25: #{tpu_custom_call.1} parent=1 // pred_fallthru
      _
    // Predicated region
    $region26: #{tpu_custom_call.1} parent=1 // pred_check
      _
    $region27: #{tpu_custom_call.1} parent=1 // pred_check_branch
      %79 = sbr.rel (0) target = $region29
    $region28: #{tpu_custom_call.1} parent=1 // pred_region
      _
    $region29: #{tpu_custom_call.1} parent=1 // pred_fallthru
      _
    // Predicated region
    $region30: #{tpu_custom_call.1} parent=1 // pred_check
      _
    $region31: #{tpu_custom_call.1} parent=1 // pred_check_branch
      %81 = sbr.rel (0) target = $region33
    $region32: #{tpu_custom_call.1} parent=1 // pred_region
      %s83 = ssub.s32 2048, 2048
      %84 = vsyncadd [#allocation9], %s83
      %s85 = sshll.u32 [#allocation10], 4
      %s86 = int_to_ptr.vmem [resolvable:$true] %s85
      %91 = dma.hbm_to_vmem [thread:$0]  %s7, 2048, %s86, [#allocation9], 64, 64, 4
    $region33: #{tpu_custom_call.1} parent=1 // pred_fallthru
      _
    // Predicated region
    $region34: #{tpu_custom_call.1} parent=1 // pred_check
      _
    $region35: #{tpu_custom_call.1} parent=1 // pred_check_branch
      %93 = sbr.rel (0) target = $region37
    $region36: #{tpu_custom_call.1} parent=1 // pred_region
      _
    $region37: #{tpu_custom_call.1} parent=1 // pred_fallthru
      _
    // Predicated region
    $region38: #{tpu_custom_call.1} parent=1 // pred_check
      _
    $region39: #{tpu_custom_call.1} parent=1 // pred_check_branch
      %95 = sbr.rel (0) target = $region41
    $region40: #{tpu_custom_call.1} parent=1 // pred_region
      %s97 = ssub.s32 1024, 1024
      %98 = vsyncadd [#allocation12], %s97
      %s99 = sshll.u32 [#allocation11], 4
      %s100 = int_to_ptr.vmem [resolvable:$true] %s99
      %105 = dma.hbm_to_vmem [thread:$0]  %s9, 1024, %s100, [#allocation12], 64, 64, 4
    $region41: #{tpu_custom_call.1} parent=1 // pred_fallthru
      _
    // Predicated region
    $region42: #{tpu_custom_call.1} parent=1 // pred_check
      _
    $region43: #{tpu_custom_call.1} parent=1 // pred_check_branch
      %107 = sbr.rel (0) target = $region45
    $region44: #{tpu_custom_call.1} parent=1 // pred_region
      _
    $region45: #{tpu_custom_call.1} parent=1 // pred_fallthru
      _
    // Predicated region
    $region46: #{tpu_custom_call.1} parent=1 // pred_check
      _
    $region47: #{tpu_custom_call.1} parent=1 // pred_check_branch
      %109 = sbr.rel (0) target = $region49
    $region48: #{tpu_custom_call.1} parent=1 // pred_region
      %s111 = ssub.s32 2048, 2048
      %112 = vsyncadd [#allocation12], %s111
      %s113 = sshll.u32 [#allocation13], 4
      %s114 = int_to_ptr.vmem [resolvable:$true] %s113
      %119 = dma.hbm_to_vmem [thread:$0]  %s11, 2048, %s114, [#allocation12], 64, 64, 4
    $region49: #{tpu_custom_call.1} parent=1 // pred_fallthru
      _
    // Predicated region
    $region50: #{tpu_custom_call.1} parent=1 // pred_check
      _
    $region51: #{tpu_custom_call.1} parent=1 // pred_check_branch
      %121 = sbr.rel (0) target = $region53
    $region52: #{tpu_custom_call.1} parent=1 // pred_region
      _
    $region53: #{tpu_custom_call.1} parent=1 // pred_fallthru
      _
    // Predicated region
    $region54: #{tpu_custom_call.1} parent=1 // pred_check
      _
    $region55: #{tpu_custom_call.1} parent=1 // pred_check_branch
      %123 = sbr.rel (0) target = $region57
    $region56: #{tpu_custom_call.1} parent=1 // pred_region
      %s125 = ssub.s32 1024, 1024
      %126 = vsyncadd [#allocation15], %s125
      %s127 = sshll.u32 [#allocation14], 4
      %s128 = int_to_ptr.vmem [resolvable:$true] %s127
      %133 = dma.hbm_to_vmem [thread:$0]  %s13, 1024, %s128, [#allocation15], 64, 64, 4
    $region57: #{tpu_custom_call.1} parent=1 // pred_fallthru
      _
    // Predicated region
    $region58: #{tpu_custom_call.1} parent=1 // pred_check
      _
    $region59: #{tpu_custom_call.1} parent=1 // pred_check_branch
      %135 = sbr.rel (0) target = $region61
    $region60: #{tpu_custom_call.1} parent=1 // pred_region
      _
    $region61: #{tpu_custom_call.1} parent=1 // pred_fallthru
      _
    // Predicated region
    $region62: #{tpu_custom_call.1} parent=1 // pred_check
      _
    $region63: #{tpu_custom_call.1} parent=1 // pred_check_branch
      %137 = sbr.rel (0) target = $region65
    $region64: #{tpu_custom_call.1} parent=1 // pred_region
      %138 = dma.done [#allocation3], 1024
    $region65: #{tpu_custom_call.1} parent=1 // pred_fallthru
      _
    // Predicated region
    $region66: #{tpu_custom_call.1} parent=1 // pred_check
      _
    $region67: #{tpu_custom_call.1} parent=1 // pred_check_branch
      %140 = sbr.rel (0) target = $region69
    $region68: #{tpu_custom_call.1} parent=1 // pred_region
      %141 = dma.done [#allocation6], 1024
    $region69: #{tpu_custom_call.1} parent=1 // pred_fallthru
      _
    // Predicated region
    $region70: #{tpu_custom_call.1} parent=1 // pred_check
      _
    $region71: #{tpu_custom_call.1} parent=1 // pred_check_branch
      %143 = sbr.rel (0) target = $region73
    $region72: #{tpu_custom_call.1} parent=1 // pred_region
      %144 = dma.done [#allocation6], 1024
    $region73: #{tpu_custom_call.1} parent=1 // pred_fallthru
      _
    // Predicated region
    $region74: #{tpu_custom_call.1} parent=1 // pred_check
      _
    $region75: #{tpu_custom_call.1} parent=1 // pred_check_branch
      %146 = sbr.rel (0) target = $region77
    $region76: #{tpu_custom_call.1} parent=1 // pred_region
      %147 = dma.done [#allocation9], 1024
    $region77: #{tpu_custom_call.1} parent=1 // pred_fallthru
      _
    // Predicated region
    $region78: #{tpu_custom_call.1} parent=1 // pred_check
      _
    $region79: #{tpu_custom_call.1} parent=1 // pred_check_branch
      %149 = sbr.rel (0) target = $region81
    $region80: #{tpu_custom_call.1} parent=1 // pred_region
      %150 = dma.done [#allocation9], 2048
    $region81: #{tpu_custom_call.1} parent=1 // pred_fallthru
      _
    // Predicated region
    $region82: #{tpu_custom_call.1} parent=1 // pred_check
      _
    $region83: #{tpu_custom_call.1} parent=1 // pred_check_branch
      %152 = sbr.rel (0) target = $region85
    $region84: #{tpu_custom_call.1} parent=1 // pred_region
      %153 = dma.done [#allocation12], 1024
    $region85: #{tpu_custom_call.1} parent=1 // pred_fallthru
      _
    // Predicated region
    $region86: #{tpu_custom_call.1} parent=1 // pred_check
      _
    $region87: #{tpu_custom_call.1} parent=1 // pred_check_branch
      %155 = sbr.rel (0) target = $region89
    $region88: #{tpu_custom_call.1} parent=1 // pred_region
      %156 = dma.done [#allocation12], 2048
    $region89: #{tpu_custom_call.1} parent=1 // pred_fallthru
      _
    // Predicated region
    $region90: #{tpu_custom_call.1} parent=1 // pred_check
      _
    $region91: #{tpu_custom_call.1} parent=1 // pred_check_branch
      %158 = sbr.rel (0) target = $region93
    $region92: #{tpu_custom_call.1} parent=1 // pred_region
      %159 = dma.done [#allocation15], 1024
    $region93: #{tpu_custom_call.1} parent=1 // pred_fallthru
      _
    %v161 = vld [vmem:[#allocation2] sm:$0xf]
    %v162 = vld [vmem:[#allocation2 + $0x4] sm:$0xf]
    %v163 = vld [vmem:[#allocation2 + $0x8] sm:$0xf]
    %v164 = vld [vmem:[#allocation2 + $0xc] sm:$0xf]
    %v165 = vld [vmem:[#allocation2 + $0x10] sm:$0xf]
    %v166 = vld [vmem:[#allocation2 + $0x14] sm:$0xf]
    %v167 = vld [vmem:[#allocation2 + $0x18] sm:$0xf]
    %v168 = vld [vmem:[#allocation2 + $0x1c] sm:$0xf]
    %v169 = vld [vmem:[#allocation2 + $0x20] sm:$0xf]
    %v170 = vld [vmem:[#allocation2 + $0x24] sm:$0xf]
    %v171 = vld [vmem:[#allocation2 + $0x28] sm:$0xf]
    %v172 = vld [vmem:[#allocation2 + $0x2c] sm:$0xf]
    %v173 = vld [vmem:[#allocation2 + $0x30] sm:$0xf]
    %v174 = vld [vmem:[#allocation2 + $0x34] sm:$0xf]
    %v175 = vld [vmem:[#allocation2 + $0x38] sm:$0xf]
    %v176 = vld [vmem:[#allocation2 + $0x3c] sm:$0xf]
    %v177 = vld [vmem:[#allocation5] sm:$0xf]
    %v178 = vld [vmem:[#allocation5 + $0x4] sm:$0xf]
    %v179 = vld [vmem:[#allocation5 + $0x8] sm:$0xf]
    %v180 = vld [vmem:[#allocation5 + $0xc] sm:$0xf]
    %v181 = vld [vmem:[#allocation5 + $0x10] sm:$0xf]
    %v182 = vld [vmem:[#allocation5 + $0x14] sm:$0xf]
    %v183 = vld [vmem:[#allocation5 + $0x18] sm:$0xf]
    %v184 = vld [vmem:[#allocation5 + $0x1c] sm:$0xf]
    %v185 = vld [vmem:[#allocation5 + $0x20] sm:$0xf]
    %v186 = vld [vmem:[#allocation5 + $0x24] sm:$0xf]
    %v187 = vld [vmem:[#allocation5 + $0x28] sm:$0xf]
    %v188 = vld [vmem:[#allocation5 + $0x2c] sm:$0xf]
    %v189 = vld [vmem:[#allocation5 + $0x30] sm:$0xf]
    %v190 = vld [vmem:[#allocation5 + $0x34] sm:$0xf]
    %v191 = vld [vmem:[#allocation5 + $0x38] sm:$0xf]
    %v192 = vld [vmem:[#allocation5 + $0x3c] sm:$0xf]
    %v193 = vld [vmem:[%s2] sm:$0x1]
    %v194 = vpack.c.bf16 %v193, %v193
    %v211 = vunpack.c.l.b16 %v161
    %v212 = vunpack.c.l.b16 %v162
    %v213 = vunpack.c.l.b16 %v163
    %v214 = vunpack.c.l.b16 %v164
    %v215 = vunpack.c.l.b16 %v165
    %v216 = vunpack.c.l.b16 %v166
    %v217 = vunpack.c.l.b16 %v167
    %v218 = vunpack.c.l.b16 %v168
    %v219 = vunpack.c.l.b16 %v169
    %v220 = vunpack.c.l.b16 %v170
    %v221 = vunpack.c.l.b16 %v171
    %v222 = vunpack.c.l.b16 %v172
    %v223 = vunpack.c.l.b16 %v173
    %v224 = vunpack.c.l.b16 %v174
    %v225 = vunpack.c.l.b16 %v175
    %v226 = vunpack.c.l.b16 %v176
    %v227 = vpack.c.b16 %v212, %v211
    %v228 = vpack.c.b16 %v214, %v213
    %v229 = vpack.c.b16 %v216, %v215
    %v230 = vpack.c.b16 %v218, %v217
    %v231 = vpack.c.b16 %v220, %v219
    %v232 = vpack.c.b16 %v222, %v221
    %v233 = vpack.c.b16 %v224, %v223
    %v234 = vpack.c.b16 %v226, %v225
    %v259 = vunpack.c.l.b16 %v177
    %v260 = vunpack.c.l.b16 %v178
    %v261 = vunpack.c.l.b16 %v179
    %v262 = vunpack.c.l.b16 %v180
    %v263 = vunpack.c.l.b16 %v181
    %v264 = vunpack.c.l.b16 %v182
    %v265 = vunpack.c.l.b16 %v183
    %v266 = vunpack.c.l.b16 %v184
    %v267 = vunpack.c.l.b16 %v185
    %v268 = vunpack.c.l.b16 %v186
    %v269 = vunpack.c.l.b16 %v187
    %v270 = vunpack.c.l.b16 %v188
    %v271 = vunpack.c.l.b16 %v189
    %v272 = vunpack.c.l.b16 %v190
    %v273 = vunpack.c.l.b16 %v191
    %v274 = vunpack.c.l.b16 %v192
    %v275 = vpack.c.b16 %v260, %v259
    %v276 = vpack.c.b16 %v262, %v261
    %v277 = vpack.c.b16 %v264, %v263
    %v278 = vpack.c.b16 %v266, %v265
    %v279 = vpack.c.b16 %v268, %v267
    %v280 = vpack.c.b16 %v270, %v269
    %v281 = vpack.c.b16 %v272, %v271
    %v282 = vpack.c.b16 %v274, %v273
    %291 = vmatprep.subr.bf16.mxu0 0
    %292 = vmatpush1.bf16.msra.mxu0 %v275
    %293 = vmatprep.subr.bf16.mxu0 0
    %294 = vmatpush1.bf16.msra.mxu0 %v276
    %295 = vmatprep.subr.bf16.mxu0 0
    %296 = vmatpush1.bf16.msra.mxu0 %v277
    %297 = vmatprep.subr.bf16.mxu0 0
    %298 = vmatpush1.bf16.msra.mxu0 %v278
    %299 = vmatprep.subr.bf16.mxu0 0
    %300 = vmatpush1.bf16.msra.mxu0 %v279
    %301 = vmatprep.subr.bf16.mxu0 0
    %302 = vmatpush1.bf16.msra.mxu0 %v280
    %303 = vmatprep.subr.bf16.mxu0 0
    %304 = vmatpush1.bf16.msra.mxu0 %v281
    %305 = vmatprep.subr.bf16.mxu0 0
    %306 = vmatpush1.bf16.msra.mxu0 %v282
    %307 = vmatprep.subr.bf16.mxu0 0
    %308 = vmatpush1.bf16.msra.mxu0 0
    %309 = vmatprep.subr.bf16.mxu0 0
    %310 = vmatpush1.bf16.msra.mxu0 0
    %311 = vmatprep.subr.bf16.mxu0 0
    %312 = vmatpush1.bf16.msra.mxu0 0
    %313 = vmatprep.subr.bf16.mxu0 0
    %314 = vmatpush1.bf16.msra.mxu0 0
    %315 = vmatprep.subr.bf16.mxu0 0
    %316 = vmatpush1.bf16.msra.mxu0 0
    %317 = vmatprep.subr.bf16.mxu0 0
    %318 = vmatpush1.bf16.msra.mxu0 0
    %319 = vmatprep.subr.bf16.mxu0 0
    %320 = vmatpush1.bf16.msra.mxu0 0
    %321 = vmatprep.subr.bf16.mxu0 0
    %322 = vmatpush1.bf16.msra.mxu0 0
    %323 = vmatprep.mubr.bf16.mxu0 0
    %324 = vmatmul.mubr.bf16.gmra.mrb[0].mxu0 %v227
    %v325 = vpop.f32.mrb[0].mxu0
    %v326 = vadd.f32 0.0, %v325
    %v327 = vpop.f32.mrb[0].mxu0
    %v328 = vpop.f32.mrb[0].mxu0
    %v329 = vadd.f32 0.0, %v328
    %v330 = vpop.f32.mrb[0].mxu0
    %331 = vmatprep.mubr.bf16.mxu0 0
    %332 = vmatmul.mubr.bf16.gmra.mrb[0].mxu0 %v228
    %v333 = vpop.f32.mrb[0].mxu0
    %v334 = vadd.f32 0.0, %v333
    %v335 = vpop.f32.mrb[0].mxu0
    %v336 = vpop.f32.mrb[0].mxu0
    %v337 = vadd.f32 0.0, %v336
    %v338 = vpop.f32.mrb[0].mxu0
    %339 = vmatprep.mubr.bf16.mxu0 0
    %340 = vmatmul.mubr.bf16.gmra.mrb[0].mxu0 %v229
    %v341 = vpop.f32.mrb[0].mxu0
    %v342 = vadd.f32 0.0, %v341
    %v343 = vpop.f32.mrb[0].mxu0
    %v344 = vpop.f32.mrb[0].mxu0
    %v345 = vadd.f32 0.0, %v344
    %v346 = vpop.f32.mrb[0].mxu0
    %347 = vmatprep.mubr.bf16.mxu0 0
    %348 = vmatmul.mubr.bf16.gmra.mrb[0].mxu0 %v230
    %v349 = vpop.f32.mrb[0].mxu0
    %v350 = vadd.f32 0.0, %v349
    %v351 = vpop.f32.mrb[0].mxu0
    %v352 = vpop.f32.mrb[0].mxu0
    %v353 = vadd.f32 0.0, %v352
    %v354 = vpop.f32.mrb[0].mxu0
    %355 = vmatprep.mubr.bf16.mxu0 0
    %356 = vmatmul.mubr.bf16.gmra.mrb[0].mxu0 %v231
    %v357 = vpop.f32.mrb[0].mxu0
    %v358 = vadd.f32 0.0, %v357
    %v359 = vpop.f32.mrb[0].mxu0
    %v360 = vpop.f32.mrb[0].mxu0
    %v361 = vadd.f32 0.0, %v360
    %v362 = vpop.f32.mrb[0].mxu0
    %363 = vmatprep.mubr.bf16.mxu0 0
    %364 = vmatmul.mubr.bf16.gmra.mrb[0].mxu0 %v232
    %v365 = vpop.f32.mrb[0].mxu0
    %v366 = vadd.f32 0.0, %v365
    %v367 = vpop.f32.mrb[0].mxu0
    %v368 = vpop.f32.mrb[0].mxu0
    %v369 = vadd.f32 0.0, %v368
    %v370 = vpop.f32.mrb[0].mxu0
    %371 = vmatprep.mubr.bf16.mxu0 0
    %372 = vmatmul.mubr.bf16.gmra.mrb[0].mxu0 %v233
    %v373 = vpop.f32.mrb[0].mxu0
    %v374 = vadd.f32 0.0, %v373
    %v375 = vpop.f32.mrb[0].mxu0
    %v376 = vpop.f32.mrb[0].mxu0
    %v377 = vadd.f32 0.0, %v376
    %v378 = vpop.f32.mrb[0].mxu0
    %379 = vmatprep.mubr.bf16.mxu0 0
    %380 = vmatmul.mubr.bf16.gmra.mrb[0].mxu0 %v234
    %v381 = vpop.f32.mrb[0].mxu0
    %v382 = vadd.f32 0.0, %v381
    %v383 = vpop.f32.mrb[0].mxu0
    %v384 = vpop.f32.mrb[0].mxu0
    %v385 = vadd.f32 0.0, %v384
    %v386 = vpop.f32.mrb[0].mxu0
    %387 = vdwg.mxu0
    %v388 = vpack.c.bf16 %v329, %v326
    %v389 = vpack.c.bf16 %v337, %v334
    %v390 = vpack.c.bf16 %v345, %v342
    %v391 = vpack.c.bf16 %v353, %v350
    %v392 = vpack.c.bf16 %v361, %v358
    %v393 = vpack.c.bf16 %v369, %v366
    %v394 = vpack.c.bf16 %v377, %v374
    %v395 = vpack.c.bf16 %v385, %v382
    %v397 = vpack.i.b16 %v194, %v194
    %v399 = vlaneseq
    %v400 = vshrl.u32 %v399, 7
    %v401 = vsub.s32 0, %v400
    %v402 = vrot.slane %v397, %v401
    %v403 = vadd.bf16 %v388, %v402
    %v404 = vadd.bf16 %v389, %v402
    %v405 = vadd.bf16 %v390, %v402
    %v406 = vadd.bf16 %v391, %v402
    %v407 = vadd.bf16 %v392, %v402
    %v408 = vadd.bf16 %v393, %v402
    %v409 = vadd.bf16 %v394, %v402
    %v410 = vadd.bf16 %v395, %v402
    %v411 = vmax.bf16 %v403, 0
    %v412 = vmax.bf16 %v404, 0
    %v413 = vmax.bf16 %v405, 0
    %v414 = vmax.bf16 %v406, 0
    %v415 = vmax.bf16 %v407, 0
    %v416 = vmax.bf16 %v408, 0
    %v417 = vmax.bf16 %v409, 0
    %v418 = vmax.bf16 %v410, 0
    %v419 = vld [vmem:[#allocation7] sm:$0xf]
    %v420 = vld [vmem:[#allocation7 + $0x4] sm:$0xf]
    %v421 = vld [vmem:[#allocation7 + $0x8] sm:$0xf]
    %v422 = vld [vmem:[#allocation7 + $0xc] sm:$0xf]
    %v423 = vld [vmem:[#allocation7 + $0x10] sm:$0xf]
    %v424 = vld [vmem:[#allocation7 + $0x14] sm:$0xf]
    %v425 = vld [vmem:[#allocation7 + $0x18] sm:$0xf]
    %v426 = vld [vmem:[#allocation7 + $0x1c] sm:$0xf]
    %v427 = vld [vmem:[#allocation7 + $0x20] sm:$0xf]
    %v428 = vld [vmem:[#allocation7 + $0x24] sm:$0xf]
    %v429 = vld [vmem:[#allocation7 + $0x28] sm:$0xf]
    %v430 = vld [vmem:[#allocation7 + $0x2c] sm:$0xf]
    %v431 = vld [vmem:[#allocation7 + $0x30] sm:$0xf]
    %v432 = vld [vmem:[#allocation7 + $0x34] sm:$0xf]
    %v433 = vld [vmem:[#allocation7 + $0x38] sm:$0xf]
    %v434 = vld [vmem:[#allocation7 + $0x3c] sm:$0xf]
    %v435 = vld [vmem:[%s4] sm:$0x1]
    %v436 = vpack.c.bf16 %v435, %v435
    %v453 = vunpack.c.l.b16 %v419
    %v454 = vunpack.c.l.b16 %v420
    %v455 = vunpack.c.l.b16 %v421
    %v456 = vunpack.c.l.b16 %v422
    %v457 = vunpack.c.l.b16 %v423
    %v458 = vunpack.c.l.b16 %v424
    %v459 = vunpack.c.l.b16 %v425
    %v460 = vunpack.c.l.b16 %v426
    %v461 = vunpack.c.l.b16 %v427
    %v462 = vunpack.c.l.b16 %v428
    %v463 = vunpack.c.l.b16 %v429
    %v464 = vunpack.c.l.b16 %v430
    %v465 = vunpack.c.l.b16 %v431
    %v466 = vunpack.c.l.b16 %v432
    %v467 = vunpack.c.l.b16 %v433
    %v468 = vunpack.c.l.b16 %v434
    %v469 = vpack.c.b16 %v454, %v453
    %v470 = vpack.c.b16 %v456, %v455
    %v471 = vpack.c.b16 %v458, %v457
    %v472 = vpack.c.b16 %v460, %v459
    %v473 = vpack.c.b16 %v462, %v461
    %v474 = vpack.c.b16 %v464, %v463
    %v475 = vpack.c.b16 %v466, %v465
    %v476 = vpack.c.b16 %v468, %v467
    %485 = vmatprep.subr.bf16.mxu0 0
    %486 = vmatpush1.bf16.msra.mxu0 %v469
    %487 = vmatprep.subr.bf16.mxu0 0
    %488 = vmatpush1.bf16.msra.mxu0 %v470
    %489 = vmatprep.subr.bf16.mxu0 0
    %490 = vmatpush1.bf16.msra.mxu0 %v471
    %491 = vmatprep.subr.bf16.mxu0 0
    %492 = vmatpush1.bf16.msra.mxu0 %v472
    %493 = vmatprep.subr.bf16.mxu0 0
    %494 = vmatpush1.bf16.msra.mxu0 %v473
    %495 = vmatprep.subr.bf16.mxu0 0
    %496 = vmatpush1.bf16.msra.mxu0 %v474
    %497 = vmatprep.subr.bf16.mxu0 0
    %498 = vmatpush1.bf16.msra.mxu0 %v475
    %499 = vmatprep.subr.bf16.mxu0 0
    %500 = vmatpush1.bf16.msra.mxu0 %v476
    %501 = vmatprep.subr.bf16.mxu0 0
    %502 = vmatpush1.bf16.msra.mxu0 0
    %503 = vmatprep.subr.bf16.mxu0 0
    %504 = vmatpush1.bf16.msra.mxu0 0
    %505 = vmatprep.subr.bf16.mxu0 0
    %506 = vmatpush1.bf16.msra.mxu0 0
    %507 = vmatprep.subr.bf16.mxu0 0
    %508 = vmatpush1.bf16.msra.mxu0 0
    %509 = vmatprep.subr.bf16.mxu0 0
    %510 = vmatpush1.bf16.msra.mxu0 0
    %511 = vmatprep.subr.bf16.mxu0 0
    %512 = vmatpush1.bf16.msra.mxu0 0
    %513 = vmatprep.subr.bf16.mxu0 0
    %514 = vmatpush1.bf16.msra.mxu0 0
    %515 = vmatprep.subr.bf16.mxu0 0
    %516 = vmatpush1.bf16.msra.mxu0 0
    %517 = vmatprep.mubr.bf16.mxu0 0
    %518 = vmatmul.mubr.bf16.gmra.mrb[0].mxu0 %v411
    %v519 = vpop.f32.mrb[0].mxu0
    %v520 = vadd.f32 0.0, %v519
    %v521 = vpop.f32.mrb[0].mxu0
    %v522 = vpop.f32.mrb[0].mxu0
    %v523 = vadd.f32 0.0, %v522
    %v524 = vpop.f32.mrb[0].mxu0
    %525 = vmatprep.mubr.bf16.mxu0 0
    %526 = vmatmul.mubr.bf16.gmra.mrb[0].mxu0 %v412
    %v527 = vpop.f32.mrb[0].mxu0
    %v528 = vadd.f32 0.0, %v527
    %v529 = vpop.f32.mrb[0].mxu0
    %v530 = vpop.f32.mrb[0].mxu0
    %v531 = vadd.f32 0.0, %v530
    %v532 = vpop.f32.mrb[0].mxu0
    %533 = vmatprep.mubr.bf16.mxu0 0
    %534 = vmatmul.mubr.bf16.gmra.mrb[0].mxu0 %v413
    %v535 = vpop.f32.mrb[0].mxu0
    %v536 = vadd.f32 0.0, %v535
    %v537 = vpop.f32.mrb[0].mxu0
    %v538 = vpop.f32.mrb[0].mxu0
    %v539 = vadd.f32 0.0, %v538
    %v540 = vpop.f32.mrb[0].mxu0
    %541 = vmatprep.mubr.bf16.mxu0 0
    %542 = vmatmul.mubr.bf16.gmra.mrb[0].mxu0 %v414
    %v543 = vpop.f32.mrb[0].mxu0
    %v544 = vadd.f32 0.0, %v543
    %v545 = vpop.f32.mrb[0].mxu0
    %v546 = vpop.f32.mrb[0].mxu0
    %v547 = vadd.f32 0.0, %v546
    %v548 = vpop.f32.mrb[0].mxu0
    %549 = vmatprep.mubr.bf16.mxu0 0
    %550 = vmatmul.mubr.bf16.gmra.mrb[0].mxu0 %v415
    %v551 = vpop.f32.mrb[0].mxu0
    %v552 = vadd.f32 0.0, %v551
    %v553 = vpop.f32.mrb[0].mxu0
    %v554 = vpop.f32.mrb[0].mxu0
    %v555 = vadd.f32 0.0, %v554
    %v556 = vpop.f32.mrb[0].mxu0
    %557 = vmatprep.mubr.bf16.mxu0 0
    %558 = vmatmul.mubr.bf16.gmra.mrb[0].mxu0 %v416
    %v559 = vpop.f32.mrb[0].mxu0
    %v560 = vadd.f32 0.0, %v559
    %v561 = vpop.f32.mrb[0].mxu0
    %v562 = vpop.f32.mrb[0].mxu0
    %v563 = vadd.f32 0.0, %v562
    %v564 = vpop.f32.mrb[0].mxu0
    %565 = vmatprep.mubr.bf16.mxu0 0
    %566 = vmatmul.mubr.bf16.gmra.mrb[0].mxu0 %v417
    %v567 = vpop.f32.mrb[0].mxu0
    %v568 = vadd.f32 0.0, %v567
    %v569 = vpop.f32.mrb[0].mxu0
    %v570 = vpop.f32.mrb[0].mxu0
    %v571 = vadd.f32 0.0, %v570
    %v572 = vpop.f32.mrb[0].mxu0
    %573 = vmatprep.mubr.bf16.mxu0 0
    %574 = vmatmul.mubr.bf16.gmra.mrb[0].mxu0 %v418
    %v575 = vpop.f32.mrb[0].mxu0
    %v576 = vadd.f32 0.0, %v575
    %v577 = vpop.f32.mrb[0].mxu0
    %v578 = vpop.f32.mrb[0].mxu0
    %v579 = vadd.f32 0.0, %v578
    %v580 = vpop.f32.mrb[0].mxu0
    %581 = vdwg.mxu0
    %v582 = vpack.c.bf16 %v523, %v520
    %v583 = vpack.c.bf16 %v531, %v528
    %v584 = vpack.c.bf16 %v539, %v536
    %v585 = vpack.c.bf16 %v547, %v544
    %v586 = vpack.c.bf16 %v555, %v552
    %v587 = vpack.c.bf16 %v563, %v560
    %v588 = vpack.c.bf16 %v571, %v568
    %v589 = vpack.c.bf16 %v579, %v576
    %v591 = vpack.i.b16 %v436, %v436
    %v593 = vlaneseq
    %v594 = vshrl.u32 %v593, 7
    %v595 = vsub.s32 0, %v594
    %v596 = vrot.slane %v591, %v595
    %v597 = vadd.bf16 %v582, %v596
    %v598 = vadd.bf16 %v583, %v596
    %v599 = vadd.bf16 %v584, %v596
    %v600 = vadd.bf16 %v585, %v596
    %v601 = vadd.bf16 %v586, %v596
    %v602 = vadd.bf16 %v587, %v596
    %v603 = vadd.bf16 %v588, %v596
    %v604 = vadd.bf16 %v589, %v596
    %v605 = vmax.bf16 %v597, 0
    %v606 = vmax.bf16 %v598, 0
    %v607 = vmax.bf16 %v599, 0
    %v608 = vmax.bf16 %v600, 0
    %v609 = vmax.bf16 %v601, 0
    %v610 = vmax.bf16 %v602, 0
    %v611 = vmax.bf16 %v603, 0
    %v612 = vmax.bf16 %v604, 0
    %v613 = vld [vmem:[#allocation8] sm:$0xf]
    %v614 = vld [vmem:[#allocation8 + $0x4] sm:$0xf]
    %v615 = vld [vmem:[#allocation8 + $0x8] sm:$0xf]
    %v616 = vld [vmem:[#allocation8 + $0xc] sm:$0xf]
    %v617 = vld [vmem:[#allocation8 + $0x10] sm:$0xf]
    %v618 = vld [vmem:[#allocation8 + $0x14] sm:$0xf]
    %v619 = vld [vmem:[#allocation8 + $0x18] sm:$0xf]
    %v620 = vld [vmem:[#allocation8 + $0x1c] sm:$0xf]
    %v621 = vld [vmem:[#allocation8 + $0x20] sm:$0xf]
    %v622 = vld [vmem:[#allocation8 + $0x24] sm:$0xf]
    %v623 = vld [vmem:[#allocation8 + $0x28] sm:$0xf]
    %v624 = vld [vmem:[#allocation8 + $0x2c] sm:$0xf]
    %v625 = vld [vmem:[#allocation8 + $0x30] sm:$0xf]
    %v626 = vld [vmem:[#allocation8 + $0x34] sm:$0xf]
    %v627 = vld [vmem:[#allocation8 + $0x38] sm:$0xf]
    %v628 = vld [vmem:[#allocation8 + $0x3c] sm:$0xf]
    %v629 = vld [vmem:[%s6] sm:$0x1]
    %v630 = vpack.c.bf16 %v629, %v629
    %v647 = vunpack.c.l.b16 %v613
    %v648 = vunpack.c.l.b16 %v614
    %v649 = vunpack.c.l.b16 %v615
    %v650 = vunpack.c.l.b16 %v616
    %v651 = vunpack.c.l.b16 %v617
    %v652 = vunpack.c.l.b16 %v618
    %v653 = vunpack.c.l.b16 %v619
    %v654 = vunpack.c.l.b16 %v620
    %v655 = vunpack.c.l.b16 %v621
    %v656 = vunpack.c.l.b16 %v622
    %v657 = vunpack.c.l.b16 %v623
    %v658 = vunpack.c.l.b16 %v624
    %v659 = vunpack.c.l.b16 %v625
    %v660 = vunpack.c.l.b16 %v626
    %v661 = vunpack.c.l.b16 %v627
    %v662 = vunpack.c.l.b16 %v628
    %v663 = vpack.c.b16 %v648, %v647
    %v664 = vpack.c.b16 %v650, %v649
    %v665 = vpack.c.b16 %v652, %v651
    %v666 = vpack.c.b16 %v654, %v653
    %v667 = vpack.c.b16 %v656, %v655
    %v668 = vpack.c.b16 %v658, %v657
    %v669 = vpack.c.b16 %v660, %v659
    %v670 = vpack.c.b16 %v662, %v661
    %679 = vmatprep.subr.bf16.mxu0 0
    %680 = vmatpush1.bf16.msra.mxu0 %v663
    %681 = vmatprep.subr.bf16.mxu0 0
    %682 = vmatpush1.bf16.msra.mxu0 %v664
    %683 = vmatprep.subr.bf16.mxu0 0
    %684 = vmatpush1.bf16.msra.mxu0 %v665
    %685 = vmatprep.subr.bf16.mxu0 0
    %686 = vmatpush1.bf16.msra.mxu0 %v666
    %687 = vmatprep.subr.bf16.mxu0 0
    %688 = vmatpush1.bf16.msra.mxu0 %v667
    %689 = vmatprep.subr.bf16.mxu0 0
    %690 = vmatpush1.bf16.msra.mxu0 %v668
    %691 = vmatprep.subr.bf16.mxu0 0
    %692 = vmatpush1.bf16.msra.mxu0 %v669
    %693 = vmatprep.subr.bf16.mxu0 0
    %694 = vmatpush1.bf16.msra.mxu0 %v670
    %695 = vmatprep.subr.bf16.mxu0 0
    %696 = vmatpush1.bf16.msra.mxu0 0
    %697 = vmatprep.subr.bf16.mxu0 0
    %698 = vmatpush1.bf16.msra.mxu0 0
    %699 = vmatprep.subr.bf16.mxu0 0
    %700 = vmatpush1.bf16.msra.mxu0 0
    %701 = vmatprep.subr.bf16.mxu0 0
    %702 = vmatpush1.bf16.msra.mxu0 0
    %703 = vmatprep.subr.bf16.mxu0 0
    %704 = vmatpush1.bf16.msra.mxu0 0
    %705 = vmatprep.subr.bf16.mxu0 0
    %706 = vmatpush1.bf16.msra.mxu0 0
    %707 = vmatprep.subr.bf16.mxu0 0
    %708 = vmatpush1.bf16.msra.mxu0 0
    %709 = vmatprep.subr.bf16.mxu0 0
    %710 = vmatpush1.bf16.msra.mxu0 0
    %711 = vmatprep.mubr.bf16.mxu0 0
    %712 = vmatmul.mubr.bf16.gmra.mrb[0].mxu0 %v605
    %v713 = vpop.f32.mrb[0].mxu0
    %v714 = vadd.f32 0.0, %v713
    %v715 = vpop.f32.mrb[0].mxu0
    %v716 = vpop.f32.mrb[0].mxu0
    %v717 = vadd.f32 0.0, %v716
    %v718 = vpop.f32.mrb[0].mxu0
    %719 = vmatprep.mubr.bf16.mxu0 0
    %720 = vmatmul.mubr.bf16.gmra.mrb[0].mxu0 %v606
    %v721 = vpop.f32.mrb[0].mxu0
    %v722 = vadd.f32 0.0, %v721
    %v723 = vpop.f32.mrb[0].mxu0
    %v724 = vpop.f32.mrb[0].mxu0
    %v725 = vadd.f32 0.0, %v724
    %v726 = vpop.f32.mrb[0].mxu0
    %727 = vmatprep.mubr.bf16.mxu0 0
    %728 = vmatmul.mubr.bf16.gmra.mrb[0].mxu0 %v607
    %v729 = vpop.f32.mrb[0].mxu0
    %v730 = vadd.f32 0.0, %v729
    %v731 = vpop.f32.mrb[0].mxu0
    %v732 = vpop.f32.mrb[0].mxu0
    %v733 = vadd.f32 0.0, %v732
    %v734 = vpop.f32.mrb[0].mxu0
    %735 = vmatprep.mubr.bf16.mxu0 0
    %736 = vmatmul.mubr.bf16.gmra.mrb[0].mxu0 %v608
    %v737 = vpop.f32.mrb[0].mxu0
    %v738 = vadd.f32 0.0, %v737
    %v739 = vpop.f32.mrb[0].mxu0
    %v740 = vpop.f32.mrb[0].mxu0
    %v741 = vadd.f32 0.0, %v740
    %v742 = vpop.f32.mrb[0].mxu0
    %743 = vmatprep.mubr.bf16.mxu0 0
    %744 = vmatmul.mubr.bf16.gmra.mrb[0].mxu0 %v609
    %v745 = vpop.f32.mrb[0].mxu0
    %v746 = vadd.f32 0.0, %v745
    %v747 = vpop.f32.mrb[0].mxu0
    %v748 = vpop.f32.mrb[0].mxu0
    %v749 = vadd.f32 0.0, %v748
    %v750 = vpop.f32.mrb[0].mxu0
    %751 = vmatprep.mubr.bf16.mxu0 0
    %752 = vmatmul.mubr.bf16.gmra.mrb[0].mxu0 %v610
    %v753 = vpop.f32.mrb[0].mxu0
    %v754 = vadd.f32 0.0, %v753
    %v755 = vpop.f32.mrb[0].mxu0
    %v756 = vpop.f32.mrb[0].mxu0
    %v757 = vadd.f32 0.0, %v756
    %v758 = vpop.f32.mrb[0].mxu0
    %759 = vmatprep.mubr.bf16.mxu0 0
    %760 = vmatmul.mubr.bf16.gmra.mrb[0].mxu0 %v611
    %v761 = vpop.f32.mrb[0].mxu0
    %v762 = vadd.f32 0.0, %v761
    %v763 = vpop.f32.mrb[0].mxu0
    %v764 = vpop.f32.mrb[0].mxu0
    %v765 = vadd.f32 0.0, %v764
    %v766 = vpop.f32.mrb[0].mxu0
    %767 = vmatprep.mubr.bf16.mxu0 0
    %768 = vmatmul.mubr.bf16.gmra.mrb[0].mxu0 %v612
    %v769 = vpop.f32.mrb[0].mxu0
    %v770 = vadd.f32 0.0, %v769
    %v771 = vpop.f32.mrb[0].mxu0
    %v772 = vpop.f32.mrb[0].mxu0
    %v773 = vadd.f32 0.0, %v772
    %v774 = vpop.f32.mrb[0].mxu0
    %775 = vdwg.mxu0
    %v776 = vpack.c.bf16 %v717, %v714
    %v777 = vpack.c.bf16 %v725, %v722
    %v778 = vpack.c.bf16 %v733, %v730
    %v779 = vpack.c.bf16 %v741, %v738
    %v780 = vpack.c.bf16 %v749, %v746
    %v781 = vpack.c.bf16 %v757, %v754
    %v782 = vpack.c.bf16 %v765, %v762
    %v783 = vpack.c.bf16 %v773, %v770
    %v785 = vpack.i.b16 %v630, %v630
    %v787 = vlaneseq
    %v788 = vshrl.u32 %v787, 7
    %v789 = vsub.s32 0, %v788
    %v790 = vrot.slane %v785, %v789
    %v791 = vadd.bf16 %v776, %v790
    %v792 = vadd.bf16 %v777, %v790
    %v793 = vadd.bf16 %v778, %v790
    %v794 = vadd.bf16 %v779, %v790
    %v795 = vadd.bf16 %v780, %v790
    %v796 = vadd.bf16 %v781, %v790
    %v797 = vadd.bf16 %v782, %v790
    %v798 = vadd.bf16 %v783, %v790
    %v799 = vmax.bf16 %v791, 0
    %v800 = vmax.bf16 %v792, 0
    %v801 = vmax.bf16 %v793, 0
    %v802 = vmax.bf16 %v794, 0
    %v803 = vmax.bf16 %v795, 0
    %v804 = vmax.bf16 %v796, 0
    %v805 = vmax.bf16 %v797, 0
    %v806 = vmax.bf16 %v798, 0
    %v807 = vld [vmem:[#allocation10] sm:$0xf]
    %v808 = vld [vmem:[#allocation10 + $0x4] sm:$0xf]
    %v809 = vld [vmem:[#allocation10 + $0x8] sm:$0xf]
    %v810 = vld [vmem:[#allocation10 + $0xc] sm:$0xf]
    %v811 = vld [vmem:[#allocation10 + $0x10] sm:$0xf]
    %v812 = vld [vmem:[#allocation10 + $0x14] sm:$0xf]
    %v813 = vld [vmem:[#allocation10 + $0x18] sm:$0xf]
    %v814 = vld [vmem:[#allocation10 + $0x1c] sm:$0xf]
    %v815 = vld [vmem:[#allocation10 + $0x20] sm:$0xf]
    %v816 = vld [vmem:[#allocation10 + $0x24] sm:$0xf]
    %v817 = vld [vmem:[#allocation10 + $0x28] sm:$0xf]
    %v818 = vld [vmem:[#allocation10 + $0x2c] sm:$0xf]
    %v819 = vld [vmem:[#allocation10 + $0x30] sm:$0xf]
    %v820 = vld [vmem:[#allocation10 + $0x34] sm:$0xf]
    %v821 = vld [vmem:[#allocation10 + $0x38] sm:$0xf]
    %v822 = vld [vmem:[#allocation10 + $0x3c] sm:$0xf]
    %v823 = vld [vmem:[%s8] sm:$0x1]
    %v824 = vpack.c.bf16 %v823, %v823
    %v841 = vunpack.c.l.b16 %v807
    %v842 = vunpack.c.l.b16 %v808
    %v843 = vunpack.c.l.b16 %v809
    %v844 = vunpack.c.l.b16 %v810
    %v845 = vunpack.c.l.b16 %v811
    %v846 = vunpack.c.l.b16 %v812
    %v847 = vunpack.c.l.b16 %v813
    %v848 = vunpack.c.l.b16 %v814
    %v849 = vunpack.c.l.b16 %v815
    %v850 = vunpack.c.l.b16 %v816
    %v851 = vunpack.c.l.b16 %v817
    %v852 = vunpack.c.l.b16 %v818
    %v853 = vunpack.c.l.b16 %v819
    %v854 = vunpack.c.l.b16 %v820
    %v855 = vunpack.c.l.b16 %v821
    %v856 = vunpack.c.l.b16 %v822
    %v857 = vpack.c.b16 %v842, %v841
    %v858 = vpack.c.b16 %v844, %v843
    %v859 = vpack.c.b16 %v846, %v845
    %v860 = vpack.c.b16 %v848, %v847
    %v861 = vpack.c.b16 %v850, %v849
    %v862 = vpack.c.b16 %v852, %v851
    %v863 = vpack.c.b16 %v854, %v853
    %v864 = vpack.c.b16 %v856, %v855
    %873 = vmatprep.subr.bf16.mxu0 0
    %874 = vmatpush1.bf16.msra.mxu0 %v857
    %875 = vmatprep.subr.bf16.mxu0 0
    %876 = vmatpush1.bf16.msra.mxu0 %v858
    %877 = vmatprep.subr.bf16.mxu0 0
    %878 = vmatpush1.bf16.msra.mxu0 %v859
    %879 = vmatprep.subr.bf16.mxu0 0
    %880 = vmatpush1.bf16.msra.mxu0 %v860
    %881 = vmatprep.subr.bf16.mxu0 0
    %882 = vmatpush1.bf16.msra.mxu0 %v861
    %883 = vmatprep.subr.bf16.mxu0 0
    %884 = vmatpush1.bf16.msra.mxu0 %v862
    %885 = vmatprep.subr.bf16.mxu0 0
    %886 = vmatpush1.bf16.msra.mxu0 %v863
    %887 = vmatprep.subr.bf16.mxu0 0
    %888 = vmatpush1.bf16.msra.mxu0 %v864
    %889 = vmatprep.subr.bf16.mxu0 0
    %890 = vmatpush1.bf16.msra.mxu0 0
    %891 = vmatprep.subr.bf16.mxu0 0
    %892 = vmatpush1.bf16.msra.mxu0 0
    %893 = vmatprep.subr.bf16.mxu0 0
    %894 = vmatpush1.bf16.msra.mxu0 0
    %895 = vmatprep.subr.bf16.mxu0 0
    %896 = vmatpush1.bf16.msra.mxu0 0
    %897 = vmatprep.subr.bf16.mxu0 0
    %898 = vmatpush1.bf16.msra.mxu0 0
    %899 = vmatprep.subr.bf16.mxu0 0
    %900 = vmatpush1.bf16.msra.mxu0 0
    %901 = vmatprep.subr.bf16.mxu0 0
    %902 = vmatpush1.bf16.msra.mxu0 0
    %903 = vmatprep.subr.bf16.mxu0 0
    %904 = vmatpush1.bf16.msra.mxu0 0
    %905 = vmatprep.mubr.bf16.mxu0 0
    %906 = vmatmul.mubr.bf16.gmra.mrb[0].mxu0 %v799
    %v907 = vpop.f32.mrb[0].mxu0
    %v908 = vadd.f32 0.0, %v907
    %v909 = vpop.f32.mrb[0].mxu0
    %v910 = vpop.f32.mrb[0].mxu0
    %v911 = vadd.f32 0.0, %v910
    %v912 = vpop.f32.mrb[0].mxu0
    %913 = vmatprep.mubr.bf16.mxu0 0
    %914 = vmatmul.mubr.bf16.gmra.mrb[0].mxu0 %v800
    %v915 = vpop.f32.mrb[0].mxu0
    %v916 = vadd.f32 0.0, %v915
    %v917 = vpop.f32.mrb[0].mxu0
    %v918 = vpop.f32.mrb[0].mxu0
    %v919 = vadd.f32 0.0, %v918
    %v920 = vpop.f32.mrb[0].mxu0
    %921 = vmatprep.mubr.bf16.mxu0 0
    %922 = vmatmul.mubr.bf16.gmra.mrb[0].mxu0 %v801
    %v923 = vpop.f32.mrb[0].mxu0
    %v924 = vadd.f32 0.0, %v923
    %v925 = vpop.f32.mrb[0].mxu0
    %v926 = vpop.f32.mrb[0].mxu0
    %v927 = vadd.f32 0.0, %v926
    %v928 = vpop.f32.mrb[0].mxu0
    %929 = vmatprep.mubr.bf16.mxu0 0
    %930 = vmatmul.mubr.bf16.gmra.mrb[0].mxu0 %v802
    %v931 = vpop.f32.mrb[0].mxu0
    %v932 = vadd.f32 0.0, %v931
    %v933 = vpop.f32.mrb[0].mxu0
    %v934 = vpop.f32.mrb[0].mxu0
    %v935 = vadd.f32 0.0, %v934
    %v936 = vpop.f32.mrb[0].mxu0
    %937 = vmatprep.mubr.bf16.mxu0 0
    %938 = vmatmul.mubr.bf16.gmra.mrb[0].mxu0 %v803
    %v939 = vpop.f32.mrb[0].mxu0
    %v940 = vadd.f32 0.0, %v939
    %v941 = vpop.f32.mrb[0].mxu0
    %v942 = vpop.f32.mrb[0].mxu0
    %v943 = vadd.f32 0.0, %v942
    %v944 = vpop.f32.mrb[0].mxu0
    %945 = vmatprep.mubr.bf16.mxu0 0
    %946 = vmatmul.mubr.bf16.gmra.mrb[0].mxu0 %v804
    %v947 = vpop.f32.mrb[0].mxu0
    %v948 = vadd.f32 0.0, %v947
    %v949 = vpop.f32.mrb[0].mxu0
    %v950 = vpop.f32.mrb[0].mxu0
    %v951 = vadd.f32 0.0, %v950
    %v952 = vpop.f32.mrb[0].mxu0
    %953 = vmatprep.mubr.bf16.mxu0 0
    %954 = vmatmul.mubr.bf16.gmra.mrb[0].mxu0 %v805
    %v955 = vpop.f32.mrb[0].mxu0
    %v956 = vadd.f32 0.0, %v955
    %v957 = vpop.f32.mrb[0].mxu0
    %v958 = vpop.f32.mrb[0].mxu0
    %v959 = vadd.f32 0.0, %v958
    %v960 = vpop.f32.mrb[0].mxu0
    %961 = vmatprep.mubr.bf16.mxu0 0
    %962 = vmatmul.mubr.bf16.gmra.mrb[0].mxu0 %v806
    %v963 = vpop.f32.mrb[0].mxu0
    %v964 = vadd.f32 0.0, %v963
    %v965 = vpop.f32.mrb[0].mxu0
    %v966 = vpop.f32.mrb[0].mxu0
    %v967 = vadd.f32 0.0, %v966
    %v968 = vpop.f32.mrb[0].mxu0
    %969 = vdwg.mxu0
    %v970 = vpack.c.bf16 %v911, %v908
    %v971 = vpack.c.bf16 %v919, %v916
    %v972 = vpack.c.bf16 %v927, %v924
    %v973 = vpack.c.bf16 %v935, %v932
    %v974 = vpack.c.bf16 %v943, %v940
    %v975 = vpack.c.bf16 %v951, %v948
    %v976 = vpack.c.bf16 %v959, %v956
    %v977 = vpack.c.bf16 %v967, %v964
    %v979 = vpack.i.b16 %v824, %v824
    %v981 = vlaneseq
    %v982 = vshrl.u32 %v981, 7
    %v983 = vsub.s32 0, %v982
    %v984 = vrot.slane %v979, %v983
    %v985 = vadd.bf16 %v970, %v984
    %v986 = vadd.bf16 %v971, %v984
    %v987 = vadd.bf16 %v972, %v984
    %v988 = vadd.bf16 %v973, %v984
    %v989 = vadd.bf16 %v974, %v984
    %v990 = vadd.bf16 %v975, %v984
    %v991 = vadd.bf16 %v976, %v984
    %v992 = vadd.bf16 %v977, %v984
    %v993 = vmax.bf16 %v985, 0
    %v994 = vmax.bf16 %v986, 0
    %v995 = vmax.bf16 %v987, 0
    %v996 = vmax.bf16 %v988, 0
    %v997 = vmax.bf16 %v989, 0
    %v998 = vmax.bf16 %v990, 0
    %v999 = vmax.bf16 %v991, 0
    %v1000 = vmax.bf16 %v992, 0
    %s1001 = scalar_lea.vmem [#allocation10], 64
    %v1002 = vld [vmem:[%s1001] sm:$0xf]
    %v1003 = vld [vmem:[%s1001 + $0x4] sm:$0xf]
    %v1004 = vld [vmem:[%s1001 + $0x8] sm:$0xf]
    %v1005 = vld [vmem:[%s1001 + $0xc] sm:$0xf]
    %v1006 = vld [vmem:[%s1001 + $0x10] sm:$0xf]
    %v1007 = vld [vmem:[%s1001 + $0x14] sm:$0xf]
    %v1008 = vld [vmem:[%s1001 + $0x18] sm:$0xf]
    %v1009 = vld [vmem:[%s1001 + $0x1c] sm:$0xf]
    %v1010 = vld [vmem:[%s1001 + $0x20] sm:$0xf]
    %v1011 = vld [vmem:[%s1001 + $0x24] sm:$0xf]
    %v1012 = vld [vmem:[%s1001 + $0x28] sm:$0xf]
    %v1013 = vld [vmem:[%s1001 + $0x2c] sm:$0xf]
    %v1014 = vld [vmem:[%s1001 + $0x30] sm:$0xf]
    %v1015 = vld [vmem:[%s1001 + $0x34] sm:$0xf]
    %v1016 = vld [vmem:[%s1001 + $0x38] sm:$0xf]
    %v1017 = vld [vmem:[%s1001 + $0x3c] sm:$0xf]
    %s1018 = scalar_lea.vmem %s8, 1
    %v1019 = vld [vmem:[%s1018] sm:$0x1]
    %v1020 = vpack.c.bf16 %v1019, %v1019
    %v1037 = vunpack.c.l.b16 %v1002
    %v1038 = vunpack.c.l.b16 %v1003
    %v1039 = vunpack.c.l.b16 %v1004
    %v1040 = vunpack.c.l.b16 %v1005
    %v1041 = vunpack.c.l.b16 %v1006
    %v1042 = vunpack.c.l.b16 %v1007
    %v1043 = vunpack.c.l.b16 %v1008
    %v1044 = vunpack.c.l.b16 %v1009
    %v1045 = vunpack.c.l.b16 %v1010
    %v1046 = vunpack.c.l.b16 %v1011
    %v1047 = vunpack.c.l.b16 %v1012
    %v1048 = vunpack.c.l.b16 %v1013
    %v1049 = vunpack.c.l.b16 %v1014
    %v1050 = vunpack.c.l.b16 %v1015
    %v1051 = vunpack.c.l.b16 %v1016
    %v1052 = vunpack.c.l.b16 %v1017
    %v1053 = vpack.c.b16 %v1038, %v1037
    %v1054 = vpack.c.b16 %v1040, %v1039
    %v1055 = vpack.c.b16 %v1042, %v1041
    %v1056 = vpack.c.b16 %v1044, %v1043
    %v1057 = vpack.c.b16 %v1046, %v1045
    %v1058 = vpack.c.b16 %v1048, %v1047
    %v1059 = vpack.c.b16 %v1050, %v1049
    %v1060 = vpack.c.b16 %v1052, %v1051
    %1069 = vmatprep.subr.bf16.mxu0 0
    %1070 = vmatpush1.bf16.msra.mxu0 %v1053
    %1071 = vmatprep.subr.bf16.mxu0 0
    %1072 = vmatpush1.bf16.msra.mxu0 %v1054
    %1073 = vmatprep.subr.bf16.mxu0 0
    %1074 = vmatpush1.bf16.msra.mxu0 %v1055
    %1075 = vmatprep.subr.bf16.mxu0 0
    %1076 = vmatpush1.bf16.msra.mxu0 %v1056
    %1077 = vmatprep.subr.bf16.mxu0 0
    %1078 = vmatpush1.bf16.msra.mxu0 %v1057
    %1079 = vmatprep.subr.bf16.mxu0 0
    %1080 = vmatpush1.bf16.msra.mxu0 %v1058
    %1081 = vmatprep.subr.bf16.mxu0 0
    %1082 = vmatpush1.bf16.msra.mxu0 %v1059
    %1083 = vmatprep.subr.bf16.mxu0 0
    %1084 = vmatpush1.bf16.msra.mxu0 %v1060
    %1085 = vmatprep.subr.bf16.mxu0 0
    %1086 = vmatpush1.bf16.msra.mxu0 0
    %1087 = vmatprep.subr.bf16.mxu0 0
    %1088 = vmatpush1.bf16.msra.mxu0 0
    %1089 = vmatprep.subr.bf16.mxu0 0
    %1090 = vmatpush1.bf16.msra.mxu0 0
    %1091 = vmatprep.subr.bf16.mxu0 0
    %1092 = vmatpush1.bf16.msra.mxu0 0
    %1093 = vmatprep.subr.bf16.mxu0 0
    %1094 = vmatpush1.bf16.msra.mxu0 0
    %1095 = vmatprep.subr.bf16.mxu0 0
    %1096 = vmatpush1.bf16.msra.mxu0 0
    %1097 = vmatprep.subr.bf16.mxu0 0
    %1098 = vmatpush1.bf16.msra.mxu0 0
    %1099 = vmatprep.subr.bf16.mxu0 0
    %1100 = vmatpush1.bf16.msra.mxu0 0
    %1101 = vmatprep.mubr.bf16.mxu0 0
    %1102 = vmatmul.mubr.bf16.gmra.mrb[0].mxu0 %v993
    %v1103 = vpop.f32.mrb[0].mxu0
    %v1104 = vadd.f32 0.0, %v1103
    %v1105 = vpop.f32.mrb[0].mxu0
    %v1106 = vpop.f32.mrb[0].mxu0
    %v1107 = vadd.f32 0.0, %v1106
    %v1108 = vpop.f32.mrb[0].mxu0
    %1109 = vmatprep.mubr.bf16.mxu0 0
    %1110 = vmatmul.mubr.bf16.gmra.mrb[0].mxu0 %v994
    %v1111 = vpop.f32.mrb[0].mxu0
    %v1112 = vadd.f32 0.0, %v1111
    %v1113 = vpop.f32.mrb[0].mxu0
    %v1114 = vpop.f32.mrb[0].mxu0
    %v1115 = vadd.f32 0.0, %v1114
    %v1116 = vpop.f32.mrb[0].mxu0
    %1117 = vmatprep.mubr.bf16.mxu0 0
    %1118 = vmatmul.mubr.bf16.gmra.mrb[0].mxu0 %v995
    %v1119 = vpop.f32.mrb[0].mxu0
    %v1120 = vadd.f32 0.0, %v1119
    %v1121 = vpop.f32.mrb[0].mxu0
    %v1122 = vpop.f32.mrb[0].mxu0
    %v1123 = vadd.f32 0.0, %v1122
    %v1124 = vpop.f32.mrb[0].mxu0
    %1125 = vmatprep.mubr.bf16.mxu0 0
    %1126 = vmatmul.mubr.bf16.gmra.mrb[0].mxu0 %v996
    %v1127 = vpop.f32.mrb[0].mxu0
    %v1128 = vadd.f32 0.0, %v1127
    %v1129 = vpop.f32.mrb[0].mxu0
    %v1130 = vpop.f32.mrb[0].mxu0
    %v1131 = vadd.f32 0.0, %v1130
    %v1132 = vpop.f32.mrb[0].mxu0
    %1133 = vmatprep.mubr.bf16.mxu0 0
    %1134 = vmatmul.mubr.bf16.gmra.mrb[0].mxu0 %v997
    %v1135 = vpop.f32.mrb[0].mxu0
    %v1136 = vadd.f32 0.0, %v1135
    %v1137 = vpop.f32.mrb[0].mxu0
    %v1138 = vpop.f32.mrb[0].mxu0
    %v1139 = vadd.f32 0.0, %v1138
    %v1140 = vpop.f32.mrb[0].mxu0
    %1141 = vmatprep.mubr.bf16.mxu0 0
    %1142 = vmatmul.mubr.bf16.gmra.mrb[0].mxu0 %v998
    %v1143 = vpop.f32.mrb[0].mxu0
    %v1144 = vadd.f32 0.0, %v1143
    %v1145 = vpop.f32.mrb[0].mxu0
    %v1146 = vpop.f32.mrb[0].mxu0
    %v1147 = vadd.f32 0.0, %v1146
    %v1148 = vpop.f32.mrb[0].mxu0
    %1149 = vmatprep.mubr.bf16.mxu0 0
    %1150 = vmatmul.mubr.bf16.gmra.mrb[0].mxu0 %v999
    %v1151 = vpop.f32.mrb[0].mxu0
    %v1152 = vadd.f32 0.0, %v1151
    %v1153 = vpop.f32.mrb[0].mxu0
    %v1154 = vpop.f32.mrb[0].mxu0
    %v1155 = vadd.f32 0.0, %v1154
    %v1156 = vpop.f32.mrb[0].mxu0
    %1157 = vmatprep.mubr.bf16.mxu0 0
    %1158 = vmatmul.mubr.bf16.gmra.mrb[0].mxu0 %v1000
    %v1159 = vpop.f32.mrb[0].mxu0
    %v1160 = vadd.f32 0.0, %v1159
    %v1161 = vpop.f32.mrb[0].mxu0
    %v1162 = vpop.f32.mrb[0].mxu0
    %v1163 = vadd.f32 0.0, %v1162
    %v1164 = vpop.f32.mrb[0].mxu0
    %1165 = vdwg.mxu0
    %v1166 = vpack.c.bf16 %v1107, %v1104
    %v1167 = vpack.c.bf16 %v1115, %v1112
    %v1168 = vpack.c.bf16 %v1123, %v1120
    %v1169 = vpack.c.bf16 %v1131, %v1128
    %v1170 = vpack.c.bf16 %v1139, %v1136
    %v1171 = vpack.c.bf16 %v1147, %v1144
    %v1172 = vpack.c.bf16 %v1155, %v1152
    %v1173 = vpack.c.bf16 %v1163, %v1160
    %v1175 = vpack.i.b16 %v1020, %v1020
    %v1177 = vlaneseq
    %v1178 = vshrl.u32 %v1177, 7
    %v1179 = vsub.s32 0, %v1178
    %v1180 = vrot.slane %v1175, %v1179
    %v1181 = vadd.bf16 %v1166, %v1180
    %v1182 = vadd.bf16 %v1167, %v1180
    %v1183 = vadd.bf16 %v1168, %v1180
    %v1184 = vadd.bf16 %v1169, %v1180
    %v1185 = vadd.bf16 %v1170, %v1180
    %v1186 = vadd.bf16 %v1171, %v1180
    %v1187 = vadd.bf16 %v1172, %v1180
    %v1188 = vadd.bf16 %v1173, %v1180
    %v1189 = vmax.bf16 %v1181, 0
    %v1190 = vmax.bf16 %v1182, 0
    %v1191 = vmax.bf16 %v1183, 0
    %v1192 = vmax.bf16 %v1184, 0
    %v1193 = vmax.bf16 %v1185, 0
    %v1194 = vmax.bf16 %v1186, 0
    %v1195 = vmax.bf16 %v1187, 0
    %v1196 = vmax.bf16 %v1188, 0
    %v1197 = vld [vmem:[#allocation11] sm:$0xf]
    %v1198 = vld [vmem:[#allocation11 + $0x4] sm:$0xf]
    %v1199 = vld [vmem:[#allocation11 + $0x8] sm:$0xf]
    %v1200 = vld [vmem:[#allocation11 + $0xc] sm:$0xf]
    %v1201 = vld [vmem:[#allocation11 + $0x10] sm:$0xf]
    %v1202 = vld [vmem:[#allocation11 + $0x14] sm:$0xf]
    %v1203 = vld [vmem:[#allocation11 + $0x18] sm:$0xf]
    %v1204 = vld [vmem:[#allocation11 + $0x1c] sm:$0xf]
    %v1205 = vld [vmem:[#allocation11 + $0x20] sm:$0xf]
    %v1206 = vld [vmem:[#allocation11 + $0x24] sm:$0xf]
    %v1207 = vld [vmem:[#allocation11 + $0x28] sm:$0xf]
    %v1208 = vld [vmem:[#allocation11 + $0x2c] sm:$0xf]
    %v1209 = vld [vmem:[#allocation11 + $0x30] sm:$0xf]
    %v1210 = vld [vmem:[#allocation11 + $0x34] sm:$0xf]
    %v1211 = vld [vmem:[#allocation11 + $0x38] sm:$0xf]
    %v1212 = vld [vmem:[#allocation11 + $0x3c] sm:$0xf]
    %v1213 = vld [vmem:[%s10] sm:$0x1]
    %v1214 = vpack.c.bf16 %v1213, %v1213
    %v1231 = vunpack.c.l.b16 %v1197
    %v1232 = vunpack.c.l.b16 %v1198
    %v1233 = vunpack.c.l.b16 %v1199
    %v1234 = vunpack.c.l.b16 %v1200
    %v1235 = vunpack.c.l.b16 %v1201
    %v1236 = vunpack.c.l.b16 %v1202
    %v1237 = vunpack.c.l.b16 %v1203
    %v1238 = vunpack.c.l.b16 %v1204
    %v1239 = vunpack.c.l.b16 %v1205
    %v1240 = vunpack.c.l.b16 %v1206
    %v1241 = vunpack.c.l.b16 %v1207
    %v1242 = vunpack.c.l.b16 %v1208
    %v1243 = vunpack.c.l.b16 %v1209
    %v1244 = vunpack.c.l.b16 %v1210
    %v1245 = vunpack.c.l.b16 %v1211
    %v1246 = vunpack.c.l.b16 %v1212
    %v1247 = vpack.c.b16 %v1232, %v1231
    %v1248 = vpack.c.b16 %v1234, %v1233
    %v1249 = vpack.c.b16 %v1236, %v1235
    %v1250 = vpack.c.b16 %v1238, %v1237
    %v1251 = vpack.c.b16 %v1240, %v1239
    %v1252 = vpack.c.b16 %v1242, %v1241
    %v1253 = vpack.c.b16 %v1244, %v1243
    %v1254 = vpack.c.b16 %v1246, %v1245
    %1263 = vmatprep.subr.bf16.mxu0 0
    %1264 = vmatpush1.bf16.msra.mxu0 %v1247
    %1265 = vmatprep.subr.bf16.mxu0 0
    %1266 = vmatpush1.bf16.msra.mxu0 %v1248
    %1267 = vmatprep.subr.bf16.mxu0 0
    %1268 = vmatpush1.bf16.msra.mxu0 %v1249
    %1269 = vmatprep.subr.bf16.mxu0 0
    %1270 = vmatpush1.bf16.msra.mxu0 %v1250
    %1271 = vmatprep.subr.bf16.mxu0 0
    %1272 = vmatpush1.bf16.msra.mxu0 %v1251
    %1273 = vmatprep.subr.bf16.mxu0 0
    %1274 = vmatpush1.bf16.msra.mxu0 %v1252
    %1275 = vmatprep.subr.bf16.mxu0 0
    %1276 = vmatpush1.bf16.msra.mxu0 %v1253
    %1277 = vmatprep.subr.bf16.mxu0 0
    %1278 = vmatpush1.bf16.msra.mxu0 %v1254
    %1279 = vmatprep.subr.bf16.mxu0 0
    %1280 = vmatpush1.bf16.msra.mxu0 0
    %1281 = vmatprep.subr.bf16.mxu0 0
    %1282 = vmatpush1.bf16.msra.mxu0 0
    %1283 = vmatprep.subr.bf16.mxu0 0
    %1284 = vmatpush1.bf16.msra.mxu0 0
    %1285 = vmatprep.subr.bf16.mxu0 0
    %1286 = vmatpush1.bf16.msra.mxu0 0
    %1287 = vmatprep.subr.bf16.mxu0 0
    %1288 = vmatpush1.bf16.msra.mxu0 0
    %1289 = vmatprep.subr.bf16.mxu0 0
    %1290 = vmatpush1.bf16.msra.mxu0 0
    %1291 = vmatprep.subr.bf16.mxu0 0
    %1292 = vmatpush1.bf16.msra.mxu0 0
    %1293 = vmatprep.subr.bf16.mxu0 0
    %1294 = vmatpush1.bf16.msra.mxu0 0
    %1295 = vmatprep.mubr.bf16.mxu0 0
    %1296 = vmatmul.mubr.bf16.gmra.mrb[0].mxu0 %v1189
    %v1297 = vpop.f32.mrb[0].mxu0
    %v1298 = vadd.f32 0.0, %v1297
    %v1299 = vpop.f32.mrb[0].mxu0
    %v1300 = vpop.f32.mrb[0].mxu0
    %v1301 = vadd.f32 0.0, %v1300
    %v1302 = vpop.f32.mrb[0].mxu0
    %1303 = vmatprep.mubr.bf16.mxu0 0
    %1304 = vmatmul.mubr.bf16.gmra.mrb[0].mxu0 %v1190
    %v1305 = vpop.f32.mrb[0].mxu0
    %v1306 = vadd.f32 0.0, %v1305
    %v1307 = vpop.f32.mrb[0].mxu0
    %v1308 = vpop.f32.mrb[0].mxu0
    %v1309 = vadd.f32 0.0, %v1308
    %v1310 = vpop.f32.mrb[0].mxu0
    %1311 = vmatprep.mubr.bf16.mxu0 0
    %1312 = vmatmul.mubr.bf16.gmra.mrb[0].mxu0 %v1191
    %v1313 = vpop.f32.mrb[0].mxu0
    %v1314 = vadd.f32 0.0, %v1313
    %v1315 = vpop.f32.mrb[0].mxu0
    %v1316 = vpop.f32.mrb[0].mxu0
    %v1317 = vadd.f32 0.0, %v1316
    %v1318 = vpop.f32.mrb[0].mxu0
    %1319 = vmatprep.mubr.bf16.mxu0 0
    %1320 = vmatmul.mubr.bf16.gmra.mrb[0].mxu0 %v1192
    %v1321 = vpop.f32.mrb[0].mxu0
    %v1322 = vadd.f32 0.0, %v1321
    %v1323 = vpop.f32.mrb[0].mxu0
    %v1324 = vpop.f32.mrb[0].mxu0
    %v1325 = vadd.f32 0.0, %v1324
    %v1326 = vpop.f32.mrb[0].mxu0
    %1327 = vmatprep.mubr.bf16.mxu0 0
    %1328 = vmatmul.mubr.bf16.gmra.mrb[0].mxu0 %v1193
    %v1329 = vpop.f32.mrb[0].mxu0
    %v1330 = vadd.f32 0.0, %v1329
    %v1331 = vpop.f32.mrb[0].mxu0
    %v1332 = vpop.f32.mrb[0].mxu0
    %v1333 = vadd.f32 0.0, %v1332
    %v1334 = vpop.f32.mrb[0].mxu0
    %1335 = vmatprep.mubr.bf16.mxu0 0
    %1336 = vmatmul.mubr.bf16.gmra.mrb[0].mxu0 %v1194
    %v1337 = vpop.f32.mrb[0].mxu0
    %v1338 = vadd.f32 0.0, %v1337
    %v1339 = vpop.f32.mrb[0].mxu0
    %v1340 = vpop.f32.mrb[0].mxu0
    %v1341 = vadd.f32 0.0, %v1340
    %v1342 = vpop.f32.mrb[0].mxu0
    %1343 = vmatprep.mubr.bf16.mxu0 0
    %1344 = vmatmul.mubr.bf16.gmra.mrb[0].mxu0 %v1195
    %v1345 = vpop.f32.mrb[0].mxu0
    %v1346 = vadd.f32 0.0, %v1345
    %v1347 = vpop.f32.mrb[0].mxu0
    %v1348 = vpop.f32.mrb[0].mxu0
    %v1349 = vadd.f32 0.0, %v1348
    %v1350 = vpop.f32.mrb[0].mxu0
    %1351 = vmatprep.mubr.bf16.mxu0 0
    %1352 = vmatmul.mubr.bf16.gmra.mrb[0].mxu0 %v1196
    %v1353 = vpop.f32.mrb[0].mxu0
    %v1354 = vadd.f32 0.0, %v1353
    %v1355 = vpop.f32.mrb[0].mxu0
    %v1356 = vpop.f32.mrb[0].mxu0
    %v1357 = vadd.f32 0.0, %v1356
    %v1358 = vpop.f32.mrb[0].mxu0
    %1359 = vdwg.mxu0
    %v1360 = vpack.c.bf16 %v1301, %v1298
    %v1361 = vpack.c.bf16 %v1309, %v1306
    %v1362 = vpack.c.bf16 %v1317, %v1314
    %v1363 = vpack.c.bf16 %v1325, %v1322
    %v1364 = vpack.c.bf16 %v1333, %v1330
    %v1365 = vpack.c.bf16 %v1341, %v1338
    %v1366 = vpack.c.bf16 %v1349, %v1346
    %v1367 = vpack.c.bf16 %v1357, %v1354
    %v1369 = vpack.i.b16 %v1214, %v1214
    %v1371 = vlaneseq
    %v1372 = vshrl.u32 %v1371, 7
    %v1373 = vsub.s32 0, %v1372
    %v1374 = vrot.slane %v1369, %v1373
    %v1375 = vadd.bf16 %v1360, %v1374
    %v1376 = vadd.bf16 %v1361, %v1374
    %v1377 = vadd.bf16 %v1362, %v1374
    %v1378 = vadd.bf16 %v1363, %v1374
    %v1379 = vadd.bf16 %v1364, %v1374
    %v1380 = vadd.bf16 %v1365, %v1374
    %v1381 = vadd.bf16 %v1366, %v1374
    %v1382 = vadd.bf16 %v1367, %v1374
    %v1383 = vmax.bf16 %v1375, 0
    %v1384 = vmax.bf16 %v1376, 0
    %v1385 = vmax.bf16 %v1377, 0
    %v1386 = vmax.bf16 %v1378, 0
    %v1387 = vmax.bf16 %v1379, 0
    %v1388 = vmax.bf16 %v1380, 0
    %v1389 = vmax.bf16 %v1381, 0
    %v1390 = vmax.bf16 %v1382, 0
    %v1391 = vld [vmem:[#allocation13] sm:$0xf]
    %v1392 = vld [vmem:[#allocation13 + $0x4] sm:$0xf]
    %v1393 = vld [vmem:[#allocation13 + $0x8] sm:$0xf]
    %v1394 = vld [vmem:[#allocation13 + $0xc] sm:$0xf]
    %v1395 = vld [vmem:[#allocation13 + $0x10] sm:$0xf]
    %v1396 = vld [vmem:[#allocation13 + $0x14] sm:$0xf]
    %v1397 = vld [vmem:[#allocation13 + $0x18] sm:$0xf]
    %v1398 = vld [vmem:[#allocation13 + $0x1c] sm:$0xf]
    %v1399 = vld [vmem:[#allocation13 + $0x20] sm:$0xf]
    %v1400 = vld [vmem:[#allocation13 + $0x24] sm:$0xf]
    %v1401 = vld [vmem:[#allocation13 + $0x28] sm:$0xf]
    %v1402 = vld [vmem:[#allocation13 + $0x2c] sm:$0xf]
    %v1403 = vld [vmem:[#allocation13 + $0x30] sm:$0xf]
    %v1404 = vld [vmem:[#allocation13 + $0x34] sm:$0xf]
    %v1405 = vld [vmem:[#allocation13 + $0x38] sm:$0xf]
    %v1406 = vld [vmem:[#allocation13 + $0x3c] sm:$0xf]
    %v1407 = vld [vmem:[%s12] sm:$0x1]
    %v1408 = vpack.c.bf16 %v1407, %v1407
    %v1425 = vunpack.c.l.b16 %v1391
    %v1426 = vunpack.c.l.b16 %v1392
    %v1427 = vunpack.c.l.b16 %v1393
    %v1428 = vunpack.c.l.b16 %v1394
    %v1429 = vunpack.c.l.b16 %v1395
    %v1430 = vunpack.c.l.b16 %v1396
    %v1431 = vunpack.c.l.b16 %v1397
    %v1432 = vunpack.c.l.b16 %v1398
    %v1433 = vunpack.c.l.b16 %v1399
    %v1434 = vunpack.c.l.b16 %v1400
    %v1435 = vunpack.c.l.b16 %v1401
    %v1436 = vunpack.c.l.b16 %v1402
    %v1437 = vunpack.c.l.b16 %v1403
    %v1438 = vunpack.c.l.b16 %v1404
    %v1439 = vunpack.c.l.b16 %v1405
    %v1440 = vunpack.c.l.b16 %v1406
    %v1441 = vpack.c.b16 %v1426, %v1425
    %v1442 = vpack.c.b16 %v1428, %v1427
    %v1443 = vpack.c.b16 %v1430, %v1429
    %v1444 = vpack.c.b16 %v1432, %v1431
    %v1445 = vpack.c.b16 %v1434, %v1433
    %v1446 = vpack.c.b16 %v1436, %v1435
    %v1447 = vpack.c.b16 %v1438, %v1437
    %v1448 = vpack.c.b16 %v1440, %v1439
    %1457 = vmatprep.subr.bf16.mxu0 0
    %1458 = vmatpush1.bf16.msra.mxu0 %v1441
    %1459 = vmatprep.subr.bf16.mxu0 0
    %1460 = vmatpush1.bf16.msra.mxu0 %v1442
    %1461 = vmatprep.subr.bf16.mxu0 0
    %1462 = vmatpush1.bf16.msra.mxu0 %v1443
    %1463 = vmatprep.subr.bf16.mxu0 0
    %1464 = vmatpush1.bf16.msra.mxu0 %v1444
    %1465 = vmatprep.subr.bf16.mxu0 0
    %1466 = vmatpush1.bf16.msra.mxu0 %v1445
    %1467 = vmatprep.subr.bf16.mxu0 0
    %1468 = vmatpush1.bf16.msra.mxu0 %v1446
    %1469 = vmatprep.subr.bf16.mxu0 0
    %1470 = vmatpush1.bf16.msra.mxu0 %v1447
    %1471 = vmatprep.subr.bf16.mxu0 0
    %1472 = vmatpush1.bf16.msra.mxu0 %v1448
    %1473 = vmatprep.subr.bf16.mxu0 0
    %1474 = vmatpush1.bf16.msra.mxu0 0
    %1475 = vmatprep.subr.bf16.mxu0 0
    %1476 = vmatpush1.bf16.msra.mxu0 0
    %1477 = vmatprep.subr.bf16.mxu0 0
    %1478 = vmatpush1.bf16.msra.mxu0 0
    %1479 = vmatprep.subr.bf16.mxu0 0
    %1480 = vmatpush1.bf16.msra.mxu0 0
    %1481 = vmatprep.subr.bf16.mxu0 0
    %1482 = vmatpush1.bf16.msra.mxu0 0
    %1483 = vmatprep.subr.bf16.mxu0 0
    %1484 = vmatpush1.bf16.msra.mxu0 0
    %1485 = vmatprep.subr.bf16.mxu0 0
    %1486 = vmatpush1.bf16.msra.mxu0 0
    %1487 = vmatprep.subr.bf16.mxu0 0
    %1488 = vmatpush1.bf16.msra.mxu0 0
    %1489 = vmatprep.mubr.bf16.mxu0 0
    %1490 = vmatmul.mubr.bf16.gmra.mrb[0].mxu0 %v1383
    %v1491 = vpop.f32.mrb[0].mxu0
    %v1492 = vadd.f32 0.0, %v1491
    %v1493 = vpop.f32.mrb[0].mxu0
    %v1494 = vpop.f32.mrb[0].mxu0
    %v1495 = vadd.f32 0.0, %v1494
    %v1496 = vpop.f32.mrb[0].mxu0
    %1497 = vmatprep.mubr.bf16.mxu0 0
    %1498 = vmatmul.mubr.bf16.gmra.mrb[0].mxu0 %v1384
    %v1499 = vpop.f32.mrb[0].mxu0
    %v1500 = vadd.f32 0.0, %v1499
    %v1501 = vpop.f32.mrb[0].mxu0
    %v1502 = vpop.f32.mrb[0].mxu0
    %v1503 = vadd.f32 0.0, %v1502
    %v1504 = vpop.f32.mrb[0].mxu0
    %1505 = vmatprep.mubr.bf16.mxu0 0
    %1506 = vmatmul.mubr.bf16.gmra.mrb[0].mxu0 %v1385
    %v1507 = vpop.f32.mrb[0].mxu0
    %v1508 = vadd.f32 0.0, %v1507
    %v1509 = vpop.f32.mrb[0].mxu0
    %v1510 = vpop.f32.mrb[0].mxu0
    %v1511 = vadd.f32 0.0, %v1510
    %v1512 = vpop.f32.mrb[0].mxu0
    %1513 = vmatprep.mubr.bf16.mxu0 0
    %1514 = vmatmul.mubr.bf16.gmra.mrb[0].mxu0 %v1386
    %v1515 = vpop.f32.mrb[0].mxu0
    %v1516 = vadd.f32 0.0, %v1515
    %v1517 = vpop.f32.mrb[0].mxu0
    %v1518 = vpop.f32.mrb[0].mxu0
    %v1519 = vadd.f32 0.0, %v1518
    %v1520 = vpop.f32.mrb[0].mxu0
    %1521 = vmatprep.mubr.bf16.mxu0 0
    %1522 = vmatmul.mubr.bf16.gmra.mrb[0].mxu0 %v1387
    %v1523 = vpop.f32.mrb[0].mxu0
    %v1524 = vadd.f32 0.0, %v1523
    %v1525 = vpop.f32.mrb[0].mxu0
    %v1526 = vpop.f32.mrb[0].mxu0
    %v1527 = vadd.f32 0.0, %v1526
    %v1528 = vpop.f32.mrb[0].mxu0
    %1529 = vmatprep.mubr.bf16.mxu0 0
    %1530 = vmatmul.mubr.bf16.gmra.mrb[0].mxu0 %v1388
    %v1531 = vpop.f32.mrb[0].mxu0
    %v1532 = vadd.f32 0.0, %v1531
    %v1533 = vpop.f32.mrb[0].mxu0
    %v1534 = vpop.f32.mrb[0].mxu0
    %v1535 = vadd.f32 0.0, %v1534
    %v1536 = vpop.f32.mrb[0].mxu0
    %1537 = vmatprep.mubr.bf16.mxu0 0
    %1538 = vmatmul.mubr.bf16.gmra.mrb[0].mxu0 %v1389
    %v1539 = vpop.f32.mrb[0].mxu0
    %v1540 = vadd.f32 0.0, %v1539
    %v1541 = vpop.f32.mrb[0].mxu0
    %v1542 = vpop.f32.mrb[0].mxu0
    %v1543 = vadd.f32 0.0, %v1542
    %v1544 = vpop.f32.mrb[0].mxu0
    %1545 = vmatprep.mubr.bf16.mxu0 0
    %1546 = vmatmul.mubr.bf16.gmra.mrb[0].mxu0 %v1390
    %v1547 = vpop.f32.mrb[0].mxu0
    %v1548 = vadd.f32 0.0, %v1547
    %v1549 = vpop.f32.mrb[0].mxu0
    %v1550 = vpop.f32.mrb[0].mxu0
    %v1551 = vadd.f32 0.0, %v1550
    %v1552 = vpop.f32.mrb[0].mxu0
    %1553 = vdwg.mxu0
    %v1554 = vpack.c.bf16 %v1495, %v1492
    %v1555 = vpack.c.bf16 %v1503, %v1500
    %v1556 = vpack.c.bf16 %v1511, %v1508
    %v1557 = vpack.c.bf16 %v1519, %v1516
    %v1558 = vpack.c.bf16 %v1527, %v1524
    %v1559 = vpack.c.bf16 %v1535, %v1532
    %v1560 = vpack.c.bf16 %v1543, %v1540
    %v1561 = vpack.c.bf16 %v1551, %v1548
    %v1563 = vpack.i.b16 %v1408, %v1408
    %v1565 = vlaneseq
    %v1566 = vshrl.u32 %v1565, 7
    %v1567 = vsub.s32 0, %v1566
    %v1568 = vrot.slane %v1563, %v1567
    %v1569 = vadd.bf16 %v1554, %v1568
    %v1570 = vadd.bf16 %v1555, %v1568
    %v1571 = vadd.bf16 %v1556, %v1568
    %v1572 = vadd.bf16 %v1557, %v1568
    %v1573 = vadd.bf16 %v1558, %v1568
    %v1574 = vadd.bf16 %v1559, %v1568
    %v1575 = vadd.bf16 %v1560, %v1568
    %v1576 = vadd.bf16 %v1561, %v1568
    %v1577 = vmax.bf16 %v1569, 0
    %v1578 = vmax.bf16 %v1570, 0
    %v1579 = vmax.bf16 %v1571, 0
    %v1580 = vmax.bf16 %v1572, 0
    %v1581 = vmax.bf16 %v1573, 0
    %v1582 = vmax.bf16 %v1574, 0
    %v1583 = vmax.bf16 %v1575, 0
    %v1584 = vmax.bf16 %v1576, 0
    %s1585 = scalar_lea.vmem [#allocation13], 64
    %v1586 = vld [vmem:[%s1585] sm:$0xf]
    %v1587 = vld [vmem:[%s1585 + $0x4] sm:$0xf]
    %v1588 = vld [vmem:[%s1585 + $0x8] sm:$0xf]
    %v1589 = vld [vmem:[%s1585 + $0xc] sm:$0xf]
    %v1590 = vld [vmem:[%s1585 + $0x10] sm:$0xf]
    %v1591 = vld [vmem:[%s1585 + $0x14] sm:$0xf]
    %v1592 = vld [vmem:[%s1585 + $0x18] sm:$0xf]
    %v1593 = vld [vmem:[%s1585 + $0x1c] sm:$0xf]
    %v1594 = vld [vmem:[%s1585 + $0x20] sm:$0xf]
    %v1595 = vld [vmem:[%s1585 + $0x24] sm:$0xf]
    %v1596 = vld [vmem:[%s1585 + $0x28] sm:$0xf]
    %v1597 = vld [vmem:[%s1585 + $0x2c] sm:$0xf]
    %v1598 = vld [vmem:[%s1585 + $0x30] sm:$0xf]
    %v1599 = vld [vmem:[%s1585 + $0x34] sm:$0xf]
    %v1600 = vld [vmem:[%s1585 + $0x38] sm:$0xf]
    %v1601 = vld [vmem:[%s1585 + $0x3c] sm:$0xf]
    %s1602 = scalar_lea.vmem %s12, 1
    %v1603 = vld [vmem:[%s1602] sm:$0x1]
    %v1604 = vpack.c.bf16 %v1603, %v1603
    %v1621 = vunpack.c.l.b16 %v1586
    %v1622 = vunpack.c.l.b16 %v1587
    %v1623 = vunpack.c.l.b16 %v1588
    %v1624 = vunpack.c.l.b16 %v1589
    %v1625 = vunpack.c.l.b16 %v1590
    %v1626 = vunpack.c.l.b16 %v1591
    %v1627 = vunpack.c.l.b16 %v1592
    %v1628 = vunpack.c.l.b16 %v1593
    %v1629 = vunpack.c.l.b16 %v1594
    %v1630 = vunpack.c.l.b16 %v1595
    %v1631 = vunpack.c.l.b16 %v1596
    %v1632 = vunpack.c.l.b16 %v1597
    %v1633 = vunpack.c.l.b16 %v1598
    %v1634 = vunpack.c.l.b16 %v1599
    %v1635 = vunpack.c.l.b16 %v1600
    %v1636 = vunpack.c.l.b16 %v1601
    %v1637 = vpack.c.b16 %v1622, %v1621
    %v1638 = vpack.c.b16 %v1624, %v1623
    %v1639 = vpack.c.b16 %v1626, %v1625
    %v1640 = vpack.c.b16 %v1628, %v1627
    %v1641 = vpack.c.b16 %v1630, %v1629
    %v1642 = vpack.c.b16 %v1632, %v1631
    %v1643 = vpack.c.b16 %v1634, %v1633
    %v1644 = vpack.c.b16 %v1636, %v1635
    %1653 = vmatprep.subr.bf16.mxu0 0
    %1654 = vmatpush1.bf16.msra.mxu0 %v1637
    %1655 = vmatprep.subr.bf16.mxu0 0
    %1656 = vmatpush1.bf16.msra.mxu0 %v1638
    %1657 = vmatprep.subr.bf16.mxu0 0
    %1658 = vmatpush1.bf16.msra.mxu0 %v1639
    %1659 = vmatprep.subr.bf16.mxu0 0
    %1660 = vmatpush1.bf16.msra.mxu0 %v1640
    %1661 = vmatprep.subr.bf16.mxu0 0
    %1662 = vmatpush1.bf16.msra.mxu0 %v1641
    %1663 = vmatprep.subr.bf16.mxu0 0
    %1664 = vmatpush1.bf16.msra.mxu0 %v1642
    %1665 = vmatprep.subr.bf16.mxu0 0
    %1666 = vmatpush1.bf16.msra.mxu0 %v1643
    %1667 = vmatprep.subr.bf16.mxu0 0
    %1668 = vmatpush1.bf16.msra.mxu0 %v1644
    %1669 = vmatprep.subr.bf16.mxu0 0
    %1670 = vmatpush1.bf16.msra.mxu0 0
    %1671 = vmatprep.subr.bf16.mxu0 0
    %1672 = vmatpush1.bf16.msra.mxu0 0
    %1673 = vmatprep.subr.bf16.mxu0 0
    %1674 = vmatpush1.bf16.msra.mxu0 0
    %1675 = vmatprep.subr.bf16.mxu0 0
    %1676 = vmatpush1.bf16.msra.mxu0 0
    %1677 = vmatprep.subr.bf16.mxu0 0
    %1678 = vmatpush1.bf16.msra.mxu0 0
    %1679 = vmatprep.subr.bf16.mxu0 0
    %1680 = vmatpush1.bf16.msra.mxu0 0
    %1681 = vmatprep.subr.bf16.mxu0 0
    %1682 = vmatpush1.bf16.msra.mxu0 0
    %1683 = vmatprep.subr.bf16.mxu0 0
    %1684 = vmatpush1.bf16.msra.mxu0 0
    %1685 = vmatprep.mubr.bf16.mxu0 0
    %1686 = vmatmul.mubr.bf16.gmra.mrb[0].mxu0 %v1577
    %v1687 = vpop.f32.mrb[0].mxu0
    %v1688 = vadd.f32 0.0, %v1687
    %v1689 = vpop.f32.mrb[0].mxu0
    %v1690 = vpop.f32.mrb[0].mxu0
    %v1691 = vadd.f32 0.0, %v1690
    %v1692 = vpop.f32.mrb[0].mxu0
    %1693 = vmatprep.mubr.bf16.mxu0 0
    %1694 = vmatmul.mubr.bf16.gmra.mrb[0].mxu0 %v1578
    %v1695 = vpop.f32.mrb[0].mxu0
    %v1696 = vadd.f32 0.0, %v1695
    %v1697 = vpop.f32.mrb[0].mxu0
    %v1698 = vpop.f32.mrb[0].mxu0
    %v1699 = vadd.f32 0.0, %v1698
    %v1700 = vpop.f32.mrb[0].mxu0
    %1701 = vmatprep.mubr.bf16.mxu0 0
    %1702 = vmatmul.mubr.bf16.gmra.mrb[0].mxu0 %v1579
    %v1703 = vpop.f32.mrb[0].mxu0
    %v1704 = vadd.f32 0.0, %v1703
    %v1705 = vpop.f32.mrb[0].mxu0
    %v1706 = vpop.f32.mrb[0].mxu0
    %v1707 = vadd.f32 0.0, %v1706
    %v1708 = vpop.f32.mrb[0].mxu0
    %1709 = vmatprep.mubr.bf16.mxu0 0
    %1710 = vmatmul.mubr.bf16.gmra.mrb[0].mxu0 %v1580
    %v1711 = vpop.f32.mrb[0].mxu0
    %v1712 = vadd.f32 0.0, %v1711
    %v1713 = vpop.f32.mrb[0].mxu0
    %v1714 = vpop.f32.mrb[0].mxu0
    %v1715 = vadd.f32 0.0, %v1714
    %v1716 = vpop.f32.mrb[0].mxu0
    %1717 = vmatprep.mubr.bf16.mxu0 0
    %1718 = vmatmul.mubr.bf16.gmra.mrb[0].mxu0 %v1581
    %v1719 = vpop.f32.mrb[0].mxu0
    %v1720 = vadd.f32 0.0, %v1719
    %v1721 = vpop.f32.mrb[0].mxu0
    %v1722 = vpop.f32.mrb[0].mxu0
    %v1723 = vadd.f32 0.0, %v1722
    %v1724 = vpop.f32.mrb[0].mxu0
    %1725 = vmatprep.mubr.bf16.mxu0 0
    %1726 = vmatmul.mubr.bf16.gmra.mrb[0].mxu0 %v1582
    %v1727 = vpop.f32.mrb[0].mxu0
    %v1728 = vadd.f32 0.0, %v1727
    %v1729 = vpop.f32.mrb[0].mxu0
    %v1730 = vpop.f32.mrb[0].mxu0
    %v1731 = vadd.f32 0.0, %v1730
    %v1732 = vpop.f32.mrb[0].mxu0
    %1733 = vmatprep.mubr.bf16.mxu0 0
    %1734 = vmatmul.mubr.bf16.gmra.mrb[0].mxu0 %v1583
    %v1735 = vpop.f32.mrb[0].mxu0
    %v1736 = vadd.f32 0.0, %v1735
    %v1737 = vpop.f32.mrb[0].mxu0
    %v1738 = vpop.f32.mrb[0].mxu0
    %v1739 = vadd.f32 0.0, %v1738
    %v1740 = vpop.f32.mrb[0].mxu0
    %1741 = vmatprep.mubr.bf16.mxu0 0
    %1742 = vmatmul.mubr.bf16.gmra.mrb[0].mxu0 %v1584
    %v1743 = vpop.f32.mrb[0].mxu0
    %v1744 = vadd.f32 0.0, %v1743
    %v1745 = vpop.f32.mrb[0].mxu0
    %v1746 = vpop.f32.mrb[0].mxu0
    %v1747 = vadd.f32 0.0, %v1746
    %v1748 = vpop.f32.mrb[0].mxu0
    %1749 = vdwg.mxu0
    %v1750 = vpack.c.bf16 %v1691, %v1688
    %v1751 = vpack.c.bf16 %v1699, %v1696
    %v1752 = vpack.c.bf16 %v1707, %v1704
    %v1753 = vpack.c.bf16 %v1715, %v1712
    %v1754 = vpack.c.bf16 %v1723, %v1720
    %v1755 = vpack.c.bf16 %v1731, %v1728
    %v1756 = vpack.c.bf16 %v1739, %v1736
    %v1757 = vpack.c.bf16 %v1747, %v1744
    %v1759 = vpack.i.b16 %v1604, %v1604
    %v1761 = vlaneseq
    %v1762 = vshrl.u32 %v1761, 7
    %v1763 = vsub.s32 0, %v1762
    %v1764 = vrot.slane %v1759, %v1763
    %v1765 = vadd.bf16 %v1750, %v1764
    %v1766 = vadd.bf16 %v1751, %v1764
    %v1767 = vadd.bf16 %v1752, %v1764
    %v1768 = vadd.bf16 %v1753, %v1764
    %v1769 = vadd.bf16 %v1754, %v1764
    %v1770 = vadd.bf16 %v1755, %v1764
    %v1771 = vadd.bf16 %v1756, %v1764
    %v1772 = vadd.bf16 %v1757, %v1764
    %v1773 = vmax.bf16 %v1765, 0
    %v1774 = vmax.bf16 %v1766, 0
    %v1775 = vmax.bf16 %v1767, 0
    %v1776 = vmax.bf16 %v1768, 0
    %v1777 = vmax.bf16 %v1769, 0
    %v1778 = vmax.bf16 %v1770, 0
    %v1779 = vmax.bf16 %v1771, 0
    %v1780 = vmax.bf16 %v1772, 0
    %v1781 = vld [vmem:[#allocation14] sm:$0xf]
    %v1782 = vld [vmem:[#allocation14 + $0x4] sm:$0xf]
    %v1783 = vld [vmem:[#allocation14 + $0x8] sm:$0xf]
    %v1784 = vld [vmem:[#allocation14 + $0xc] sm:$0xf]
    %v1785 = vld [vmem:[#allocation14 + $0x10] sm:$0xf]
    %v1786 = vld [vmem:[#allocation14 + $0x14] sm:$0xf]
    %v1787 = vld [vmem:[#allocation14 + $0x18] sm:$0xf]
    %v1788 = vld [vmem:[#allocation14 + $0x1c] sm:$0xf]
    %v1789 = vld [vmem:[#allocation14 + $0x20] sm:$0xf]
    %v1790 = vld [vmem:[#allocation14 + $0x24] sm:$0xf]
    %v1791 = vld [vmem:[#allocation14 + $0x28] sm:$0xf]
    %v1792 = vld [vmem:[#allocation14 + $0x2c] sm:$0xf]
    %v1793 = vld [vmem:[#allocation14 + $0x30] sm:$0xf]
    %v1794 = vld [vmem:[#allocation14 + $0x34] sm:$0xf]
    %v1795 = vld [vmem:[#allocation14 + $0x38] sm:$0xf]
    %v1796 = vld [vmem:[#allocation14 + $0x3c] sm:$0xf]
    %v1797 = vld [vmem:[%s14] sm:$0x1]
    %v1799 = vlaneseq
    %v1800 = vshrl.u32 %v1799, 7
    %v1801 = vsub.s32 0, %v1800
    %v1802 = vrot.slane %v1797, %v1801
    %v1820 = vunpack.c.l.b16 %v1781
    %v1821 = vunpack.c.l.b16 %v1782
    %v1822 = vunpack.c.l.b16 %v1783
    %v1823 = vunpack.c.l.b16 %v1784
    %v1824 = vunpack.c.l.b16 %v1785
    %v1825 = vunpack.c.l.b16 %v1786
    %v1826 = vunpack.c.l.b16 %v1787
    %v1827 = vunpack.c.l.b16 %v1788
    %v1828 = vunpack.c.l.b16 %v1789
    %v1829 = vunpack.c.l.b16 %v1790
    %v1830 = vunpack.c.l.b16 %v1791
    %v1831 = vunpack.c.l.b16 %v1792
    %v1832 = vunpack.c.l.b16 %v1793
    %v1833 = vunpack.c.l.b16 %v1794
    %v1834 = vunpack.c.l.b16 %v1795
    %v1835 = vunpack.c.l.b16 %v1796
    %v1836 = vpack.c.b16 %v1821, %v1820
    %v1837 = vpack.c.b16 %v1823, %v1822
    %v1838 = vpack.c.b16 %v1825, %v1824
    %v1839 = vpack.c.b16 %v1827, %v1826
    %v1840 = vpack.c.b16 %v1829, %v1828
    %v1841 = vpack.c.b16 %v1831, %v1830
    %v1842 = vpack.c.b16 %v1833, %v1832
    %v1843 = vpack.c.b16 %v1835, %v1834
    %1852 = vmatprep.subr.bf16.mxu0 0
    %1853 = vmatpush1.bf16.msra.mxu0 %v1836
    %1854 = vmatprep.subr.bf16.mxu0 0
    %1855 = vmatpush1.bf16.msra.mxu0 %v1837
    %1856 = vmatprep.subr.bf16.mxu0 0
    %1857 = vmatpush1.bf16.msra.mxu0 %v1838
    %1858 = vmatprep.subr.bf16.mxu0 0
    %1859 = vmatpush1.bf16.msra.mxu0 %v1839
    %1860 = vmatprep.subr.bf16.mxu0 0
    %1861 = vmatpush1.bf16.msra.mxu0 %v1840
    %1862 = vmatprep.subr.bf16.mxu0 0
    %1863 = vmatpush1.bf16.msra.mxu0 %v1841
    %1864 = vmatprep.subr.bf16.mxu0 0
    %1865 = vmatpush1.bf16.msra.mxu0 %v1842
    %1866 = vmatprep.subr.bf16.mxu0 0
    %1867 = vmatpush1.bf16.msra.mxu0 %v1843
    %1868 = vmatprep.subr.bf16.mxu0 0
    %1869 = vmatpush1.bf16.msra.mxu0 0
    %1870 = vmatprep.subr.bf16.mxu0 0
    %1871 = vmatpush1.bf16.msra.mxu0 0
    %1872 = vmatprep.subr.bf16.mxu0 0
    %1873 = vmatpush1.bf16.msra.mxu0 0
    %1874 = vmatprep.subr.bf16.mxu0 0
    %1875 = vmatpush1.bf16.msra.mxu0 0
    %1876 = vmatprep.subr.bf16.mxu0 0
    %1877 = vmatpush1.bf16.msra.mxu0 0
    %1878 = vmatprep.subr.bf16.mxu0 0
    %1879 = vmatpush1.bf16.msra.mxu0 0
    %1880 = vmatprep.subr.bf16.mxu0 0
    %1881 = vmatpush1.bf16.msra.mxu0 0
    %1882 = vmatprep.subr.bf16.mxu0 0
    %1883 = vmatpush1.bf16.msra.mxu0 0
    %1884 = vmatprep.mubr.bf16.mxu0 0
    %1885 = vmatmul.mubr.bf16.gmra.mrb[0].mxu0 %v1773
    %v1886 = vpop.f32.mrb[0].mxu0
    %v1887 = vadd.f32 %v1802, %v1886
    %v1888 = vpop.f32.mrb[0].mxu0
    %v1889 = vpop.f32.mrb[0].mxu0
    %v1890 = vadd.f32 %v1802, %v1889
    %v1891 = vpop.f32.mrb[0].mxu0
    %1892 = vmatprep.mubr.bf16.mxu0 0
    %1893 = vmatmul.mubr.bf16.gmra.mrb[0].mxu0 %v1774
    %v1894 = vpop.f32.mrb[0].mxu0
    %v1895 = vadd.f32 %v1802, %v1894
    %v1896 = vpop.f32.mrb[0].mxu0
    %v1897 = vpop.f32.mrb[0].mxu0
    %v1898 = vadd.f32 %v1802, %v1897
    %v1899 = vpop.f32.mrb[0].mxu0
    %1900 = vmatprep.mubr.bf16.mxu0 0
    %1901 = vmatmul.mubr.bf16.gmra.mrb[0].mxu0 %v1775
    %v1902 = vpop.f32.mrb[0].mxu0
    %v1903 = vadd.f32 %v1802, %v1902
    %v1904 = vpop.f32.mrb[0].mxu0
    %v1905 = vpop.f32.mrb[0].mxu0
    %v1906 = vadd.f32 %v1802, %v1905
    %v1907 = vpop.f32.mrb[0].mxu0
    %1908 = vmatprep.mubr.bf16.mxu0 0
    %1909 = vmatmul.mubr.bf16.gmra.mrb[0].mxu0 %v1776
    %v1910 = vpop.f32.mrb[0].mxu0
    %v1911 = vadd.f32 %v1802, %v1910
    %v1912 = vpop.f32.mrb[0].mxu0
    %v1913 = vpop.f32.mrb[0].mxu0
    %v1914 = vadd.f32 %v1802, %v1913
    %v1915 = vpop.f32.mrb[0].mxu0
    %1916 = vmatprep.mubr.bf16.mxu0 0
    %1917 = vmatmul.mubr.bf16.gmra.mrb[0].mxu0 %v1777
    %v1918 = vpop.f32.mrb[0].mxu0
    %v1919 = vadd.f32 %v1802, %v1918
    %v1920 = vpop.f32.mrb[0].mxu0
    %v1921 = vpop.f32.mrb[0].mxu0
    %v1922 = vadd.f32 %v1802, %v1921
    %v1923 = vpop.f32.mrb[0].mxu0
    %1924 = vmatprep.mubr.bf16.mxu0 0
    %1925 = vmatmul.mubr.bf16.gmra.mrb[0].mxu0 %v1778
    %v1926 = vpop.f32.mrb[0].mxu0
    %v1927 = vadd.f32 %v1802, %v1926
    %v1928 = vpop.f32.mrb[0].mxu0
    %v1929 = vpop.f32.mrb[0].mxu0
    %v1930 = vadd.f32 %v1802, %v1929
    %v1931 = vpop.f32.mrb[0].mxu0
    %1932 = vmatprep.mubr.bf16.mxu0 0
    %1933 = vmatmul.mubr.bf16.gmra.mrb[0].mxu0 %v1779
    %v1934 = vpop.f32.mrb[0].mxu0
    %v1935 = vadd.f32 %v1802, %v1934
    %v1936 = vpop.f32.mrb[0].mxu0
    %v1937 = vpop.f32.mrb[0].mxu0
    %v1938 = vadd.f32 %v1802, %v1937
    %v1939 = vpop.f32.mrb[0].mxu0
    %1940 = vmatprep.mubr.bf16.mxu0 0
    %1941 = vmatmul.mubr.bf16.gmra.mrb[0].mxu0 %v1780
    %v1942 = vpop.f32.mrb[0].mxu0
    %v1943 = vadd.f32 %v1802, %v1942
    %v1944 = vpop.f32.mrb[0].mxu0
    %v1945 = vpop.f32.mrb[0].mxu0
    %v1946 = vadd.f32 %v1802, %v1945
    %v1947 = vpop.f32.mrb[0].mxu0
    %1948 = vdwg.mxu0
    %v1949 = vpack.c.bf16 %v1890, %v1887
    %v1950 = vpack.c.bf16 %v1898, %v1895
    %v1951 = vpack.c.bf16 %v1906, %v1903
    %v1952 = vpack.c.bf16 %v1914, %v1911
    %v1953 = vpack.c.bf16 %v1922, %v1919
    %v1954 = vpack.c.bf16 %v1930, %v1927
    %v1955 = vpack.c.bf16 %v1938, %v1935
    %v1956 = vpack.c.bf16 %v1946, %v1943
    %v1965 = vunpack.c.l.b16 %v1949
    %v1966 = vunpack.c.h.b16 %v1949
    %v1967 = vunpack.c.l.b16 %v1950
    %v1968 = vunpack.c.h.b16 %v1950
    %v1969 = vunpack.c.l.b16 %v1951
    %v1970 = vunpack.c.h.b16 %v1951
    %v1971 = vunpack.c.l.b16 %v1952
    %v1972 = vunpack.c.h.b16 %v1952
    %v1973 = vunpack.c.l.b16 %v1953
    %v1974 = vunpack.c.h.b16 %v1953
    %v1975 = vunpack.c.l.b16 %v1954
    %v1976 = vunpack.c.h.b16 %v1954
    %v1977 = vunpack.c.l.b16 %v1955
    %v1978 = vunpack.c.h.b16 %v1955
    %v1979 = vunpack.c.l.b16 %v1956
    %v1980 = vunpack.c.h.b16 %v1956
    %v1981 = vpack.c.b16 %v1965, %v1965
    %v1982 = vpack.c.b16 %v1966, %v1966
    %v1983 = vpack.c.b16 %v1967, %v1967
    %v1984 = vpack.c.b16 %v1968, %v1968
    %v1985 = vpack.c.b16 %v1969, %v1969
    %v1986 = vpack.c.b16 %v1970, %v1970
    %v1987 = vpack.c.b16 %v1971, %v1971
    %v1988 = vpack.c.b16 %v1972, %v1972
    %v1989 = vpack.c.b16 %v1973, %v1973
    %v1990 = vpack.c.b16 %v1974, %v1974
    %v1991 = vpack.c.b16 %v1975, %v1975
    %v1992 = vpack.c.b16 %v1976, %v1976
    %v1993 = vpack.c.b16 %v1977, %v1977
    %v1994 = vpack.c.b16 %v1978, %v1978
    %v1995 = vpack.c.b16 %v1979, %v1979
    %v1996 = vpack.c.b16 %v1980, %v1980
    %2013 = vst [vmem:[#allocation16] sm:$0xf] %v1981
    %2014 = vst [vmem:[#allocation16 + $0x4] sm:$0xf] %v1982
    %2015 = vst [vmem:[#allocation16 + $0x8] sm:$0xf] %v1983
    %2016 = vst [vmem:[#allocation16 + $0xc] sm:$0xf] %v1984
    %2017 = vst [vmem:[#allocation16 + $0x10] sm:$0xf] %v1985
    %2018 = vst [vmem:[#allocation16 + $0x14] sm:$0xf] %v1986
    %2019 = vst [vmem:[#allocation16 + $0x18] sm:$0xf] %v1987
    %2020 = vst [vmem:[#allocation16 + $0x1c] sm:$0xf] %v1988
    %2021 = vst [vmem:[#allocation16 + $0x20] sm:$0xf] %v1989
    %2022 = vst [vmem:[#allocation16 + $0x24] sm:$0xf] %v1990
    %2023 = vst [vmem:[#allocation16 + $0x28] sm:$0xf] %v1991
    %2024 = vst [vmem:[#allocation16 + $0x2c] sm:$0xf] %v1992
    %2025 = vst [vmem:[#allocation16 + $0x30] sm:$0xf] %v1993
    %2026 = vst [vmem:[#allocation16 + $0x34] sm:$0xf] %v1994
    %2027 = vst [vmem:[#allocation16 + $0x38] sm:$0xf] %v1995
    %2028 = vst [vmem:[#allocation16 + $0x3c] sm:$0xf] %v1996
    // Predicated region
    $region94: #{tpu_custom_call.1} parent=1 // pred_check
      _
    $region95: #{tpu_custom_call.1} parent=1 // pred_check_branch
      %2030 = sbr.rel (0) target = $region97
    $region96: #{tpu_custom_call.1} parent=1 // pred_region
      %s2032 = ssub.s32 1024, 1024
      %2033 = vsyncadd [#allocation4], %s2032
      %s2034 = sshll.u32 [#allocation16], 4
      %s2035 = int_to_ptr.vmem [resolvable:$true] %s2034
      %2040 = dma.vmem_to_hbm [thread:$0]  %s2035, 1024, %s15, [#allocation4], 64, 64, 4
    $region97: #{tpu_custom_call.1} parent=1 // pred_fallthru
      _
    // Predicated region
    $region98: #{tpu_custom_call.1} parent=1 // pred_check
      _
    $region99: #{tpu_custom_call.1} parent=1 // pred_check_branch
      %2042 = sbr.rel (0) target = $region101
    $region100: #{tpu_custom_call.1} parent=1 // pred_region
      %2043 = dma.done [#allocation4], 1024
    $region101: #{tpu_custom_call.1} parent=1 // pred_fallthru
      _
    %2044 = vsyncpa [#allocation3], 1
    %2045 = vsyncpa [#allocation6], 1
    %2046 = vsyncpa [#allocation9], 1
    %2047 = vsyncpa [#allocation12], 1
    %2048 = vsyncpa [#allocation15], 1
    %2049 = vsyncpa [#allocation4], 1

</llo_original>
